<compile_context>
chip_gen: v5e
topology: v5e:2x2
jax: 0.10.0
libtpu: 0.0.40
codegen_flags: <defaults>
</compile_context>

<pallas_src>
import functools

import jax
import jax.numpy as jnp
from jax.experimental import pallas as pl
from jax.experimental.pallas import tpu as pltpu

BN_EPS = 1e-3           # EfficientNet default batch_norm_epsilon
STEM_OUT = 32
HEAD_OUT = 64
NUM_CLASSES = 10
# Small synthetic EfficientNet block config (MBConv blocks).
BLOCKS = [
    dict(in_ch=32, out_ch=16, expand=1, k=3, stride=1, se_ratio=0.25, id_skip=True),
    dict(in_ch=16, out_ch=16, expand=4, k=3, stride=1, se_ratio=0.25, id_skip=True),
]

LANES = 128


def _ru(x, m):
    return ((x + m - 1) // m) * m


def _cp(c):
    """Channel count padded to the 128-lane width."""
    return _ru(c, LANES)


def _row_tile(h, cap=32):
    """Row tile for the depthwise grid: divisor of h, multiple of 8 (or h)."""
    for t in range(min(cap, h), 0, -1):
        if h % t == 0 and (t % 8 == 0 or t == h):
            return t
    return h


def _vmem_limit_bytes():
    """Generation-aware VMEM budget: ~100 MiB on v5e/v6e, ~48 MiB on v7x."""
    cap = 64 * 1024 * 1024
    try:
        info = pltpu.get_tpu_info()
        cap = int(getattr(info, "vmem_capacity_bytes", cap))
    except Exception:
        pass
    return max(32 * 1024 * 1024, min(cap - 16 * 1024 * 1024, 100 * 1024 * 1024))


VMEM_LIMIT = _vmem_limit_bytes()


# --------------------------------------------------------------------------
# Fused matmul kernel: y = act((x @ w) * scale + shift).   Used by the stem.
# No K tiling (all layers here have K <= 512), weights resident across M.
# --------------------------------------------------------------------------
def _mm_fused_kernel(x_ref, w_ref, s_ref, b_ref, o_ref, *, act):
    y = jnp.dot(x_ref[...], w_ref[...], preferred_element_type=jnp.float32)
    y = y * s_ref[...] + b_ref[...]
    if act == "swish":
        y = y * jax.nn.sigmoid(y)
    elif act == "sigmoid":
        y = jax.nn.sigmoid(y)
    o_ref[...] = y.astype(o_ref.dtype)


def matmul_fused(x, w, scale, shift, act="none", out_dtype=jnp.bfloat16):
    """x: (M, K) bf16, w: (K, Np) bf16 (pre-padded), scale/shift: (1, Np) f32."""
    M, K = x.shape
    Kw, Np = w.shape
    assert K == Kw, (K, Kw)
    # TODO(synk): add a K-tiled accumulation path for layers with K > ~2048.
    tn = Np if Np <= 512 else 512          # Np is a multiple of 128
    tm = min(_ru(M, 16), 256)              # bf16 sublane packing => multiple of 16
    grid = (pl.cdiv(Np, tn), pl.cdiv(M, tm))   # j (N) outer: weight strip resident over M
    return pl.pallas_call(
        functools.partial(_mm_fused_kernel, act=act),
        out_shape=jax.ShapeDtypeStruct((M, Np), out_dtype),
        grid_spec=pltpu.PrefetchScalarGridSpec(
            num_scalar_prefetch=0,
            grid=grid,
            in_specs=[pl.BlockSpec((tm, K), lambda j, i: (i, 0)),
                      pl.BlockSpec((K, tn), lambda j, i: (0, j)),
                      pl.BlockSpec((1, tn), lambda j, i: (0, j)),
                      pl.BlockSpec((1, tn), lambda j, i: (0, j))],
            out_specs=pl.BlockSpec((tm, tn), lambda j, i: (i, j))),
        compiler_params=pltpu.CompilerParams(
            dimension_semantics=("parallel", "parallel"),
            vmem_limit_bytes=VMEM_LIMIT),
    )(x, w, scale, shift)


# --------------------------------------------------------------------------
# Fused expand (1x1 conv + BN + swish) -> depthwise kxk conv + BN + swish,
# with the SE global-average-pool produced as a second resident output.
# The expanded, SAME-zero-padded feature map only ever lives in VMEM scratch.
# --------------------------------------------------------------------------
def _dw_kernel(*refs, k, th, h, w, wo, pad, inv_hw, has_expand):
    if has_expand:
        (x_ref, we_ref, s0_ref, b0_ref, wdw_ref, s1_ref, b1_ref,
         o_ref, gap_ref, xe_ref) = refs
    else:
        (x_ref, wdw_ref, s1_ref, b1_ref, o_ref, gap_ref, xe_ref) = refs
    rt = pl.program_id(1)

    @pl.when(rt == 0)
    def _():
        # Expand the whole (un-padded) image once per batch element into the
        # zero-padded VMEM scratch; all row tiles reuse it.
        xe_ref[...] = jnp.zeros_like(xe_ref)
        xin = x_ref[0].reshape(h * w, x_ref.shape[-1])
        if has_expand:
            xe = jnp.dot(xin, we_ref[...], preferred_element_type=jnp.float32)
            xe = xe * s0_ref[...] + b0_ref[...]
            xe = xe * jax.nn.sigmoid(xe)          # swish
        else:
            xe = xin.astype(jnp.float32)
        xe_ref[pl.ds(pad, h), pl.ds(pad, w), :] = xe.reshape(h, w, xe_ref.shape[-1])
        gap_ref[...] = jnp.zeros_like(gap_ref)

    c = xe_ref.shape[-1]
    row0 = pl.multiple_of(rt * th, th)
    acc = jnp.zeros((th, wo, c), jnp.float32)
    # One aligned row-slab load per kh; kw shifts taken as in-register slices.
    for kh in range(k):
        slab = xe_ref[pl.ds(row0 + kh, th), :, :]          # (th, Wp, C)
        for kw in range(k):
            acc = acc + slab[:, kw:kw + wo, :] * wdw_ref[kh * k + kw]
    y = acc * s1_ref[...] + b1_ref[...]
    y = y * jax.nn.sigmoid(y)                              # swish
    o_ref[0] = y.astype(o_ref.dtype)

    # Fused AdaptiveAvgPool2d(1) accumulator (resident across the row-tile axis).
    gap_ref[...] += (jnp.sum(y, axis=(0, 1)) * inv_hw)[None, None]


def expand_dw_gap(x, blk, k, stride):
    """Returns (depthwise activation map bf16, per-image channel means f32)."""
    # TODO(synk): stride-2 depthwise convs are not used by this block config.
    assert stride == 1
    N, H, W, Cin_p = x.shape
    has_expand = "expand_w" in blk
    Cexp_p = blk["dw_w"].shape[1]
    Ho, Wo = H, W
    pad = (k - 1) // 2
    Hp, Wp = H + k - 1, W + k - 1
    th = _row_tile(Ho)

    # TODO(synk): at realistic image sizes the resident image / expanded scratch
    # should be halo-tiled along H to respect v7x's 64 MiB VMEM.
    in_specs = [pl.BlockSpec((1, H, W, Cin_p), lambda n, rt: (n, 0, 0, 0))]
    args = [x]
    if has_expand:
        in_specs += [pl.BlockSpec(blk["expand_w"].shape, lambda n, rt: (0, 0)),
                     pl.BlockSpec((1, Cexp_p), lambda n, rt: (0, 0)),
                     pl.BlockSpec((1, Cexp_p), lambda n, rt: (0, 0))]
        args += [blk["expand_w"], blk["bn0"][0], blk["bn0"][1]]
    in_specs += [pl.BlockSpec((k * k, Cexp_p), lambda n, rt: (0, 0)),
                 pl.BlockSpec((1, Cexp_p), lambda n, rt: (0, 0)),
                 pl.BlockSpec((1, Cexp_p), lambda n, rt: (0, 0))]
    args += [blk["dw_w"], blk["bn1"][0], blk["bn1"][1]]

    y, gap = pl.pallas_call(
        functools.partial(_dw_kernel, k=k, th=th, h=H, w=W, wo=Wo, pad=pad,
                          inv_hw=1.0 / (Ho * Wo), has_expand=has_expand),
        out_shape=(jax.ShapeDtypeStruct((N, Ho, Wo, Cexp_p), jnp.bfloat16),
                   jax.ShapeDtypeStruct((N, 1, Cexp_p), jnp.float32)),
        grid_spec=pltpu.PrefetchScalarGridSpec(
            num_scalar_prefetch=0,
            grid=(N, Ho // th),
            in_specs=in_specs,
            out_specs=[pl.BlockSpec((1, th, Wo, Cexp_p), lambda n, rt: (n, rt, 0, 0)),
                       pl.BlockSpec((1, 1, Cexp_p), lambda n, rt: (n, 0, 0))],
            scratch_shapes=[pltpu.VMEM((Hp, Wp, Cexp_p), jnp.float32)]),
        compiler_params=pltpu.CompilerParams(
            dimension_semantics=("parallel", "arbitrary"),
            vmem_limit_bytes=VMEM_LIMIT),
    )(*args)
    return y, gap


# --------------------------------------------------------------------------
# Fused SE gate + projection 1x1 conv + folded BN + (optional) residual.
# The gate (both tiny FCs) is computed once per image into VMEM scratch.
# --------------------------------------------------------------------------
def _proj_kernel(*refs, has_res):
    if has_res:
        (x_ref, gap_ref, w1_ref, b1_ref, w2_ref, b2_ref,
         wp_ref, s_ref, b_ref, r_ref, o_ref, gate_ref) = refs
    else:
        (x_ref, gap_ref, w1_ref, b1_ref, w2_ref, b2_ref,
         wp_ref, s_ref, b_ref, o_ref, gate_ref) = refs
    m = pl.program_id(1)

    @pl.when(m == 0)
    def _():
        g = gap_ref[0]                                           # (1, Cexp_p) f32
        hidden = jnp.dot(g.astype(jnp.bfloat16), w1_ref[...],
                         preferred_element_type=jnp.float32) + b1_ref[...]
        hidden = hidden * jax.nn.sigmoid(hidden)                 # swish
        z = jnp.dot(hidden.astype(jnp.bfloat16), w2_ref[...],
                    preferred_element_type=jnp.float32) + b2_ref[...]
        gate_ref[...] = jax.nn.sigmoid(z)

    xg = x_ref[0].astype(jnp.float32) * gate_ref[...]            # SE gate in-VMEM
    y = jnp.dot(xg.astype(jnp.bfloat16), wp_ref[...],
                preferred_element_type=jnp.float32)
    y = y * s_ref[...] + b_ref[...]
    if has_res:
        y = y + r_ref[0].astype(jnp.float32)                     # fused id-skip residual
    o_ref[0] = y.astype(o_ref.dtype)


def se_proj(x, gap, blk, residual=None):
    N, H, W, Cexp_p = x.shape
    HW = H * W
    Cout_p = blk["proj_w"].shape[1]
    tm = min(_ru(HW, 16), 256)
    xr = x.reshape(N, HW, Cexp_p)
    has_res = residual is not None

    in_specs = [pl.BlockSpec((1, tm, Cexp_p), lambda n, m: (n, m, 0)),
                pl.BlockSpec((1, 1, Cexp_p), lambda n, m: (n, 0, 0)),
                pl.BlockSpec(blk["se_r_w"].shape, lambda n, m: (0, 0)),
                pl.BlockSpec(blk["se_r_b"].shape, lambda n, m: (0, 0)),
                pl.BlockSpec(blk["se_e_w"].shape, lambda n, m: (0, 0)),
                pl.BlockSpec(blk["se_e_b"].shape, lambda n, m: (0, 0)),
                pl.BlockSpec(blk["proj_w"].shape, lambda n, m: (0, 0)),
                pl.BlockSpec((1, Cout_p), lambda n, m: (0, 0)),
                pl.BlockSpec((1, Cout_p), lambda n, m: (0, 0))]
    args = [xr, gap, blk["se_r_w"], blk["se_r_b"], blk["se_e_w"], blk["se_e_b"],
            blk["proj_w"], blk["bn2"][0], blk["bn2"][1]]
    if has_res:
        in_specs.append(pl.BlockSpec((1, tm, Cout_p), lambda n, m: (n, m, 0)))
        args.append(residual.reshape(N, HW, Cout_p))

    out = pl.pallas_call(
        functools.partial(_proj_kernel, has_res=has_res),
        out_shape=jax.ShapeDtypeStruct((N, HW, Cout_p), jnp.bfloat16),
        grid_spec=pltpu.PrefetchScalarGridSpec(
            num_scalar_prefetch=0,
            grid=(N, pl.cdiv(HW, tm)),
            in_specs=in_specs,
            out_specs=pl.BlockSpec((1, tm, Cout_p), lambda n, m: (n, m, 0)),
            scratch_shapes=[pltpu.VMEM((1, Cexp_p), jnp.float32)]),
        compiler_params=pltpu.CompilerParams(
            dimension_semantics=("parallel", "arbitrary"),
            vmem_limit_bytes=VMEM_LIMIT),
    )(*args)
    return out.reshape(N, H, W, Cout_p)


# --------------------------------------------------------------------------
# Head 1x1 conv + BN + swish + AdaptiveAvgPool2d(1) + flatten + Linear fused.
# --------------------------------------------------------------------------
def _head_kernel(x_ref, wh_ref, s_ref, b_ref, wfc_ref, bfc_ref, o_ref, *, inv_hw):
    h = jnp.dot(x_ref[0], wh_ref[...], preferred_element_type=jnp.float32)
    h = h * s_ref[...] + b_ref[...]
    h = h * jax.nn.sigmoid(h)                                 # swish
    pooled = jnp.sum(h, axis=0, keepdims=True) * inv_hw       # (1, Ch_p) f32
    logits = jnp.dot(pooled.astype(jnp.bfloat16), wfc_ref[...],
                     preferred_element_type=jnp.float32) + bfc_ref[...]
    o_ref[0] = logits


def head_pool_fc(x, wh, scale, shift, wfc, bfc):
    N, H, W, Cin_p = x.shape
    HW = H * W
    Ch_p = wh.shape[1]
    Ncls_p = wfc.shape[1]
    xr = x.reshape(N, HW, Cin_p)
    out = pl.pallas_call(
        functools.partial(_head_kernel, inv_hw=1.0 / HW),
        out_shape=jax.ShapeDtypeStruct((N, 1, Ncls_p), jnp.float32),
        grid_spec=pltpu.PrefetchScalarGridSpec(
            num_scalar_prefetch=0, grid=(N,),
            in_specs=[pl.BlockSpec((1, HW, Cin_p), lambda n: (n, 0, 0)),
                      pl.BlockSpec(wh.shape, lambda n: (0, 0)),
                      pl.BlockSpec((1, Ch_p), lambda n: (0, 0)),
                      pl.BlockSpec((1, Ch_p), lambda n: (0, 0)),
                      pl.BlockSpec(wfc.shape, lambda n: (0, 0)),
                      pl.BlockSpec((1, Ncls_p), lambda n: (0, 0))],
            out_specs=pl.BlockSpec((1, 1, Ncls_p), lambda n: (n, 0, 0))),
        compiler_params=pltpu.CompilerParams(
            dimension_semantics=("parallel",),
            vmem_limit_bytes=VMEM_LIMIT),
    )(xr, wh, scale, shift, wfc, bfc)
    return out.reshape(N, Ncls_p)


# --------------------------------------------------------------------------
# Glue: SAME padding + im2col for the (stride-2, Cin=3) stem conv only.
# K stays at its true width (27) — no zero-pad to 128.
# --------------------------------------------------------------------------
def _same_pad_nhwc(x, k, stride, dilation=1):
    _, H, W, _ = x.shape
    oh, ow = -(-H // stride), -(-W // stride)
    pad_h = max((oh - 1) * stride + (k - 1) * dilation + 1 - H, 0)
    pad_w = max((ow - 1) * stride + (k - 1) * dilation + 1 - W, 0)
    return jnp.pad(x, ((0, 0),
                       (pad_h // 2, pad_h - pad_h // 2),
                       (pad_w // 2, pad_w - pad_w // 2),
                       (0, 0)))


def stem_conv(x, w_col, scale, shift, k=3, stride=2):
    N, H, W, Cin = x.shape
    Ho, Wo = -(-H // stride), -(-W // stride)
    xp = _same_pad_nhwc(x, k, stride)
    cols = [xp[:, kh:kh + stride * Ho:stride, kw:kw + stride * Wo:stride, :]
            for kh in range(k) for kw in range(k)]
    xcol = jnp.stack(cols, axis=3).reshape(N * Ho * Wo, k * k * Cin)
    y = matmul_fused(xcol.astype(jnp.bfloat16), w_col, scale, shift, "swish")
    return y.reshape(N, Ho, Wo, w_col.shape[1])


# --------------------------------------------------------------------------
# Parameters (deterministic synthetic init; BN folded to scale/shift; weights
# stored pre-padded to 128-lane channel widths and pre-cast to bf16 for the MXU)
# --------------------------------------------------------------------------
def init_params(key):
    keys = iter(jax.random.split(key, 64))

    def nrm(shape, s=0.1):
        return (s * jax.random.normal(next(keys), shape)).astype(jnp.float32)

    def pad_w(w, rows, cols, dtype=jnp.bfloat16):
        out = jnp.zeros((rows, cols), jnp.float32).at[:w.shape[0], :w.shape[1]].set(w)
        return out.astype(dtype)

    def pad_v(v, cols, fill=0.0):
        return jnp.full((1, cols), fill, jnp.float32).at[0, :v.shape[0]].set(v)

    def bn(c):
        gamma = 1.0 + nrm((c,))
        beta = nrm((c,))
        mean = nrm((c,))
        var = 1.0 + jnp.abs(nrm((c,)))
        scale = gamma / jnp.sqrt(var + BN_EPS)
        shift = beta - mean * scale
        return pad_v(scale, _cp(c)), pad_v(shift, _cp(c))

    p = {}
    # stem: 3x3 stride-2 conv, weight in im2col layout (k*k*Cin, Cout); K kept at 27.
    p["stem_w"] = pad_w(nrm((3, 3, 3, STEM_OUT)).reshape(3 * 3 * 3, STEM_OUT),
                        3 * 3 * 3, _cp(STEM_OUT))
    p["stem_bn"] = bn(STEM_OUT)

    p["blocks"] = []
    for cfg in BLOCKS:
        b = dict(cfg=cfg)
        cin, cout, e, k = cfg["in_ch"], cfg["out_ch"], cfg["expand"], cfg["k"]
        cexp = cin * e
        if e != 1:
            b["expand_w"] = pad_w(nrm((cin, cexp)), _cp(cin), _cp(cexp))
            b["bn0"] = bn(cexp)
        b["dw_w"] = jnp.zeros((k * k, _cp(cexp)), jnp.float32
                              ).at[:, :cexp].set(nrm((k * k, cexp)))
        b["bn1"] = bn(cexp)
        cse = max(1, int(cin * cfg["se_ratio"]))
        b["se_r_w"] = pad_w(nrm((cexp, cse)), _cp(cexp), _cp(cse))
        b["se_r_b"] = pad_v(nrm((cse,)), _cp(cse))
        b["se_e_w"] = pad_w(nrm((cse, cexp)), _cp(cse), _cp(cexp))
        # padded lanes get bias -30 -> gate ~ sigmoid(-30) ~ 0 (can't leak).
        b["se_e_b"] = pad_v(nrm((cexp,)), _cp(cexp), fill=-30.0)
        b["proj_w"] = pad_w(nrm((cexp, cout)), _cp(cexp), _cp(cout))
        b["bn2"] = bn(cout)
        p["blocks"].append(b)

    p["head_w"] = pad_w(nrm((BLOCKS[-1]["out_ch"], HEAD_OUT)),
                        _cp(BLOCKS[-1]["out_ch"]), _cp(HEAD_OUT))
    p["head_bn"] = bn(HEAD_OUT)
    p["fc_w"] = pad_w(nrm((HEAD_OUT, NUM_CLASSES)), _cp(HEAD_OUT), _cp(NUM_CLASSES))
    p["fc_b"] = pad_v(nrm((NUM_CLASSES,)), _cp(NUM_CLASSES))
    return p


# --------------------------------------------------------------------------
# Forward pass
# --------------------------------------------------------------------------
def mbconv_forward(x, blk):
    cfg = blk["cfg"]
    inputs = x
    y, gap = expand_dw_gap(x, blk, k=cfg["k"], stride=cfg["stride"])
    skip = (cfg["id_skip"] and cfg["stride"] == 1
            and cfg["in_ch"] == cfg["out_ch"])
    # TODO(synk): drop_connect is stochastic only in training; identity in eval.
    return se_proj(y, gap, blk, residual=inputs if skip else None)


def efficientnet_forward(x_nchw, p):
    # layout: input NCHW (PyTorch convention) -> NHWC for all kernel compute.
    x = jnp.transpose(x_nchw, (0, 2, 3, 1)).astype(jnp.float32)
    x = stem_conv(x, p["stem_w"], *p["stem_bn"])
    for blk in p["blocks"]:
        x = mbconv_forward(x, blk)
    # TODO(synk): nn.Dropout before the FC is identity in eval mode.
    logits = head_pool_fc(x, p["head_w"], *p["head_bn"], p["fc_w"], p["fc_b"])
    return logits[:, :NUM_CLASSES]


if __name__ == "__main__":
    key = jax.random.PRNGKey(0)
    kp, kx = jax.random.split(key)
    params = init_params(kp)
    x = jax.random.normal(kx, (2, 3, 16, 16), jnp.float32)   # NCHW like PyTorch
    fwd = jax.jit(lambda inp: efficientnet_forward(inp, params))
    logits = fwd(x)
    jax.block_until_ready(logits)
    assert logits.shape == (2, NUM_CLASSES)
    print("KERNEL_OK")
</pallas_src>

<mosaic_0001>
module attributes {stable_mosaic.version = 11 : i64} {
  func.func @_mm_fused_kernel(%arg0: i32, %arg1: i32, %arg2: memref<128x27xbf16, #tpu.memory_space<vmem>>, %arg3: memref<27x128xbf16, #tpu.memory_space<vmem>>, %arg4: memref<1x128xf32, #tpu.memory_space<vmem>>, %arg5: memref<1x128xf32, #tpu.memory_space<vmem>>, %arg6: memref<128x128xbf16, #tpu.memory_space<vmem>>) attributes {dimension_semantics = [#tpu.dimension_semantics<parallel>, #tpu.dimension_semantics<parallel>], iteration_bounds = array<i64: 1, 1>, scalar_prefetch = 0 : i64, scratch_operands = 0 : i64, tpu.core_type = #tpu.core_type<tc>, window_params = [{transform_indices = @transform_0, window_bounds = array<i64: 128, 27>}, {transform_indices = @transform_1, window_bounds = array<i64: 27, 128>}, {transform_indices = @transform_2, window_bounds = array<i64: 1, 128>}, {transform_indices = @transform_3, window_bounds = array<i64: 1, 128>}, {transform_indices = @transform_4, window_bounds = array<i64: 128, 128>}]} {
    %c0 = arith.constant 0 : index
    %c0_0 = arith.constant 0 : index
    %0 = vector.load %arg2[%c0, %c0_0] : memref<128x27xbf16, #tpu.memory_space<vmem>>, vector<128x27xbf16>
    %c0_1 = arith.constant 0 : index
    %c0_2 = arith.constant 0 : index
    %1 = vector.load %arg3[%c0_1, %c0_2] : memref<27x128xbf16, #tpu.memory_space<vmem>>, vector<27x128xbf16>
    %cst = arith.constant dense<0.000000e+00> : vector<128x128xf32>
    %2 = tpu.matmul %0, %1, %cst {dimension_numbers = #tpu.dot_dimension_numbers<[1], [0], [0], [1], [0, 0, 1, 1], [], []>} : vector<128x27xbf16>, vector<27x128xbf16>, vector<128x128xf32> -> vector<128x128xf32>
    %c0_3 = arith.constant 0 : index
    %c0_4 = arith.constant 0 : index
    %3 = vector.load %arg4[%c0_3, %c0_4] : memref<1x128xf32, #tpu.memory_space<vmem>>, vector<1x128xf32>
    %4 = vector.broadcast %3 : vector<1x128xf32> to vector<128x128xf32>
    %5 = arith.mulf %2, %4 : vector<128x128xf32>
    %c0_5 = arith.constant 0 : index
    %c0_6 = arith.constant 0 : index
    %6 = vector.load %arg5[%c0_5, %c0_6] : memref<1x128xf32, #tpu.memory_space<vmem>>, vector<1x128xf32>
    %7 = vector.broadcast %6 : vector<1x128xf32> to vector<128x128xf32>
    %8 = arith.addf %5, %7 : vector<128x128xf32>
    %9 = arith.negf %8 : vector<128x128xf32>
    %10 = math.exp %9 : vector<128x128xf32>
    %cst_7 = arith.constant 1.000000e+00 : f32
    %11 = vector.broadcast %cst_7 : f32 to vector<128x128xf32>
    %12 = arith.addf %11, %10 : vector<128x128xf32>
    %13 = arith.divf %11, %12 : vector<128x128xf32>
    %14 = arith.mulf %8, %13 : vector<128x128xf32>
    %15 = arith.truncf %14 : vector<128x128xf32> to vector<128x128xbf16>
    %c0_8 = arith.constant 0 : index
    %c0_9 = arith.constant 0 : index
    %16 = vector.load %arg6[%c0_8, %c0_9] : memref<128x128xbf16, #tpu.memory_space<vmem>>, vector<128x128xbf16>
    tpu.vector_store %arg6[%c0_8, %c0_9], %15 {strides = array<i32>} : memref<128x128xbf16, #tpu.memory_space<vmem>>, vector<128x128xbf16>,
    return
  }
  func.func @transform_0(%arg0: i32, %arg1: i32) -> (i32, i32) {
    %c0_i32 = arith.constant 0 : i32
    %c0_i32_0 = arith.constant 0 : i32
    return %arg1, %c0_i32 : i32, i32
  }
  func.func @transform_1(%arg0: i32, %arg1: i32) -> (i32, i32) {
    %c0_i32 = arith.constant 0 : i32
    %c0_i32_0 = arith.constant 0 : i32
    return %c0_i32, %arg0 : i32, i32
  }
  func.func @transform_2(%arg0: i32, %arg1: i32) -> (i32, i32) {
    %c0_i32 = arith.constant 0 : i32
    %c0_i32_0 = arith.constant 0 : i32
    return %c0_i32, %arg0 : i32, i32
  }
  func.func @transform_3(%arg0: i32, %arg1: i32) -> (i32, i32) {
    %c0_i32 = arith.constant 0 : i32
    %c0_i32_0 = arith.constant 0 : i32
    return %c0_i32, %arg0 : i32, i32
  }
  func.func @transform_4(%arg0: i32, %arg1: i32) -> (i32, i32) {
    %c0_i32 = arith.constant 0 : i32
    return %arg1, %arg0 : i32, i32
  }
}

module attributes {stable_mosaic.version = 11 : i64} {
  func.func @_dw_kernel(%arg0: i32, %arg1: i32, %arg2: memref<1x8x8x128xbf16, #tpu.memory_space<vmem>>, %arg3: memref<9x128xf32, #tpu.memory_space<vmem>>, %arg4: memref<1x128xf32, #tpu.memory_space<vmem>>, %arg5: memref<1x128xf32, #tpu.memory_space<vmem>>, %arg6: memref<1x8x8x128xbf16, #tpu.memory_space<vmem>>, %arg7: memref<1x1x128xf32, #tpu.memory_space<vmem>>, %arg8: memref<10x10x128xf32, #tpu.memory_space<vmem>>) attributes {dimension_semantics = [#tpu.dimension_semantics<parallel>, #tpu.dimension_semantics<arbitrary>], iteration_bounds = array<i64: 2, 1>, scalar_prefetch = 0 : i64, scratch_operands = 1 : i64, tpu.core_type = #tpu.core_type<tc>, window_params = [{transform_indices = @transform_0, window_bounds = array<i64: 1, 8, 8, 128>}, {pipeline_mode = #tpu.pipeline_mode<synchronous>, transform_indices = @transform_1, window_bounds = array<i64: 9, 128>}, {pipeline_mode = #tpu.pipeline_mode<synchronous>, transform_indices = @transform_2, window_bounds = array<i64: 1, 128>}, {pipeline_mode = #tpu.pipeline_mode<synchronous>, transform_indices = @transform_3, window_bounds = array<i64: 1, 128>}, {transform_indices = @transform_4, window_bounds = array<i64: 1, 8, 8, 128>}, {transform_indices = @transform_5, window_bounds = array<i64: 1, 1, 128>}]} {
    %c0_i32 = arith.constant 0 : i32
    %0 = arith.cmpi eq, %arg1, %c0_i32 : i32
    %1 = arith.extui %0 : i1 to i32
    %c0_i32_0 = arith.constant 0 : i32
    %2 = arith.cmpi ne, %1, %c0_i32_0 : i32
    scf.if %2 {
      %cst_34 = arith.constant 0.000000e+00 : f32
      %103 = vector.broadcast %cst_34 : f32 to vector<10x10x128xf32>
      %c0_35 = arith.constant 0 : index
      %c0_36 = arith.constant 0 : index
      %c0_37 = arith.constant 0 : index
      %104 = vector.load %arg8[%c0_35, %c0_36, %c0_37] : memref<10x10x128xf32, #tpu.memory_space<vmem>>, vector<10x10x128xf32>
      tpu.vector_store %arg8[%c0_35, %c0_36, %c0_37], %103 {strides = array<i32>} : memref<10x10x128xf32, #tpu.memory_space<vmem>>, vector<10x10x128xf32>,
      %c0_38 = arith.constant 0 : index
      %c0_39 = arith.constant 0 : index
      %c0_40 = arith.constant 0 : index
      %c0_41 = arith.constant 0 : index
      %105 = vector.load %arg2[%c0_38, %c0_39, %c0_40, %c0_41] : memref<1x8x8x128xbf16, #tpu.memory_space<vmem>>, vector<1x8x8x128xbf16>
      %106 = vector.shape_cast %105 : vector<1x8x8x128xbf16> to vector<8x8x128xbf16>
      %107 = vector.shape_cast %106 : vector<8x8x128xbf16> to vector<64x128xbf16>
      %108 = arith.extf %107 : vector<64x128xbf16> to vector<64x128xf32>
      %109 = vector.shape_cast %108 : vector<64x128xf32> to vector<8x8x128xf32>
      %c1_42 = arith.constant 1 : index
      %c1_43 = arith.constant 1 : index
      %c0_44 = arith.constant 0 : index
      %110 = vector.load %arg8[%c1_42, %c1_43, %c0_44] : memref<10x10x128xf32, #tpu.memory_space<vmem>>, vector<8x8x128xf32>
      tpu.vector_store %arg8[%c1_42, %c1_43, %c0_44], %109 {strides = array<i32>} : memref<10x10x128xf32, #tpu.memory_space<vmem>>, vector<8x8x128xf32>,
      %cst_45 = arith.constant 0.000000e+00 : f32
      %111 = vector.broadcast %cst_45 : f32 to vector<1x1x128xf32>
      %c0_46 = arith.constant 0 : index
      %c0_47 = arith.constant 0 : index
      %c0_48 = arith.constant 0 : index
      %112 = vector.load %arg7[%c0_46, %c0_47, %c0_48] : memref<1x1x128xf32, #tpu.memory_space<vmem>>, vector<1x1x128xf32>
      tpu.vector_store %arg7[%c0_46, %c0_47, %c0_48], %111 {strides = array<i32>} : memref<1x1x128xf32, #tpu.memory_space<vmem>>, vector<1x1x128xf32>,
    } else {
    }
    %c8_i32 = arith.constant 8 : i32
    %3 = arith.muli %arg1, %c8_i32 : i32
    %4 = tpu.assume_multiple %3, 8 : i32
    %cst = arith.constant 0.000000e+00 : f32
    %5 = vector.broadcast %cst : f32 to vector<8x8x128xf32>
    %c0_i32_1 = arith.constant 0 : i32
    %6 = arith.addi %4, %c0_i32_1 : i32
    %7 = arith.index_cast %6 : i32 to index
    %c0 = arith.constant 0 : index
    %c0_2 = arith.constant 0 : index
    %8 = vector.load %arg8[%7, %c0, %c0_2] : memref<10x10x128xf32, #tpu.memory_space<vmem>>, vector<8x10x128xf32>
    %9 = vector.extract_strided_slice %8 {offsets = [0, 0, 0], sizes = [8, 8, 128], strides = [1, 1, 1]} : vector<8x10x128xf32> to vector<8x8x128xf32>
    %c0_3 = arith.constant 0 : index
    %c0_4 = arith.constant 0 : index
    %10 = vector.load %arg3[%c0_3, %c0_4] : memref<9x128xf32, #tpu.memory_space<vmem>>, vector<1x128xf32>
    %11 = vector.shape_cast %10 : vector<1x128xf32> to vector<128xf32>
    %12 = vector.shape_cast %11 : vector<128xf32> to vector<1x1x128xf32>
    %13 = vector.broadcast %12 : vector<1x1x128xf32> to vector<8x8x128xf32>
    %14 = arith.mulf %9, %13 : vector<8x8x128xf32>
    %15 = arith.addf %5, %14 : vector<8x8x128xf32>
    %16 = vector.extract_strided_slice %8 {offsets = [0, 1, 0], sizes = [8, 8, 128], strides = [1, 1, 1]} : vector<8x10x128xf32> to vector<8x8x128xf32>
    %c1 = arith.constant 1 : index
    %c0_5 = arith.constant 0 : index
    %17 = vector.load %arg3[%c1, %c0_5] : memref<9x128xf32, #tpu.memory_space<vmem>>, vector<1x128xf32>
    %18 = vector.shape_cast %17 : vector<1x128xf32> to vector<128xf32>
    %19 = vector.shape_cast %18 : vector<128xf32> to vector<1x1x128xf32>
    %20 = vector.broadcast %19 : vector<1x1x128xf32> to vector<8x8x128xf32>
    %21 = arith.mulf %16, %20 : vector<8x8x128xf32>
    %22 = arith.addf %15, %21 : vector<8x8x128xf32>
    %23 = vector.extract_strided_slice %8 {offsets = [0, 2, 0], sizes = [8, 8, 128], strides = [1, 1, 1]} : vector<8x10x128xf32> to vector<8x8x128xf32>
    %c2 = arith.constant 2 : index
    %c0_6 = arith.constant 0 : index
    %24 = vector.load %arg3[%c2, %c0_6] : memref<9x128xf32, #tpu.memory_space<vmem>>, vector<1x128xf32>
    %25 = vector.shape_cast %24 : vector<1x128xf32> to vector<128xf32>
    %26 = vector.shape_cast %25 : vector<128xf32> to vector<1x1x128xf32>
    %27 = vector.broadcast %26 : vector<1x1x128xf32> to vector<8x8x128xf32>
    %28 = arith.mulf %23, %27 : vector<8x8x128xf32>
    %29 = arith.addf %22, %28 : vector<8x8x128xf32>
    %c1_i32 = arith.constant 1 : i32
    %30 = arith.addi %4, %c1_i32 : i32
    %31 = arith.index_cast %30 : i32 to index
    %c0_7 = arith.constant 0 : index
    %c0_8 = arith.constant 0 : index
    %32 = vector.load %arg8[%31, %c0_7, %c0_8] : memref<10x10x128xf32, #tpu.memory_space<vmem>>, vector<8x10x128xf32>
    %33 = vector.extract_strided_slice %32 {offsets = [0, 0, 0], sizes = [8, 8, 128], strides = [1, 1, 1]} : vector<8x10x128xf32> to vector<8x8x128xf32>
    %c3 = arith.constant 3 : index
    %c0_9 = arith.constant 0 : index
    %34 = vector.load %arg3[%c3, %c0_9] : memref<9x128xf32, #tpu.memory_space<vmem>>, vector<1x128xf32>
    %35 = vector.shape_cast %34 : vector<1x128xf32> to vector<128xf32>
    %36 = vector.shape_cast %35 : vector<128xf32> to vector<1x1x128xf32>
    %37 = vector.broadcast %36 : vector<1x1x128xf32> to vector<8x8x128xf32>
    %38 = arith.mulf %33, %37 : vector<8x8x128xf32>
    %39 = arith.addf %29, %38 : vector<8x8x128xf32>
    %40 = vector.extract_strided_slice %32 {offsets = [0, 1, 0], sizes = [8, 8, 128], strides = [1, 1, 1]} : vector<8x10x128xf32> to vector<8x8x128xf32>
    %c4 = arith.constant 4 : index
    %c0_10 = arith.constant 0 : index
    %41 = vector.load %arg3[%c4, %c0_10] : memref<9x128xf32, #tpu.memory_space<vmem>>, vector<1x128xf32>
    %42 = vector.shape_cast %41 : vector<1x128xf32> to vector<128xf32>
    %43 = vector.shape_cast %42 : vector<128xf32> to vector<1x1x128xf32>
    %44 = vector.broadcast %43 : vector<1x1x128xf32> to vector<8x8x128xf32>
    %45 = arith.mulf %40, %44 : vector<8x8x128xf32>
    %46 = arith.addf %39, %45 : vector<8x8x128xf32>
    %47 = vector.extract_strided_slice %32 {offsets = [0, 2, 0], sizes = [8, 8, 128], strides = [1, 1, 1]} : vector<8x10x128xf32> to vector<8x8x128xf32>
    %c5 = arith.constant 5 : index
    %c0_11 = arith.constant 0 : index
    %48 = vector.load %arg3[%c5, %c0_11] : memref<9x128xf32, #tpu.memory_space<vmem>>, vector<1x128xf32>
    %49 = vector.shape_cast %48 : vector<1x128xf32> to vector<128xf32>
    %50 = vector.shape_cast %49 : vector<128xf32> to vector<1x1x128xf32>
    %51 = vector.broadcast %50 : vector<1x1x128xf32> to vector<8x8x128xf32>
    %52 = arith.mulf %47, %51 : vector<8x8x128xf32>
    %53 = arith.addf %46, %52 : vector<8x8x128xf32>
    %c2_i32 = arith.constant 2 : i32
    %54 = arith.addi %4, %c2_i32 : i32
    %55 = arith.index_cast %54 : i32 to index
    %c0_12 = arith.constant 0 : index
    %c0_13 = arith.constant 0 : index
    %56 = vector.load %arg8[%55, %c0_12, %c0_13] : memref<10x10x128xf32, #tpu.memory_space<vmem>>, vector<8x10x128xf32>
    %57 = vector.extract_strided_slice %56 {offsets = [0, 0, 0], sizes = [8, 8, 128], strides = [1, 1, 1]} : vector<8x10x128xf32> to vector<8x8x128xf32>
    %c6 = arith.constant 6 : index
    %c0_14 = arith.constant 0 : index
    %58 = vector.load %arg3[%c6, %c0_14] : memref<9x128xf32, #tpu.memory_space<vmem>>, vector<1x128xf32>
    %59 = vector.shape_cast %58 : vector<1x128xf32> to vector<128xf32>
    %60 = vector.shape_cast %59 : vector<128xf32> to vector<1x1x128xf32>
    %61 = vector.broadcast %60 : vector<1x1x128xf32> to vector<8x8x128xf32>
    %62 = arith.mulf %57, %61 : vector<8x8x128xf32>
    %63 = arith.addf %53, %62 : vector<8x8x128xf32>
    %64 = vector.extract_strided_slice %56 {offsets = [0, 1, 0], sizes = [8, 8, 128], strides = [1, 1, 1]} : vector<8x10x128xf32> to vector<8x8x128xf32>
    %c7 = arith.constant 7 : index
    %c0_15 = arith.constant 0 : index
    %65 = vector.load %arg3[%c7, %c0_15] : memref<9x128xf32, #tpu.memory_space<vmem>>, vector<1x128xf32>
    %66 = vector.shape_cast %65 : vector<1x128xf32> to vector<128xf32>
    %67 = vector.shape_cast %66 : vector<128xf32> to vector<1x1x128xf32>
    %68 = vector.broadcast %67 : vector<1x1x128xf32> to vector<8x8x128xf32>
    %69 = arith.mulf %64, %68 : vector<8x8x128xf32>
    %70 = arith.addf %63, %69 : vector<8x8x128xf32>
    %71 = vector.extract_strided_slice %56 {offsets = [0, 2, 0], sizes = [8, 8, 128], strides = [1, 1, 1]} : vector<8x10x128xf32> to vector<8x8x128xf32>
    %c8 = arith.constant 8 : index
    %c0_16 = arith.constant 0 : index
    %72 = vector.load %arg3[%c8, %c0_16] : memref<9x128xf32, #tpu.memory_space<vmem>>, vector<1x128xf32>
    %73 = vector.shape_cast %72 : vector<1x128xf32> to vector<128xf32>
    %74 = vector.shape_cast %73 : vector<128xf32> to vector<1x1x128xf32>
    %75 = vector.broadcast %74 : vector<1x1x128xf32> to vector<8x8x128xf32>
    %76 = arith.mulf %71, %75 : vector<8x8x128xf32>
    %77 = arith.addf %70, %76 : vector<8x8x128xf32>
    %c0_17 = arith.constant 0 : index
    %c0_18 = arith.constant 0 : index
    %78 = vector.load %arg4[%c0_17, %c0_18] : memref<1x128xf32, #tpu.memory_space<vmem>>, vector<1x128xf32>
    %79 = vector.shape_cast %78 : vector<1x128xf32> to vector<1x1x128xf32>
    %80 = vector.broadcast %79 : vector<1x1x128xf32> to vector<8x8x128xf32>
    %81 = arith.mulf %77, %80 : vector<8x8x128xf32>
    %c0_19 = arith.constant 0 : index
    %c0_20 = arith.constant 0 : index
    %82 = vector.load %arg5[%c0_19, %c0_20] : memref<1x128xf32, #tpu.memory_space<vmem>>, vector<1x128xf32>
    %83 = vector.shape_cast %82 : vector<1x128xf32> to vector<1x1x128xf32>
    %84 = vector.broadcast %83 : vector<1x1x128xf32> to vector<8x8x128xf32>
    %85 = arith.addf %81, %84 : vector<8x8x128xf32>
    %86 = arith.negf %85 : vector<8x8x128xf32>
    %87 = math.exp %86 : vector<8x8x128xf32>
    %cst_21 = arith.constant 1.000000e+00 : f32
    %88 = vector.broadcast %cst_21 : f32 to vector<8x8x128xf32>
    %89 = arith.addf %88, %87 : vector<8x8x128xf32>
    %90 = arith.divf %88, %89 : vector<8x8x128xf32>
    %91 = arith.mulf %85, %90 : vector<8x8x128xf32>
    %92 = arith.truncf %91 : vector<8x8x128xf32> to vector<8x8x128xbf16>
    %c0_22 = arith.constant 0 : index
    %c0_23 = arith.constant 0 : index
    %c0_24 = arith.constant 0 : index
    %c0_25 = arith.constant 0 : index
    %93 = vector.load %arg6[%c0_22, %c0_23, %c0_24, %c0_25] : memref<1x8x8x128xbf16, #tpu.memory_space<vmem>>, vector<1x8x8x128xbf16>
    %94 = vector.shape_cast %93 : vector<1x8x8x128xbf16> to vector<8x8x128xbf16>
    %95 = vector.shape_cast %92 : vector<8x8x128xbf16> to vector<1x8x8x128xbf16>
    tpu.vector_store %arg6[%c0_22, %c0_23, %c0_24, %c0_25], %95 {strides = array<i32>} : memref<1x8x8x128xbf16, #tpu.memory_space<vmem>>, vector<1x8x8x128xbf16>,
    %c0_26 = arith.constant 0 : index
    %c0_27 = arith.constant 0 : index
    %c0_28 = arith.constant 0 : index
    %96 = vector.load %arg7[%c0_26, %c0_27, %c0_28] : memref<1x1x128xf32, #tpu.memory_space<vmem>>, vector<1x1x128xf32>
    %cst_29 = arith.constant dense<0.000000e+00> : vector<128xf32>
    %97 = vector.multi_reduction <add>, %91, %cst_29 [0, 1] : vector<8x8x128xf32> to vector<128xf32>
    %cst_30 = arith.constant 1.562500e-02 : f32
    %98 = vector.broadcast %cst_30 : f32 to vector<128xf32>
    %99 = arith.mulf %97, %98 : vector<128xf32>
    %100 = vector.shape_cast %99 : vector<128xf32> to vector<1x1x128xf32>
    %101 = arith.addf %96, %100 : vector<1x1x128xf32>
    %c0_31 = arith.constant 0 : index
    %c0_32 = arith.constant 0 : index
    %c0_33 = arith.constant 0 : index
    %102 = vector.load %arg7[%c0_31, %c0_32, %c0_33] : memref<1x1x128xf32, #tpu.memory_space<vmem>>, vector<1x1x128xf32>
    tpu.vector_store %arg7[%c0_31, %c0_32, %c0_33], %101 {strides = array<i32>} : memref<1x1x128xf32, #tpu.memory_space<vmem>>, vector<1x1x128xf32>,
    return
  }
  func.func @transform_0(%arg0: i32, %arg1: i32) -> (i32, i32, i32, i32) {
    %c0_i32 = arith.constant 0 : i32
    %c0_i32_0 = arith.constant 0 : i32
    %c0_i32_1 = arith.constant 0 : i32
    %c0_i32_2 = arith.constant 0 : i32
    return %arg0, %c0_i32, %c0_i32_0, %c0_i32_1 : i32, i32, i32, i32
  }
  func.func @transform_1(%arg0: i32, %arg1: i32) -> (i32, i32) {
    %c0_i32 = arith.constant 0 : i32
    %c0_i32_0 = arith.constant 0 : i32
    %c0_i32_1 = arith.constant 0 : i32
    return %c0_i32, %c0_i32_0 : i32, i32
  }
  func.func @transform_2(%arg0: i32, %arg1: i32) -> (i32, i32) {
    %c0_i32 = arith.constant 0 : i32
    %c0_i32_0 = arith.constant 0 : i32
    %c0_i32_1 = arith.constant 0 : i32
    return %c0_i32, %c0_i32_0 : i32, i32
  }
  func.func @transform_3(%arg0: i32, %arg1: i32) -> (i32, i32) {
    %c0_i32 = arith.constant 0 : i32
    %c0_i32_0 = arith.constant 0 : i32
    %c0_i32_1 = arith.constant 0 : i32
    return %c0_i32, %c0_i32_0 : i32, i32
  }
  func.func @transform_4(%arg0: i32, %arg1: i32) -> (i32, i32, i32, i32) {
    %c0_i32 = arith.constant 0 : i32
    %c0_i32_0 = arith.constant 0 : i32
    %c0_i32_1 = arith.constant 0 : i32
    return %arg0, %arg1, %c0_i32, %c0_i32_0 : i32, i32, i32, i32
  }
  func.func @transform_5(%arg0: i32, %arg1: i32) -> (i32, i32, i32) {
    %c0_i32 = arith.constant 0 : i32
    %c0_i32_0 = arith.constant 0 : i32
    %c0_i32_1 = arith.constant 0 : i32
    return %arg0, %c0_i32, %c0_i32_0 : i32, i32, i32
  }
}

module attributes {stable_mosaic.version = 11 : i64} {
  func.func @_proj_kernel(%arg0: i32, %arg1: i32, %arg2: memref<1x64x128xbf16, #tpu.memory_space<vmem>>, %arg3: memref<1x1x128xf32, #tpu.memory_space<vmem>>, %arg4: memref<128x128xbf16, #tpu.memory_space<vmem>>, %arg5: memref<1x128xf32, #tpu.memory_space<vmem>>, %arg6: memref<128x128xbf16, #tpu.memory_space<vmem>>, %arg7: memref<1x128xf32, #tpu.memory_space<vmem>>, %arg8: memref<128x128xbf16, #tpu.memory_space<vmem>>, %arg9: memref<1x128xf32, #tpu.memory_space<vmem>>, %arg10: memref<1x128xf32, #tpu.memory_space<vmem>>, %arg11: memref<1x64x128xbf16, #tpu.memory_space<vmem>>, %arg12: memref<1x128xf32, #tpu.memory_space<vmem>>) attributes {dimension_semantics = [#tpu.dimension_semantics<parallel>, #tpu.dimension_semantics<arbitrary>], iteration_bounds = array<i64: 2, 1>, scalar_prefetch = 0 : i64, scratch_operands = 1 : i64, tpu.core_type = #tpu.core_type<tc>, window_params = [{transform_indices = @transform_0, window_bounds = array<i64: 1, 64, 128>}, {transform_indices = @transform_1, window_bounds = array<i64: 1, 1, 128>}, {pipeline_mode = #tpu.pipeline_mode<synchronous>, transform_indices = @transform_2, window_bounds = array<i64: 128, 128>}, {pipeline_mode = #tpu.pipeline_mode<synchronous>, transform_indices = @transform_3, window_bounds = array<i64: 1, 128>}, {pipeline_mode = #tpu.pipeline_mode<synchronous>, transform_indices = @transform_4, window_bounds = array<i64: 128, 128>}, {pipeline_mode = #tpu.pipeline_mode<synchronous>, transform_indices = @transform_5, window_bounds = array<i64: 1, 128>}, {pipeline_mode = #tpu.pipeline_mode<synchronous>, transform_indices = @transform_6, window_bounds = array<i64: 128, 128>}, {pipeline_mode = #tpu.pipeline_mode<synchronous>, transform_indices = @transform_7, window_bounds = array<i64: 1, 128>}, {pipeline_mode = #tpu.pipeline_mode<synchronous>, transform_indices = @transform_8, window_bounds = array<i64: 1, 128>}, {transform_indices = @transform_9, window_bounds = array<i64: 1, 64, 128>}]} {
    %c0_i32 = arith.constant 0 : i32
    %0 = arith.cmpi eq, %arg1, %c0_i32 : i32
    %1 = arith.extui %0 : i1 to i32
    %c0_i32_0 = arith.constant 0 : i32
    %2 = arith.cmpi ne, %1, %c0_i32_0 : i32
    scf.if %2 {
      %c0_14 = arith.constant 0 : index
      %c0_15 = arith.constant 0 : index
      %c0_16 = arith.constant 0 : index
      %22 = vector.load %arg3[%c0_14, %c0_15, %c0_16] : memref<1x1x128xf32, #tpu.memory_space<vmem>>, vector<1x1x128xf32>
      %23 = vector.shape_cast %22 : vector<1x1x128xf32> to vector<1x128xf32>
      %24 = arith.truncf %23 : vector<1x128xf32> to vector<1x128xbf16>
      %c0_17 = arith.constant 0 : index
      %c0_18 = arith.constant 0 : index
      %25 = vector.load %arg4[%c0_17, %c0_18] : memref<128x128xbf16, #tpu.memory_space<vmem>>, vector<128x128xbf16>
      %cst_19 = arith.constant dense<0.000000e+00> : vector<1x128xf32>
      %26 = tpu.matmul %24, %25, %cst_19 {dimension_numbers = #tpu.dot_dimension_numbers<[1], [0], [0], [1], [0, 0, 1, 1], [], []>} : vector<1x128xbf16>, vector<128x128xbf16>, vector<1x128xf32> -> vector<1x128xf32>
      %c0_20 = arith.constant 0 : index
      %c0_21 = arith.constant 0 : index
      %27 = vector.load %arg5[%c0_20, %c0_21] : memref<1x128xf32, #tpu.memory_space<vmem>>, vector<1x128xf32>
      %28 = arith.addf %26, %27 : vector<1x128xf32>
      %29 = arith.negf %28 : vector<1x128xf32>
      %30 = math.exp %29 : vector<1x128xf32>
      %cst_22 = arith.constant 1.000000e+00 : f32
      %31 = vector.broadcast %cst_22 : f32 to vector<1x128xf32>
      %32 = arith.addf %31, %30 : vector<1x128xf32>
      %33 = arith.divf %31, %32 : vector<1x128xf32>
      %34 = arith.mulf %28, %33 : vector<1x128xf32>
      %35 = arith.truncf %34 : vector<1x128xf32> to vector<1x128xbf16>
      %c0_23 = arith.constant 0 : index
      %c0_24 = arith.constant 0 : index
      %36 = vector.load %arg6[%c0_23, %c0_24] : memref<128x128xbf16, #tpu.memory_space<vmem>>, vector<128x128xbf16>
      %cst_25 = arith.constant dense<0.000000e+00> : vector<1x128xf32>
      %37 = tpu.matmul %35, %36, %cst_25 {dimension_numbers = #tpu.dot_dimension_numbers<[1], [0], [0], [1], [0, 0, 1, 1], [], []>} : vector<1x128xbf16>, vector<128x128xbf16>, vector<1x128xf32> -> vector<1x128xf32>
      %c0_26 = arith.constant 0 : index
      %c0_27 = arith.constant 0 : index
      %38 = vector.load %arg7[%c0_26, %c0_27] : memref<1x128xf32, #tpu.memory_space<vmem>>, vector<1x128xf32>
      %39 = arith.addf %37, %38 : vector<1x128xf32>
      %40 = arith.negf %39 : vector<1x128xf32>
      %41 = math.exp %40 : vector<1x128xf32>
      %cst_28 = arith.constant 1.000000e+00 : f32
      %42 = vector.broadcast %cst_28 : f32 to vector<1x128xf32>
      %43 = arith.addf %42, %41 : vector<1x128xf32>
      %44 = arith.divf %42, %43 : vector<1x128xf32>
      %c0_29 = arith.constant 0 : index
      %c0_30 = arith.constant 0 : index
      %45 = vector.load %arg12[%c0_29, %c0_30] : memref<1x128xf32, #tpu.memory_space<vmem>>, vector<1x128xf32>
      tpu.vector_store %arg12[%c0_29, %c0_30], %44 {strides = array<i32>} : memref<1x128xf32, #tpu.memory_space<vmem>>, vector<1x128xf32>,
    } else {
    }
    %c0 = arith.constant 0 : index
    %c0_1 = arith.constant 0 : index
    %c0_2 = arith.constant 0 : index
    %3 = vector.load %arg2[%c0, %c0_1, %c0_2] : memref<1x64x128xbf16, #tpu.memory_space<vmem>>, vector<1x64x128xbf16>
    %4 = vector.shape_cast %3 : vector<1x64x128xbf16> to vector<64x128xbf16>
    %5 = arith.extf %4 : vector<64x128xbf16> to vector<64x128xf32>
    %c0_3 = arith.constant 0 : index
    %c0_4 = arith.constant 0 : index
    %6 = vector.load %arg12[%c0_3, %c0_4] : memref<1x128xf32, #tpu.memory_space<vmem>>, vector<1x128xf32>
    %7 = vector.broadcast %6 : vector<1x128xf32> to vector<64x128xf32>
    %8 = arith.mulf %5, %7 : vector<64x128xf32>
    %9 = arith.truncf %8 : vector<64x128xf32> to vector<64x128xbf16>
    %c0_5 = arith.constant 0 : index
    %c0_6 = arith.constant 0 : index
    %10 = vector.load %arg8[%c0_5, %c0_6] : memref<128x128xbf16, #tpu.memory_space<vmem>>, vector<128x128xbf16>
    %cst = arith.constant dense<0.000000e+00> : vector<64x128xf32>
    %11 = tpu.matmul %9, %10, %cst {dimension_numbers = #tpu.dot_dimension_numbers<[1], [0], [0], [1], [0, 0, 1, 1], [], []>} : vector<64x128xbf16>, vector<128x128xbf16>, vector<64x128xf32> -> vector<64x128xf32>
    %c0_7 = arith.constant 0 : index
    %c0_8 = arith.constant 0 : index
    %12 = vector.load %arg9[%c0_7, %c0_8] : memref<1x128xf32, #tpu.memory_space<vmem>>, vector<1x128xf32>
    %13 = vector.broadcast %12 : vector<1x128xf32> to vector<64x128xf32>
    %14 = arith.mulf %11, %13 : vector<64x128xf32>
    %c0_9 = arith.constant 0 : index
    %c0_10 = arith.constant 0 : index
    %15 = vector.load %arg10[%c0_9, %c0_10] : memref<1x128xf32, #tpu.memory_space<vmem>>, vector<1x128xf32>
    %16 = vector.broadcast %15 : vector<1x128xf32> to vector<64x128xf32>
    %17 = arith.addf %14, %16 : vector<64x128xf32>
    %18 = arith.truncf %17 : vector<64x128xf32> to vector<64x128xbf16>
    %c0_11 = arith.constant 0 : index
    %c0_12 = arith.constant 0 : index
    %c0_13 = arith.constant 0 : index
    %19 = vector.load %arg11[%c0_11, %c0_12, %c0_13] : memref<1x64x128xbf16, #tpu.memory_space<vmem>>, vector<1x64x128xbf16>
    %20 = vector.shape_cast %19 : vector<1x64x128xbf16> to vector<64x128xbf16>
    %21 = vector.shape_cast %18 : vector<64x128xbf16> to vector<1x64x128xbf16>
    tpu.vector_store %arg11[%c0_11, %c0_12, %c0_13], %21 {strides = array<i32>} : memref<1x64x128xbf16, #tpu.memory_space<vmem>>, vector<1x64x128xbf16>,
    return
  }
  func.func @transform_0(%arg0: i32, %arg1: i32) -> (i32, i32, i32) {
    %c0_i32 = arith.constant 0 : i32
    %c0_i32_0 = arith.constant 0 : i32
    return %arg0, %arg1, %c0_i32 : i32, i32, i32
  }
  func.func @transform_1(%arg0: i32, %arg1: i32) -> (i32, i32, i32) {
    %c0_i32 = arith.constant 0 : i32
    %c0_i32_0 = arith.constant 0 : i32
    %c0_i32_1 = arith.constant 0 : i32
    return %arg0, %c0_i32, %c0_i32_0 : i32, i32, i32
  }
  func.func @transform_2(%arg0: i32, %arg1: i32) -> (i32, i32) {
    %c0_i32 = arith.constant 0 : i32
    %c0_i32_0 = arith.constant 0 : i32
    %c0_i32_1 = arith.constant 0 : i32
    return %c0_i32, %c0_i32_0 : i32, i32
  }
  func.func @transform_3(%arg0: i32, %arg1: i32) -> (i32, i32) {
    %c0_i32 = arith.constant 0 : i32
    %c0_i32_0 = arith.constant 0 : i32
    %c0_i32_1 = arith.constant 0 : i32
    return %c0_i32, %c0_i32_0 : i32, i32
  }
  func.func @transform_4(%arg0: i32, %arg1: i32) -> (i32, i32) {
    %c0_i32 = arith.constant 0 : i32
    %c0_i32_0 = arith.constant 0 : i32
    %c0_i32_1 = arith.constant 0 : i32
    return %c0_i32, %c0_i32_0 : i32, i32
  }
  func.func @transform_5(%arg0: i32, %arg1: i32) -> (i32, i32) {
    %c0_i32 = arith.constant 0 : i32
    %c0_i32_0 = arith.constant 0 : i32
    %c0_i32_1 = arith.constant 0 : i32
    return %c0_i32, %c0_i32_0 : i32, i32
  }
  func.func @transform_6(%arg0: i32, %arg1: i32) -> (i32, i32) {
    %c0_i32 = arith.constant 0 : i32
    %c0_i32_0 = arith.constant 0 : i32
    %c0_i32_1 = arith.constant 0 : i32
    return %c0_i32, %c0_i32_0 : i32, i32
  }
  func.func @transform_7(%arg0: i32, %arg1: i32) -> (i32, i32) {
    %c0_i32 = arith.constant 0 : i32
    %c0_i32_0 = arith.constant 0 : i32
    %c0_i32_1 = arith.constant 0 : i32
    return %c0_i32, %c0_i32_0 : i32, i32
  }
  func.func @transform_8(%arg0: i32, %arg1: i32) -> (i32, i32) {
    %c0_i32 = arith.constant 0 : i32
    %c0_i32_0 = arith.constant 0 : i32
    %c0_i32_1 = arith.constant 0 : i32
    return %c0_i32, %c0_i32_0 : i32, i32
  }
  func.func @transform_9(%arg0: i32, %arg1: i32) -> (i32, i32, i32) {
    %c0_i32 = arith.constant 0 : i32
    %c0_i32_0 = arith.constant 0 : i32
    return %arg0, %arg1, %c0_i32 : i32, i32, i32
  }
}

module attributes {stable_mosaic.version = 11 : i64} {
  func.func @_dw_kernel(%arg0: i32, %arg1: i32, %arg2: memref<1x8x8x128xbf16, #tpu.memory_space<vmem>>, %arg3: memref<128x128xbf16, #tpu.memory_space<vmem>>, %arg4: memref<1x128xf32, #tpu.memory_space<vmem>>, %arg5: memref<1x128xf32, #tpu.memory_space<vmem>>, %arg6: memref<9x128xf32, #tpu.memory_space<vmem>>, %arg7: memref<1x128xf32, #tpu.memory_space<vmem>>, %arg8: memref<1x128xf32, #tpu.memory_space<vmem>>, %arg9: memref<1x8x8x128xbf16, #tpu.memory_space<vmem>>, %arg10: memref<1x1x128xf32, #tpu.memory_space<vmem>>, %arg11: memref<10x10x128xf32, #tpu.memory_space<vmem>>) attributes {dimension_semantics = [#tpu.dimension_semantics<parallel>, #tpu.dimension_semantics<arbitrary>], iteration_bounds = array<i64: 2, 1>, scalar_prefetch = 0 : i64, scratch_operands = 1 : i64, tpu.core_type = #tpu.core_type<tc>, window_params = [{transform_indices = @transform_0, window_bounds = array<i64: 1, 8, 8, 128>}, {pipeline_mode = #tpu.pipeline_mode<synchronous>, transform_indices = @transform_1, window_bounds = array<i64: 128, 128>}, {pipeline_mode = #tpu.pipeline_mode<synchronous>, transform_indices = @transform_2, window_bounds = array<i64: 1, 128>}, {pipeline_mode = #tpu.pipeline_mode<synchronous>, transform_indices = @transform_3, window_bounds = array<i64: 1, 128>}, {pipeline_mode = #tpu.pipeline_mode<synchronous>, transform_indices = @transform_4, window_bounds = array<i64: 9, 128>}, {pipeline_mode = #tpu.pipeline_mode<synchronous>, transform_indices = @transform_5, window_bounds = array<i64: 1, 128>}, {pipeline_mode = #tpu.pipeline_mode<synchronous>, transform_indices = @transform_6, window_bounds = array<i64: 1, 128>}, {transform_indices = @transform_7, window_bounds = array<i64: 1, 8, 8, 128>}, {transform_indices = @transform_8, window_bounds = array<i64: 1, 1, 128>}]} {
    %c0_i32 = arith.constant 0 : i32
    %0 = arith.cmpi eq, %arg1, %c0_i32 : i32
    %1 = arith.extui %0 : i1 to i32
    %c0_i32_0 = arith.constant 0 : i32
    %2 = arith.cmpi ne, %1, %c0_i32_0 : i32
    scf.if %2 {
      %cst_34 = arith.constant 0.000000e+00 : f32
      %103 = vector.broadcast %cst_34 : f32 to vector<10x10x128xf32>
      %c0_35 = arith.constant 0 : index
      %c0_36 = arith.constant 0 : index
      %c0_37 = arith.constant 0 : index
      %104 = vector.load %arg11[%c0_35, %c0_36, %c0_37] : memref<10x10x128xf32, #tpu.memory_space<vmem>>, vector<10x10x128xf32>
      tpu.vector_store %arg11[%c0_35, %c0_36, %c0_37], %103 {strides = array<i32>} : memref<10x10x128xf32, #tpu.memory_space<vmem>>, vector<10x10x128xf32>,
      %c0_38 = arith.constant 0 : index
      %c0_39 = arith.constant 0 : index
      %c0_40 = arith.constant 0 : index
      %c0_41 = arith.constant 0 : index
      %105 = vector.load %arg2[%c0_38, %c0_39, %c0_40, %c0_41] : memref<1x8x8x128xbf16, #tpu.memory_space<vmem>>, vector<1x8x8x128xbf16>
      %106 = vector.shape_cast %105 : vector<1x8x8x128xbf16> to vector<8x8x128xbf16>
      %107 = vector.shape_cast %106 : vector<8x8x128xbf16> to vector<64x128xbf16>
      %c0_42 = arith.constant 0 : index
      %c0_43 = arith.constant 0 : index
      %108 = vector.load %arg3[%c0_42, %c0_43] : memref<128x128xbf16, #tpu.memory_space<vmem>>, vector<128x128xbf16>
      %cst_44 = arith.constant dense<0.000000e+00> : vector<64x128xf32>
      %109 = tpu.matmul %107, %108, %cst_44 {dimension_numbers = #tpu.dot_dimension_numbers<[1], [0], [0], [1], [0, 0, 1, 1], [], []>} : vector<64x128xbf16>, vector<128x128xbf16>, vector<64x128xf32> -> vector<64x128xf32>
      %c0_45 = arith.constant 0 : index
      %c0_46 = arith.constant 0 : index
      %110 = vector.load %arg4[%c0_45, %c0_46] : memref<1x128xf32, #tpu.memory_space<vmem>>, vector<1x128xf32>
      %111 = vector.broadcast %110 : vector<1x128xf32> to vector<64x128xf32>
      %112 = arith.mulf %109, %111 : vector<64x128xf32>
      %c0_47 = arith.constant 0 : index
      %c0_48 = arith.constant 0 : index
      %113 = vector.load %arg5[%c0_47, %c0_48] : memref<1x128xf32, #tpu.memory_space<vmem>>, vector<1x128xf32>
      %114 = vector.broadcast %113 : vector<1x128xf32> to vector<64x128xf32>
      %115 = arith.addf %112, %114 : vector<64x128xf32>
      %116 = arith.negf %115 : vector<64x128xf32>
      %117 = math.exp %116 : vector<64x128xf32>
      %cst_49 = arith.constant 1.000000e+00 : f32
      %118 = vector.broadcast %cst_49 : f32 to vector<64x128xf32>
      %119 = arith.addf %118, %117 : vector<64x128xf32>
      %120 = arith.divf %118, %119 : vector<64x128xf32>
      %121 = arith.mulf %115, %120 : vector<64x128xf32>
      %122 = vector.shape_cast %121 : vector<64x128xf32> to vector<8x8x128xf32>
      %c1_50 = arith.constant 1 : index
      %c1_51 = arith.constant 1 : index
      %c0_52 = arith.constant 0 : index
      %123 = vector.load %arg11[%c1_50, %c1_51, %c0_52] : memref<10x10x128xf32, #tpu.memory_space<vmem>>, vector<8x8x128xf32>
      tpu.vector_store %arg11[%c1_50, %c1_51, %c0_52], %122 {strides = array<i32>} : memref<10x10x128xf32, #tpu.memory_space<vmem>>, vector<8x8x128xf32>,
      %cst_53 = arith.constant 0.000000e+00 : f32
      %124 = vector.broadcast %cst_53 : f32 to vector<1x1x128xf32>
      %c0_54 = arith.constant 0 : index
      %c0_55 = arith.constant 0 : index
      %c0_56 = arith.constant 0 : index
      %125 = vector.load %arg10[%c0_54, %c0_55, %c0_56] : memref<1x1x128xf32, #tpu.memory_space<vmem>>, vector<1x1x128xf32>
      tpu.vector_store %arg10[%c0_54, %c0_55, %c0_56], %124 {strides = array<i32>} : memref<1x1x128xf32, #tpu.memory_space<vmem>>, vector<1x1x128xf32>,
    } else {
    }
    %c8_i32 = arith.constant 8 : i32
    %3 = arith.muli %arg1, %c8_i32 : i32
    %4 = tpu.assume_multiple %3, 8 : i32
    %cst = arith.constant 0.000000e+00 : f32
    %5 = vector.broadcast %cst : f32 to vector<8x8x128xf32>
    %c0_i32_1 = arith.constant 0 : i32
    %6 = arith.addi %4, %c0_i32_1 : i32
    %7 = arith.index_cast %6 : i32 to index
    %c0 = arith.constant 0 : index
    %c0_2 = arith.constant 0 : index
    %8 = vector.load %arg11[%7, %c0, %c0_2] : memref<10x10x128xf32, #tpu.memory_space<vmem>>, vector<8x10x128xf32>
    %9 = vector.extract_strided_slice %8 {offsets = [0, 0, 0], sizes = [8, 8, 128], strides = [1, 1, 1]} : vector<8x10x128xf32> to vector<8x8x128xf32>
    %c0_3 = arith.constant 0 : index
    %c0_4 = arith.constant 0 : index
    %10 = vector.load %arg6[%c0_3, %c0_4] : memref<9x128xf32, #tpu.memory_space<vmem>>, vector<1x128xf32>
    %11 = vector.shape_cast %10 : vector<1x128xf32> to vector<128xf32>
    %12 = vector.shape_cast %11 : vector<128xf32> to vector<1x1x128xf32>
    %13 = vector.broadcast %12 : vector<1x1x128xf32> to vector<8x8x128xf32>
    %14 = arith.mulf %9, %13 : vector<8x8x128xf32>
    %15 = arith.addf %5, %14 : vector<8x8x128xf32>
    %16 = vector.extract_strided_slice %8 {offsets = [0, 1, 0], sizes = [8, 8, 128], strides = [1, 1, 1]} : vector<8x10x128xf32> to vector<8x8x128xf32>
    %c1 = arith.constant 1 : index
    %c0_5 = arith.constant 0 : index
    %17 = vector.load %arg6[%c1, %c0_5] : memref<9x128xf32, #tpu.memory_space<vmem>>, vector<1x128xf32>
    %18 = vector.shape_cast %17 : vector<1x128xf32> to vector<128xf32>
    %19 = vector.shape_cast %18 : vector<128xf32> to vector<1x1x128xf32>
    %20 = vector.broadcast %19 : vector<1x1x128xf32> to vector<8x8x128xf32>
    %21 = arith.mulf %16, %20 : vector<8x8x128xf32>
    %22 = arith.addf %15, %21 : vector<8x8x128xf32>
    %23 = vector.extract_strided_slice %8 {offsets = [0, 2, 0], sizes = [8, 8, 128], strides = [1, 1, 1]} : vector<8x10x128xf32> to vector<8x8x128xf32>
    %c2 = arith.constant 2 : index
    %c0_6 = arith.constant 0 : index
    %24 = vector.load %arg6[%c2, %c0_6] : memref<9x128xf32, #tpu.memory_space<vmem>>, vector<1x128xf32>
    %25 = vector.shape_cast %24 : vector<1x128xf32> to vector<128xf32>
    %26 = vector.shape_cast %25 : vector<128xf32> to vector<1x1x128xf32>
    %27 = vector.broadcast %26 : vector<1x1x128xf32> to vector<8x8x128xf32>
    %28 = arith.mulf %23, %27 : vector<8x8x128xf32>
    %29 = arith.addf %22, %28 : vector<8x8x128xf32>
    %c1_i32 = arith.constant 1 : i32
    %30 = arith.addi %4, %c1_i32 : i32
    %31 = arith.index_cast %30 : i32 to index
    %c0_7 = arith.constant 0 : index
    %c0_8 = arith.constant 0 : index
    %32 = vector.load %arg11[%31, %c0_7, %c0_8] : memref<10x10x128xf32, #tpu.memory_space<vmem>>, vector<8x10x128xf32>
    %33 = vector.extract_strided_slice %32 {offsets = [0, 0, 0], sizes = [8, 8, 128], strides = [1, 1, 1]} : vector<8x10x128xf32> to vector<8x8x128xf32>
    %c3 = arith.constant 3 : index
    %c0_9 = arith.constant 0 : index
    %34 = vector.load %arg6[%c3, %c0_9] : memref<9x128xf32, #tpu.memory_space<vmem>>, vector<1x128xf32>
    %35 = vector.shape_cast %34 : vector<1x128xf32> to vector<128xf32>
    %36 = vector.shape_cast %35 : vector<128xf32> to vector<1x1x128xf32>
    %37 = vector.broadcast %36 : vector<1x1x128xf32> to vector<8x8x128xf32>
    %38 = arith.mulf %33, %37 : vector<8x8x128xf32>
    %39 = arith.addf %29, %38 : vector<8x8x128xf32>
    %40 = vector.extract_strided_slice %32 {offsets = [0, 1, 0], sizes = [8, 8, 128], strides = [1, 1, 1]} : vector<8x10x128xf32> to vector<8x8x128xf32>
    %c4 = arith.constant 4 : index
    %c0_10 = arith.constant 0 : index
    %41 = vector.load %arg6[%c4, %c0_10] : memref<9x128xf32, #tpu.memory_space<vmem>>, vector<1x128xf32>
    %42 = vector.shape_cast %41 : vector<1x128xf32> to vector<128xf32>
    %43 = vector.shape_cast %42 : vector<128xf32> to vector<1x1x128xf32>
    %44 = vector.broadcast %43 : vector<1x1x128xf32> to vector<8x8x128xf32>
    %45 = arith.mulf %40, %44 : vector<8x8x128xf32>
    %46 = arith.addf %39, %45 : vector<8x8x128xf32>
    %47 = vector.extract_strided_slice %32 {offsets = [0, 2, 0], sizes = [8, 8, 128], strides = [1, 1, 1]} : vector<8x10x128xf32> to vector<8x8x128xf32>
    %c5 = arith.constant 5 : index
    %c0_11 = arith.constant 0 : index
    %48 = vector.load %arg6[%c5, %c0_11] : memref<9x128xf32, #tpu.memory_space<vmem>>, vector<1x128xf32>
    %49 = vector.shape_cast %48 : vector<1x128xf32> to vector<128xf32>
    %50 = vector.shape_cast %49 : vector<128xf32> to vector<1x1x128xf32>
    %51 = vector.broadcast %50 : vector<1x1x128xf32> to vector<8x8x128xf32>
    %52 = arith.mulf %47, %51 : vector<8x8x128xf32>
    %53 = arith.addf %46, %52 : vector<8x8x128xf32>
    %c2_i32 = arith.constant 2 : i32
    %54 = arith.addi %4, %c2_i32 : i32
    %55 = arith.index_cast %54 : i32 to index
    %c0_12 = arith.constant 0 : index
    %c0_13 = arith.constant 0 : index
    %56 = vector.load %arg11[%55, %c0_12, %c0_13] : memref<10x10x128xf32, #tpu.memory_space<vmem>>, vector<8x10x128xf32>
    %57 = vector.extract_strided_slice %56 {offsets = [0, 0, 0], sizes = [8, 8, 128], strides = [1, 1, 1]} : vector<8x10x128xf32> to vector<8x8x128xf32>
    %c6 = arith.constant 6 : index
    %c0_14 = arith.constant 0 : index
    %58 = vector.load %arg6[%c6, %c0_14] : memref<9x128xf32, #tpu.memory_space<vmem>>, vector<1x128xf32>
    %59 = vector.shape_cast %58 : vector<1x128xf32> to vector<128xf32>
    %60 = vector.shape_cast %59 : vector<128xf32> to vector<1x1x128xf32>
    %61 = vector.broadcast %60 : vector<1x1x128xf32> to vector<8x8x128xf32>
    %62 = arith.mulf %57, %61 : vector<8x8x128xf32>
    %63 = arith.addf %53, %62 : vector<8x8x128xf32>
    %64 = vector.extract_strided_slice %56 {offsets = [0, 1, 0], sizes = [8, 8, 128], strides = [1, 1, 1]} : vector<8x10x128xf32> to vector<8x8x128xf32>
    %c7 = arith.constant 7 : index
    %c0_15 = arith.constant 0 : index
    %65 = vector.load %arg6[%c7, %c0_15] : memref<9x128xf32, #tpu.memory_space<vmem>>, vector<1x128xf32>
    %66 = vector.shape_cast %65 : vector<1x128xf32> to vector<128xf32>
    %67 = vector.shape_cast %66 : vector<128xf32> to vector<1x1x128xf32>
    %68 = vector.broadcast %67 : vector<1x1x128xf32> to vector<8x8x128xf32>
    %69 = arith.mulf %64, %68 : vector<8x8x128xf32>
    %70 = arith.addf %63, %69 : vector<8x8x128xf32>
    %71 = vector.extract_strided_slice %56 {offsets = [0, 2, 0], sizes = [8, 8, 128], strides = [1, 1, 1]} : vector<8x10x128xf32> to vector<8x8x128xf32>
    %c8 = arith.constant 8 : index
    %c0_16 = arith.constant 0 : index
    %72 = vector.load %arg6[%c8, %c0_16] : memref<9x128xf32, #tpu.memory_space<vmem>>, vector<1x128xf32>
    %73 = vector.shape_cast %72 : vector<1x128xf32> to vector<128xf32>
    %74 = vector.shape_cast %73 : vector<128xf32> to vector<1x1x128xf32>
    %75 = vector.broadcast %74 : vector<1x1x128xf32> to vector<8x8x128xf32>
    %76 = arith.mulf %71, %75 : vector<8x8x128xf32>
    %77 = arith.addf %70, %76 : vector<8x8x128xf32>
    %c0_17 = arith.constant 0 : index
    %c0_18 = arith.constant 0 : index
    %78 = vector.load %arg7[%c0_17, %c0_18] : memref<1x128xf32, #tpu.memory_space<vmem>>, vector<1x128xf32>
    %79 = vector.shape_cast %78 : vector<1x128xf32> to vector<1x1x128xf32>
    %80 = vector.broadcast %79 : vector<1x1x128xf32> to vector<8x8x128xf32>
    %81 = arith.mulf %77, %80 : vector<8x8x128xf32>
    %c0_19 = arith.constant 0 : index
    %c0_20 = arith.constant 0 : index
    %82 = vector.load %arg8[%c0_19, %c0_20] : memref<1x128xf32, #tpu.memory_space<vmem>>, vector<1x128xf32>
    %83 = vector.shape_cast %82 : vector<1x128xf32> to vector<1x1x128xf32>
    %84 = vector.broadcast %83 : vector<1x1x128xf32> to vector<8x8x128xf32>
    %85 = arith.addf %81, %84 : vector<8x8x128xf32>
    %86 = arith.negf %85 : vector<8x8x128xf32>
    %87 = math.exp %86 : vector<8x8x128xf32>
    %cst_21 = arith.constant 1.000000e+00 : f32
    %88 = vector.broadcast %cst_21 : f32 to vector<8x8x128xf32>
    %89 = arith.addf %88, %87 : vector<8x8x128xf32>
    %90 = arith.divf %88, %89 : vector<8x8x128xf32>
    %91 = arith.mulf %85, %90 : vector<8x8x128xf32>
    %92 = arith.truncf %91 : vector<8x8x128xf32> to vector<8x8x128xbf16>
    %c0_22 = arith.constant 0 : index
    %c0_23 = arith.constant 0 : index
    %c0_24 = arith.constant 0 : index
    %c0_25 = arith.constant 0 : index
    %93 = vector.load %arg9[%c0_22, %c0_23, %c0_24, %c0_25] : memref<1x8x8x128xbf16, #tpu.memory_space<vmem>>, vector<1x8x8x128xbf16>
    %94 = vector.shape_cast %93 : vector<1x8x8x128xbf16> to vector<8x8x128xbf16>
    %95 = vector.shape_cast %92 : vector<8x8x128xbf16> to vector<1x8x8x128xbf16>
    tpu.vector_store %arg9[%c0_22, %c0_23, %c0_24, %c0_25], %95 {strides = array<i32>} : memref<1x8x8x128xbf16, #tpu.memory_space<vmem>>, vector<1x8x8x128xbf16>,
    %c0_26 = arith.constant 0 : index
    %c0_27 = arith.constant 0 : index
    %c0_28 = arith.constant 0 : index
    %96 = vector.load %arg10[%c0_26, %c0_27, %c0_28] : memref<1x1x128xf32, #tpu.memory_space<vmem>>, vector<1x1x128xf32>
    %cst_29 = arith.constant dense<0.000000e+00> : vector<128xf32>
    %97 = vector.multi_reduction <add>, %91, %cst_29 [0, 1] : vector<8x8x128xf32> to vector<128xf32>
    %cst_30 = arith.constant 1.562500e-02 : f32
    %98 = vector.broadcast %cst_30 : f32 to vector<128xf32>
    %99 = arith.mulf %97, %98 : vector<128xf32>
    %100 = vector.shape_cast %99 : vector<128xf32> to vector<1x1x128xf32>
    %101 = arith.addf %96, %100 : vector<1x1x128xf32>
    %c0_31 = arith.constant 0 : index
    %c0_32 = arith.constant 0 : index
    %c0_33 = arith.constant 0 : index
    %102 = vector.load %arg10[%c0_31, %c0_32, %c0_33] : memref<1x1x128xf32, #tpu.memory_space<vmem>>, vector<1x1x128xf32>
    tpu.vector_store %arg10[%c0_31, %c0_32, %c0_33], %101 {strides = array<i32>} : memref<1x1x128xf32, #tpu.memory_space<vmem>>, vector<1x1x128xf32>,
    return
  }
  func.func @transform_0(%arg0: i32, %arg1: i32) -> (i32, i32, i32, i32) {
    %c0_i32 = arith.constant 0 : i32
    %c0_i32_0 = arith.constant 0 : i32
    %c0_i32_1 = arith.constant 0 : i32
    %c0_i32_2 = arith.constant 0 : i32
    return %arg0, %c0_i32, %c0_i32_0, %c0_i32_1 : i32, i32, i32, i32
  }
  func.func @transform_1(%arg0: i32, %arg1: i32) -> (i32, i32) {
    %c0_i32 = arith.constant 0 : i32
    %c0_i32_0 = arith.constant 0 : i32
    %c0_i32_1 = arith.constant 0 : i32
    return %c0_i32, %c0_i32_0 : i32, i32
  }
  func.func @transform_2(%arg0: i32, %arg1: i32) -> (i32, i32) {
    %c0_i32 = arith.constant 0 : i32
    %c0_i32_0 = arith.constant 0 : i32
    %c0_i32_1 = arith.constant 0 : i32
    return %c0_i32, %c0_i32_0 : i32, i32
  }
  func.func @transform_3(%arg0: i32, %arg1: i32) -> (i32, i32) {
    %c0_i32 = arith.constant 0 : i32
    %c0_i32_0 = arith.constant 0 : i32
    %c0_i32_1 = arith.constant 0 : i32
    return %c0_i32, %c0_i32_0 : i32, i32
  }
  func.func @transform_4(%arg0: i32, %arg1: i32) -> (i32, i32) {
    %c0_i32 = arith.constant 0 : i32
    %c0_i32_0 = arith.constant 0 : i32
    %c0_i32_1 = arith.constant 0 : i32
    return %c0_i32, %c0_i32_0 : i32, i32
  }
  func.func @transform_5(%arg0: i32, %arg1: i32) -> (i32, i32) {
    %c0_i32 = arith.constant 0 : i32
    %c0_i32_0 = arith.constant 0 : i32
    %c0_i32_1 = arith.constant 0 : i32
    return %c0_i32, %c0_i32_0 : i32, i32
  }
  func.func @transform_6(%arg0: i32, %arg1: i32) -> (i32, i32) {
    %c0_i32 = arith.constant 0 : i32
    %c0_i32_0 = arith.constant 0 : i32
    %c0_i32_1 = arith.constant 0 : i32
    return %c0_i32, %c0_i32_0 : i32, i32
  }
  func.func @transform_7(%arg0: i32, %arg1: i32) -> (i32, i32, i32, i32) {
    %c0_i32 = arith.constant 0 : i32
    %c0_i32_0 = arith.constant 0 : i32
    %c0_i32_1 = arith.constant 0 : i32
    return %arg0, %arg1, %c0_i32, %c0_i32_0 : i32, i32, i32, i32
  }
  func.func @transform_8(%arg0: i32, %arg1: i32) -> (i32, i32, i32) {
    %c0_i32 = arith.constant 0 : i32
    %c0_i32_0 = arith.constant 0 : i32
    %c0_i32_1 = arith.constant 0 : i32
    return %arg0, %c0_i32, %c0_i32_0 : i32, i32, i32
  }
}

module attributes {stable_mosaic.version = 11 : i64} {
  func.func @_proj_kernel(%arg0: i32, %arg1: i32, %arg2: memref<1x64x128xbf16, #tpu.memory_space<vmem>>, %arg3: memref<1x1x128xf32, #tpu.memory_space<vmem>>, %arg4: memref<128x128xbf16, #tpu.memory_space<vmem>>, %arg5: memref<1x128xf32, #tpu.memory_space<vmem>>, %arg6: memref<128x128xbf16, #tpu.memory_space<vmem>>, %arg7: memref<1x128xf32, #tpu.memory_space<vmem>>, %arg8: memref<128x128xbf16, #tpu.memory_space<vmem>>, %arg9: memref<1x128xf32, #tpu.memory_space<vmem>>, %arg10: memref<1x128xf32, #tpu.memory_space<vmem>>, %arg11: memref<1x64x128xbf16, #tpu.memory_space<vmem>>, %arg12: memref<1x64x128xbf16, #tpu.memory_space<vmem>>, %arg13: memref<1x128xf32, #tpu.memory_space<vmem>>) attributes {dimension_semantics = [#tpu.dimension_semantics<parallel>, #tpu.dimension_semantics<arbitrary>], iteration_bounds = array<i64: 2, 1>, scalar_prefetch = 0 : i64, scratch_operands = 1 : i64, tpu.core_type = #tpu.core_type<tc>, window_params = [{transform_indices = @transform_0, window_bounds = array<i64: 1, 64, 128>}, {transform_indices = @transform_1, window_bounds = array<i64: 1, 1, 128>}, {pipeline_mode = #tpu.pipeline_mode<synchronous>, transform_indices = @transform_2, window_bounds = array<i64: 128, 128>}, {pipeline_mode = #tpu.pipeline_mode<synchronous>, transform_indices = @transform_3, window_bounds = array<i64: 1, 128>}, {pipeline_mode = #tpu.pipeline_mode<synchronous>, transform_indices = @transform_4, window_bounds = array<i64: 128, 128>}, {pipeline_mode = #tpu.pipeline_mode<synchronous>, transform_indices = @transform_5, window_bounds = array<i64: 1, 128>}, {pipeline_mode = #tpu.pipeline_mode<synchronous>, transform_indices = @transform_6, window_bounds = array<i64: 128, 128>}, {pipeline_mode = #tpu.pipeline_mode<synchronous>, transform_indices = @transform_7, window_bounds = array<i64: 1, 128>}, {pipeline_mode = #tpu.pipeline_mode<synchronous>, transform_indices = @transform_8, window_bounds = array<i64: 1, 128>}, {transform_indices = @transform_9, window_bounds = array<i64: 1, 64, 128>}, {transform_indices = @transform_10, window_bounds = array<i64: 1, 64, 128>}]} {
    %c0_i32 = arith.constant 0 : i32
    %0 = arith.cmpi eq, %arg1, %c0_i32 : i32
    %1 = arith.extui %0 : i1 to i32
    %c0_i32_0 = arith.constant 0 : i32
    %2 = arith.cmpi ne, %1, %c0_i32_0 : i32
    scf.if %2 {
      %c0_17 = arith.constant 0 : index
      %c0_18 = arith.constant 0 : index
      %c0_19 = arith.constant 0 : index
      %26 = vector.load %arg3[%c0_17, %c0_18, %c0_19] : memref<1x1x128xf32, #tpu.memory_space<vmem>>, vector<1x1x128xf32>
      %27 = vector.shape_cast %26 : vector<1x1x128xf32> to vector<1x128xf32>
      %28 = arith.truncf %27 : vector<1x128xf32> to vector<1x128xbf16>
      %c0_20 = arith.constant 0 : index
      %c0_21 = arith.constant 0 : index
      %29 = vector.load %arg4[%c0_20, %c0_21] : memref<128x128xbf16, #tpu.memory_space<vmem>>, vector<128x128xbf16>
      %cst_22 = arith.constant dense<0.000000e+00> : vector<1x128xf32>
      %30 = tpu.matmul %28, %29, %cst_22 {dimension_numbers = #tpu.dot_dimension_numbers<[1], [0], [0], [1], [0, 0, 1, 1], [], []>} : vector<1x128xbf16>, vector<128x128xbf16>, vector<1x128xf32> -> vector<1x128xf32>
      %c0_23 = arith.constant 0 : index
      %c0_24 = arith.constant 0 : index
      %31 = vector.load %arg5[%c0_23, %c0_24] : memref<1x128xf32, #tpu.memory_space<vmem>>, vector<1x128xf32>
      %32 = arith.addf %30, %31 : vector<1x128xf32>
      %33 = arith.negf %32 : vector<1x128xf32>
      %34 = math.exp %33 : vector<1x128xf32>
      %cst_25 = arith.constant 1.000000e+00 : f32
      %35 = vector.broadcast %cst_25 : f32 to vector<1x128xf32>
      %36 = arith.addf %35, %34 : vector<1x128xf32>
      %37 = arith.divf %35, %36 : vector<1x128xf32>
      %38 = arith.mulf %32, %37 : vector<1x128xf32>
      %39 = arith.truncf %38 : vector<1x128xf32> to vector<1x128xbf16>
      %c0_26 = arith.constant 0 : index
      %c0_27 = arith.constant 0 : index
      %40 = vector.load %arg6[%c0_26, %c0_27] : memref<128x128xbf16, #tpu.memory_space<vmem>>, vector<128x128xbf16>
      %cst_28 = arith.constant dense<0.000000e+00> : vector<1x128xf32>
      %41 = tpu.matmul %39, %40, %cst_28 {dimension_numbers = #tpu.dot_dimension_numbers<[1], [0], [0], [1], [0, 0, 1, 1], [], []>} : vector<1x128xbf16>, vector<128x128xbf16>, vector<1x128xf32> -> vector<1x128xf32>
      %c0_29 = arith.constant 0 : index
      %c0_30 = arith.constant 0 : index
      %42 = vector.load %arg7[%c0_29, %c0_30] : memref<1x128xf32, #tpu.memory_space<vmem>>, vector<1x128xf32>
      %43 = arith.addf %41, %42 : vector<1x128xf32>
      %44 = arith.negf %43 : vector<1x128xf32>
      %45 = math.exp %44 : vector<1x128xf32>
      %cst_31 = arith.constant 1.000000e+00 : f32
      %46 = vector.broadcast %cst_31 : f32 to vector<1x128xf32>
      %47 = arith.addf %46, %45 : vector<1x128xf32>
      %48 = arith.divf %46, %47 : vector<1x128xf32>
      %c0_32 = arith.constant 0 : index
      %c0_33 = arith.constant 0 : index
      %49 = vector.load %arg13[%c0_32, %c0_33] : memref<1x128xf32, #tpu.memory_space<vmem>>, vector<1x128xf32>
      tpu.vector_store %arg13[%c0_32, %c0_33], %48 {strides = array<i32>} : memref<1x128xf32, #tpu.memory_space<vmem>>, vector<1x128xf32>,
    } else {
    }
    %c0 = arith.constant 0 : index
    %c0_1 = arith.constant 0 : index
    %c0_2 = arith.constant 0 : index
    %3 = vector.load %arg2[%c0, %c0_1, %c0_2] : memref<1x64x128xbf16, #tpu.memory_space<vmem>>, vector<1x64x128xbf16>
    %4 = vector.shape_cast %3 : vector<1x64x128xbf16> to vector<64x128xbf16>
    %5 = arith.extf %4 : vector<64x128xbf16> to vector<64x128xf32>
    %c0_3 = arith.constant 0 : index
    %c0_4 = arith.constant 0 : index
    %6 = vector.load %arg13[%c0_3, %c0_4] : memref<1x128xf32, #tpu.memory_space<vmem>>, vector<1x128xf32>
    %7 = vector.broadcast %6 : vector<1x128xf32> to vector<64x128xf32>
    %8 = arith.mulf %5, %7 : vector<64x128xf32>
    %9 = arith.truncf %8 : vector<64x128xf32> to vector<64x128xbf16>
    %c0_5 = arith.constant 0 : index
    %c0_6 = arith.constant 0 : index
    %10 = vector.load %arg8[%c0_5, %c0_6] : memref<128x128xbf16, #tpu.memory_space<vmem>>, vector<128x128xbf16>
    %cst = arith.constant dense<0.000000e+00> : vector<64x128xf32>
    %11 = tpu.matmul %9, %10, %cst {dimension_numbers = #tpu.dot_dimension_numbers<[1], [0], [0], [1], [0, 0, 1, 1], [], []>} : vector<64x128xbf16>, vector<128x128xbf16>, vector<64x128xf32> -> vector<64x128xf32>
    %c0_7 = arith.constant 0 : index
    %c0_8 = arith.constant 0 : index
    %12 = vector.load %arg9[%c0_7, %c0_8] : memref<1x128xf32, #tpu.memory_space<vmem>>, vector<1x128xf32>
    %13 = vector.broadcast %12 : vector<1x128xf32> to vector<64x128xf32>
    %14 = arith.mulf %11, %13 : vector<64x128xf32>
    %c0_9 = arith.constant 0 : index
    %c0_10 = arith.constant 0 : index
    %15 = vector.load %arg10[%c0_9, %c0_10] : memref<1x128xf32, #tpu.memory_space<vmem>>, vector<1x128xf32>
    %16 = vector.broadcast %15 : vector<1x128xf32> to vector<64x128xf32>
    %17 = arith.addf %14, %16 : vector<64x128xf32>
    %c0_11 = arith.constant 0 : index
    %c0_12 = arith.constant 0 : index
    %c0_13 = arith.constant 0 : index
    %18 = vector.load %arg11[%c0_11, %c0_12, %c0_13] : memref<1x64x128xbf16, #tpu.memory_space<vmem>>, vector<1x64x128xbf16>
    %19 = vector.shape_cast %18 : vector<1x64x128xbf16> to vector<64x128xbf16>
    %20 = arith.extf %19 : vector<64x128xbf16> to vector<64x128xf32>
    %21 = arith.addf %17, %20 : vector<64x128xf32>
    %22 = arith.truncf %21 : vector<64x128xf32> to vector<64x128xbf16>
    %c0_14 = arith.constant 0 : index
    %c0_15 = arith.constant 0 : index
    %c0_16 = arith.constant 0 : index
    %23 = vector.load %arg12[%c0_14, %c0_15, %c0_16] : memref<1x64x128xbf16, #tpu.memory_space<vmem>>, vector<1x64x128xbf16>
    %24 = vector.shape_cast %23 : vector<1x64x128xbf16> to vector<64x128xbf16>
    %25 = vector.shape_cast %22 : vector<64x128xbf16> to vector<1x64x128xbf16>
    tpu.vector_store %arg12[%c0_14, %c0_15, %c0_16], %25 {strides = array<i32>} : memref<1x64x128xbf16, #tpu.memory_space<vmem>>, vector<1x64x128xbf16>,
    return
  }
  func.func @transform_0(%arg0: i32, %arg1: i32) -> (i32, i32, i32) {
    %c0_i32 = arith.constant 0 : i32
    %c0_i32_0 = arith.constant 0 : i32
    return %arg0, %arg1, %c0_i32 : i32, i32, i32
  }
  func.func @transform_1(%arg0: i32, %arg1: i32) -> (i32, i32, i32) {
    %c0_i32 = arith.constant 0 : i32
    %c0_i32_0 = arith.constant 0 : i32
    %c0_i32_1 = arith.constant 0 : i32
    return %arg0, %c0_i32, %c0_i32_0 : i32, i32, i32
  }
  func.func @transform_2(%arg0: i32, %arg1: i32) -> (i32, i32) {
    %c0_i32 = arith.constant 0 : i32
    %c0_i32_0 = arith.constant 0 : i32
    %c0_i32_1 = arith.constant 0 : i32
    return %c0_i32, %c0_i32_0 : i32, i32
  }
  func.func @transform_3(%arg0: i32, %arg1: i32) -> (i32, i32) {
    %c0_i32 = arith.constant 0 : i32
    %c0_i32_0 = arith.constant 0 : i32
    %c0_i32_1 = arith.constant 0 : i32
    return %c0_i32, %c0_i32_0 : i32, i32
  }
  func.func @transform_4(%arg0: i32, %arg1: i32) -> (i32, i32) {
    %c0_i32 = arith.constant 0 : i32
    %c0_i32_0 = arith.constant 0 : i32
    %c0_i32_1 = arith.constant 0 : i32
    return %c0_i32, %c0_i32_0 : i32, i32
  }
  func.func @transform_5(%arg0: i32, %arg1: i32) -> (i32, i32) {
    %c0_i32 = arith.constant 0 : i32
    %c0_i32_0 = arith.constant 0 : i32
    %c0_i32_1 = arith.constant 0 : i32
    return %c0_i32, %c0_i32_0 : i32, i32
  }
  func.func @transform_6(%arg0: i32, %arg1: i32) -> (i32, i32) {
    %c0_i32 = arith.constant 0 : i32
    %c0_i32_0 = arith.constant 0 : i32
    %c0_i32_1 = arith.constant 0 : i32
    return %c0_i32, %c0_i32_0 : i32, i32
  }
  func.func @transform_7(%arg0: i32, %arg1: i32) -> (i32, i32) {
    %c0_i32 = arith.constant 0 : i32
    %c0_i32_0 = arith.constant 0 : i32
    %c0_i32_1 = arith.constant 0 : i32
    return %c0_i32, %c0_i32_0 : i32, i32
  }
  func.func @transform_8(%arg0: i32, %arg1: i32) -> (i32, i32) {
    %c0_i32 = arith.constant 0 : i32
    %c0_i32_0 = arith.constant 0 : i32
    %c0_i32_1 = arith.constant 0 : i32
    return %c0_i32, %c0_i32_0 : i32, i32
  }
  func.func @transform_9(%arg0: i32, %arg1: i32) -> (i32, i32, i32) {
    %c0_i32 = arith.constant 0 : i32
    %c0_i32_0 = arith.constant 0 : i32
    return %arg0, %arg1, %c0_i32 : i32, i32, i32
  }
  func.func @transform_10(%arg0: i32, %arg1: i32) -> (i32, i32, i32) {
    %c0_i32 = arith.constant 0 : i32
    %c0_i32_0 = arith.constant 0 : i32
    return %arg0, %arg1, %c0_i32 : i32, i32, i32
  }
}

module attributes {stable_mosaic.version = 11 : i64} {
  func.func @_head_kernel(%arg0: i32, %arg1: memref<1x64x128xbf16, #tpu.memory_space<vmem>>, %arg2: memref<128x128xbf16, #tpu.memory_space<vmem>>, %arg3: memref<1x128xf32, #tpu.memory_space<vmem>>, %arg4: memref<1x128xf32, #tpu.memory_space<vmem>>, %arg5: memref<128x128xbf16, #tpu.memory_space<vmem>>, %arg6: memref<1x128xf32, #tpu.memory_space<vmem>>, %arg7: memref<1x1x128xf32, #tpu.memory_space<vmem>>) attributes {dimension_semantics = [#tpu.dimension_semantics<parallel>], iteration_bounds = array<i64: 2>, scalar_prefetch = 0 : i64, scratch_operands = 0 : i64, tpu.core_type = #tpu.core_type<tc>, window_params = [{transform_indices = @transform_0, window_bounds = array<i64: 1, 64, 128>}, {pipeline_mode = #tpu.pipeline_mode<synchronous>, transform_indices = @transform_1, window_bounds = array<i64: 128, 128>}, {pipeline_mode = #tpu.pipeline_mode<synchronous>, transform_indices = @transform_2, window_bounds = array<i64: 1, 128>}, {pipeline_mode = #tpu.pipeline_mode<synchronous>, transform_indices = @transform_3, window_bounds = array<i64: 1, 128>}, {pipeline_mode = #tpu.pipeline_mode<synchronous>, transform_indices = @transform_4, window_bounds = array<i64: 128, 128>}, {pipeline_mode = #tpu.pipeline_mode<synchronous>, transform_indices = @transform_5, window_bounds = array<i64: 1, 128>}, {transform_indices = @transform_6, window_bounds = array<i64: 1, 1, 128>}]} {
    %c0 = arith.constant 0 : index
    %c0_0 = arith.constant 0 : index
    %c0_1 = arith.constant 0 : index
    %0 = vector.load %arg1[%c0, %c0_0, %c0_1] : memref<1x64x128xbf16, #tpu.memory_space<vmem>>, vector<1x64x128xbf16>
    %1 = vector.shape_cast %0 : vector<1x64x128xbf16> to vector<64x128xbf16>
    %c0_2 = arith.constant 0 : index
    %c0_3 = arith.constant 0 : index
    %2 = vector.load %arg2[%c0_2, %c0_3] : memref<128x128xbf16, #tpu.memory_space<vmem>>, vector<128x128xbf16>
    %cst = arith.constant dense<0.000000e+00> : vector<64x128xf32>
    %3 = tpu.matmul %1, %2, %cst {dimension_numbers = #tpu.dot_dimension_numbers<[1], [0], [0], [1], [0, 0, 1, 1], [], []>} : vector<64x128xbf16>, vector<128x128xbf16>, vector<64x128xf32> -> vector<64x128xf32>
    %c0_4 = arith.constant 0 : index
    %c0_5 = arith.constant 0 : index
    %4 = vector.load %arg3[%c0_4, %c0_5] : memref<1x128xf32, #tpu.memory_space<vmem>>, vector<1x128xf32>
    %5 = vector.broadcast %4 : vector<1x128xf32> to vector<64x128xf32>
    %6 = arith.mulf %3, %5 : vector<64x128xf32>
    %c0_6 = arith.constant 0 : index
    %c0_7 = arith.constant 0 : index
    %7 = vector.load %arg4[%c0_6, %c0_7] : memref<1x128xf32, #tpu.memory_space<vmem>>, vector<1x128xf32>
    %8 = vector.broadcast %7 : vector<1x128xf32> to vector<64x128xf32>
    %9 = arith.addf %6, %8 : vector<64x128xf32>
    %10 = arith.negf %9 : vector<64x128xf32>
    %11 = math.exp %10 : vector<64x128xf32>
    %cst_8 = arith.constant 1.000000e+00 : f32
    %12 = vector.broadcast %cst_8 : f32 to vector<64x128xf32>
    %13 = arith.addf %12, %11 : vector<64x128xf32>
    %14 = arith.divf %12, %13 : vector<64x128xf32>
    %15 = arith.mulf %9, %14 : vector<64x128xf32>
    %cst_9 = arith.constant dense<0.000000e+00> : vector<128xf32>
    %16 = vector.multi_reduction <add>, %15, %cst_9 [0] : vector<64x128xf32> to vector<128xf32>
    %17 = vector.shape_cast %16 : vector<128xf32> to vector<1x128xf32>
    %cst_10 = arith.constant 1.562500e-02 : f32
    %18 = vector.broadcast %cst_10 : f32 to vector<1x128xf32>
    %19 = arith.mulf %17, %18 : vector<1x128xf32>
    %20 = arith.truncf %19 : vector<1x128xf32> to vector<1x128xbf16>
    %c0_11 = arith.constant 0 : index
    %c0_12 = arith.constant 0 : index
    %21 = vector.load %arg5[%c0_11, %c0_12] : memref<128x128xbf16, #tpu.memory_space<vmem>>, vector<128x128xbf16>
    %cst_13 = arith.constant dense<0.000000e+00> : vector<1x128xf32>
    %22 = tpu.matmul %20, %21, %cst_13 {dimension_numbers = #tpu.dot_dimension_numbers<[1], [0], [0], [1], [0, 0, 1, 1], [], []>} : vector<1x128xbf16>, vector<128x128xbf16>, vector<1x128xf32> -> vector<1x128xf32>
    %c0_14 = arith.constant 0 : index
    %c0_15 = arith.constant 0 : index
    %23 = vector.load %arg6[%c0_14, %c0_15] : memref<1x128xf32, #tpu.memory_space<vmem>>, vector<1x128xf32>
    %24 = arith.addf %22, %23 : vector<1x128xf32>
    %c0_16 = arith.constant 0 : index
    %c0_17 = arith.constant 0 : index
    %c0_18 = arith.constant 0 : index
    %25 = vector.load %arg7[%c0_16, %c0_17, %c0_18] : memref<1x1x128xf32, #tpu.memory_space<vmem>>, vector<1x1x128xf32>
    %26 = vector.shape_cast %25 : vector<1x1x128xf32> to vector<1x128xf32>
    %27 = vector.shape_cast %24 : vector<1x128xf32> to vector<1x1x128xf32>
    tpu.vector_store %arg7[%c0_16, %c0_17, %c0_18], %27 {strides = array<i32>} : memref<1x1x128xf32, #tpu.memory_space<vmem>>, vector<1x1x128xf32>,
    return
  }
  func.func @transform_0(%arg0: i32) -> (i32, i32, i32) {
    %c0_i32 = arith.constant 0 : i32
    %c0_i32_0 = arith.constant 0 : i32
    %c0_i32_1 = arith.constant 0 : i32
    return %arg0, %c0_i32, %c0_i32_0 : i32, i32, i32
  }
  func.func @transform_1(%arg0: i32) -> (i32, i32) {
    %c0_i32 = arith.constant 0 : i32
    %c0_i32_0 = arith.constant 0 : i32
    %c0_i32_1 = arith.constant 0 : i32
    return %c0_i32, %c0_i32_0 : i32, i32
  }
  func.func @transform_2(%arg0: i32) -> (i32, i32) {
    %c0_i32 = arith.constant 0 : i32
    %c0_i32_0 = arith.constant 0 : i32
    %c0_i32_1 = arith.constant 0 : i32
    return %c0_i32, %c0_i32_0 : i32, i32
  }
  func.func @transform_3(%arg0: i32) -> (i32, i32) {
    %c0_i32 = arith.constant 0 : i32
    %c0_i32_0 = arith.constant 0 : i32
    %c0_i32_1 = arith.constant 0 : i32
    return %c0_i32, %c0_i32_0 : i32, i32
  }
  func.func @transform_4(%arg0: i32) -> (i32, i32) {
    %c0_i32 = arith.constant 0 : i32
    %c0_i32_0 = arith.constant 0 : i32
    %c0_i32_1 = arith.constant 0 : i32
    return %c0_i32, %c0_i32_0 : i32, i32
  }
  func.func @transform_5(%arg0: i32) -> (i32, i32) {
    %c0_i32 = arith.constant 0 : i32
    %c0_i32_0 = arith.constant 0 : i32
    %c0_i32_1 = arith.constant 0 : i32
    return %c0_i32, %c0_i32_0 : i32, i32
  }
  func.func @transform_6(%arg0: i32) -> (i32, i32, i32) {
    %c0_i32 = arith.constant 0 : i32
    %c0_i32_0 = arith.constant 0 : i32
    %c0_i32_1 = arith.constant 0 : i32
    return %arg0, %c0_i32, %c0_i32_0 : i32, i32, i32
  }
}

</mosaic_0001>

<llo_original>
// kernel: _lambda_.6
$region0: #{_lambda_.6}
  #allocation0 [shape = 'u32[]', space=smem, size = 0x4, offset = 0x4, fixed_abs, tag = 'smem constant byte address 0x4 - core index']
  #allocation1 [shape = 'u32[72,128]{1,0:T(1,128)}', space=vmem, size = 0x9000, scoped, tag = 'internal scratch']
  %s0 = inlined_call_operand.vmem [shape: bf16[128,27], index: 0, kind: input, shape index: {}]
  %s1 = inlined_call_operand.vmem [shape: bf16[27,128], index: 1, kind: input, shape index: {}]
  %s2 = inlined_call_operand.vmem [shape: f32[1,128], index: 2, kind: input, shape index: {}]
  %s3 = inlined_call_operand.vmem [shape: f32[1,128], index: 3, kind: input, shape index: {}]
  %s4 = inlined_call_operand.vmem [shape: bf16[128,128], index: 4, kind: output, shape index: {}]
  %s5 = sld [smem:[#allocation0]]
  $region26: #{_lambda_.6} parent=0
    _
  %s7 = ssub.s32 1, %s5
  %s8 = scalar_select 0, %s7, %s5
  // Predicated region
  $region2: #{_lambda_.6} parent=0 // pred_check
    _
  $region3: #{_lambda_.6} parent=0 // pred_check_branch
    %10 = sbr.rel (0) target = $region5
  $region4: #{_lambda_.6} parent=0 // pred_region
    _
  $region5: #{_lambda_.6} parent=0 // pred_fallthru
    _
  // Predicated region
  $region6: #{_lambda_.6} parent=0 // pred_check
    _
  $region7: #{_lambda_.6} parent=0 // pred_check_branch
    %12 = sbr.rel (0) target = $region9
  $region8: #{_lambda_.6} parent=0 // pred_region
    _
  $region9: #{_lambda_.6} parent=0 // pred_fallthru
    _
  // Predicated region
  $region10: #{_lambda_.6} parent=0 // pred_check
    _
  $region11: #{_lambda_.6} parent=0 // pred_check_branch
    %14 = sbr.rel (0) target = $region13
  $region12: #{_lambda_.6} parent=0 // pred_region
    _
  $region13: #{_lambda_.6} parent=0 // pred_fallthru
    _
  // Predicated region
  $region14: #{_lambda_.6} parent=0 // pred_check
    _
  $region15: #{_lambda_.6} parent=0 // pred_check_branch
    %16 = sbr.rel (0) target = $region17
  $region16: #{_lambda_.6} parent=0 // pred_region
    _
  $region17: #{_lambda_.6} parent=0 // pred_fallthru
    _
  %v18 = vld [vmem:[%s0] sm:$0xf]
  %v19 = vld [vmem:[%s0 + $0x4] sm:$0xf]
  %v20 = vld [vmem:[%s0 + $0x8] sm:$0xf]
  %v21 = vld [vmem:[%s0 + $0xc] sm:$0xf]
  %v22 = vld [vmem:[%s0 + $0x10] sm:$0xf]
  %v23 = vld [vmem:[%s0 + $0x14] sm:$0xf]
  %v24 = vld [vmem:[%s0 + $0x18] sm:$0xf]
  %v25 = vld [vmem:[%s0 + $0x1c] sm:$0xf]
  %v26 = vld [vmem:[%s0 + $0x20] sm:$0xf]
  %v27 = vld [vmem:[%s0 + $0x24] sm:$0xf]
  %v28 = vld [vmem:[%s0 + $0x28] sm:$0xf]
  %v29 = vld [vmem:[%s0 + $0x2c] sm:$0xf]
  %v30 = vld [vmem:[%s0 + $0x30] sm:$0xf]
  %v31 = vld [vmem:[%s0 + $0x34] sm:$0xf]
  %v32 = vld [vmem:[%s0 + $0x38] sm:$0xf]
  %v33 = vld [vmem:[%s0 + $0x3c] sm:$0xf]
  %v34 = vld [vmem:[%s1] sm:$0xf]
  %v35 = vld [vmem:[%s1 + $0x4] sm:$0xf]
  %v36 = vld [vmem:[%s1 + $0x8] sm:$0xf]
  %v37 = vld [vmem:[%s1 + $0xc] sm:$0x3]
  %v54 = vunpack.c.l.b16 %v18
  %v55 = vunpack.c.l.b16 %v19
  %v56 = vunpack.c.l.b16 %v20
  %v57 = vunpack.c.l.b16 %v21
  %v58 = vunpack.c.l.b16 %v22
  %v59 = vunpack.c.l.b16 %v23
  %v60 = vunpack.c.l.b16 %v24
  %v61 = vunpack.c.l.b16 %v25
  %v62 = vunpack.c.l.b16 %v26
  %v63 = vunpack.c.l.b16 %v27
  %v64 = vunpack.c.l.b16 %v28
  %v65 = vunpack.c.l.b16 %v29
  %v66 = vunpack.c.l.b16 %v30
  %v67 = vunpack.c.l.b16 %v31
  %v68 = vunpack.c.l.b16 %v32
  %v69 = vunpack.c.l.b16 %v33
  %v70 = vpack.c.b16 %v55, %v54
  %v71 = vpack.c.b16 %v57, %v56
  %v72 = vpack.c.b16 %v59, %v58
  %v73 = vpack.c.b16 %v61, %v60
  %v74 = vpack.c.b16 %v63, %v62
  %v75 = vpack.c.b16 %v65, %v64
  %v76 = vpack.c.b16 %v67, %v66
  %v77 = vpack.c.b16 %v69, %v68
  %v82 = vunpack.c.l.b16 %v34
  %v83 = vunpack.c.l.b16 %v35
  %v84 = vunpack.c.l.b16 %v36
  %v85 = vunpack.c.l.b16 %v37
  %v86 = vpack.c.b16 %v83, %v82
  %v87 = vpack.c.b16 %v85, %v84
  %vm89 = vcmask 220160
  %v91 = vsel %vm89, %v70, 0
  %v94 = vsel %vm89, %v71, 0
  %v97 = vsel %vm89, %v72, 0
  %v100 = vsel %vm89, %v73, 0
  %v103 = vsel %vm89, %v74, 0
  %v106 = vsel %vm89, %v75, 0
  %v109 = vsel %vm89, %v76, 0
  %v112 = vsel %vm89, %v77, 0
  %vm114 = vcmask 1044480
  %vm115 = vcmask 1045504
  %v116 = vsel %vm114, 4294967295, 65535
  %v117 = vsel %vm115, %v116, 0
  %v119 = vand.u32 %v87, %v117
  %121 = vmatpush.bf16.msra.mxu0 0
  %122 = vmatpush.bf16.msra.mxu0 0
  %123 = vmatpush.bf16.msra.mxu0 0
  %124 = vmatpush.bf16.msra.mxu0 0
  %125 = vmatpush.bf16.msra.mxu0 0
  %126 = vmatpush.bf16.msra.mxu0 0
  %127 = vmatpush.bf16.msra.mxu0 %v119
  %128 = vmatpush.bf16.msra.mxu0 %v86
  %129 = vmatmul.bf16.gmra.mxu0 %v91
  %v130 = vpop.f32.mrf.mxu0
  %v131 = vadd.f32 0.0, %v130
  %v132 = vpop.f32.mrf.mxu0
  %v133 = vadd.f32 0.0, %v132
  %134 = vmatmul.bf16.gmra.mxu0 %v94
  %v135 = vpop.f32.mrf.mxu0
  %v136 = vadd.f32 0.0, %v135
  %v137 = vpop.f32.mrf.mxu0
  %v138 = vadd.f32 0.0, %v137
  %139 = vmatmul.bf16.gmra.mxu0 %v97
  %v140 = vpop.f32.mrf.mxu0
  %v141 = vadd.f32 0.0, %v140
  %v142 = vpop.f32.mrf.mxu0
  %v143 = vadd.f32 0.0, %v142
  %144 = vmatmul.bf16.gmra.mxu0 %v100
  %v145 = vpop.f32.mrf.mxu0
  %v146 = vadd.f32 0.0, %v145
  %v147 = vpop.f32.mrf.mxu0
  %v148 = vadd.f32 0.0, %v147
  %149 = vmatmul.bf16.gmra.mxu0 %v103
  %v150 = vpop.f32.mrf.mxu0
  %v151 = vadd.f32 0.0, %v150
  %v152 = vpop.f32.mrf.mxu0
  %v153 = vadd.f32 0.0, %v152
  %154 = vmatmul.bf16.gmra.mxu0 %v106
  %v155 = vpop.f32.mrf.mxu0
  %v156 = vadd.f32 0.0, %v155
  %v157 = vpop.f32.mrf.mxu0
  %v158 = vadd.f32 0.0, %v157
  %159 = vmatmul.bf16.gmra.mxu0 %v109
  %v160 = vpop.f32.mrf.mxu0
  %v161 = vadd.f32 0.0, %v160
  %v162 = vpop.f32.mrf.mxu0
  %v163 = vadd.f32 0.0, %v162
  %164 = vmatmul.bf16.gmra.mxu0 %v112
  %v165 = vpop.f32.mrf.mxu0
  %v166 = vadd.f32 0.0, %v165
  %v167 = vpop.f32.mrf.mxu0
  %v168 = vadd.f32 0.0, %v167
  %169 = vdwg.mxu0
  %v170 = vld [vmem:[%s2] sm:$0x1]
  %v172 = vperm.slane %v170, 0
  %v174 = vmul.f32 %v131, %v172
  %v175 = vmul.f32 %v133, %v172
  %v176 = vmul.f32 %v136, %v172
  %v177 = vmul.f32 %v138, %v172
  %v178 = vmul.f32 %v141, %v172
  %v179 = vmul.f32 %v143, %v172
  %v180 = vmul.f32 %v146, %v172
  %v181 = vmul.f32 %v148, %v172
  %v182 = vmul.f32 %v151, %v172
  %v183 = vmul.f32 %v153, %v172
  %v184 = vmul.f32 %v156, %v172
  %v185 = vmul.f32 %v158, %v172
  %v186 = vmul.f32 %v161, %v172
  %v187 = vmul.f32 %v163, %v172
  %v188 = vmul.f32 %v166, %v172
  %v189 = vmul.f32 %v168, %v172
  %v190 = vld [vmem:[%s3] sm:$0x1]
  %v192 = vperm.slane %v190, 0
  %v194 = vadd.f32 %v174, %v192
  %v195 = vadd.f32 %v175, %v192
  %v196 = vadd.f32 %v176, %v192
  %v197 = vadd.f32 %v177, %v192
  %v198 = vadd.f32 %v178, %v192
  %v199 = vadd.f32 %v179, %v192
  %v200 = vadd.f32 %v180, %v192
  %v201 = vadd.f32 %v181, %v192
  %v202 = vadd.f32 %v182, %v192
  %v203 = vadd.f32 %v183, %v192
  %v204 = vadd.f32 %v184, %v192
  %v205 = vadd.f32 %v185, %v192
  %v206 = vadd.f32 %v186, %v192
  %v207 = vadd.f32 %v187, %v192
  %v208 = vadd.f32 %v188, %v192
  %v209 = vadd.f32 %v189, %v192
  %v210 = vxor.u32 %v194, 2147483648
  %v211 = vxor.u32 %v195, 2147483648
  %v212 = vxor.u32 %v196, 2147483648
  %v213 = vxor.u32 %v197, 2147483648
  %v214 = vxor.u32 %v198, 2147483648
  %v215 = vxor.u32 %v199, 2147483648
  %v216 = vxor.u32 %v200, 2147483648
  %v217 = vxor.u32 %v201, 2147483648
  %v218 = vxor.u32 %v202, 2147483648
  %v219 = vxor.u32 %v203, 2147483648
  %v220 = vxor.u32 %v204, 2147483648
  %v221 = vxor.u32 %v205, 2147483648
  %v222 = vxor.u32 %v206, 2147483648
  %v223 = vxor.u32 %v207, 2147483648
  %v224 = vxor.u32 %v208, 2147483648
  %v225 = vxor.u32 %v209, 2147483648
  %v226 = vmul.f32 %v210, 1.442695
  %v227 = vpow.pop %v226
  %v228 = vmul.f32 %v211, 1.442695
  %v229 = vpow.pop %v228
  %v230 = vmul.f32 %v212, 1.442695
  %v231 = vpow.pop %v230
  %v232 = vmul.f32 %v213, 1.442695
  %v233 = vpow.pop %v232
  %v234 = vmul.f32 %v214, 1.442695
  %v235 = vpow.pop %v234
  %v236 = vmul.f32 %v215, 1.442695
  %v237 = vpow.pop %v236
  %v238 = vmul.f32 %v216, 1.442695
  %v239 = vpow.pop %v238
  %v240 = vmul.f32 %v217, 1.442695
  %v241 = vpow.pop %v240
  %v242 = vmul.f32 %v218, 1.442695
  %v243 = vpow.pop %v242
  %v244 = vmul.f32 %v219, 1.442695
  %v245 = vpow.pop %v244
  %v246 = vmul.f32 %v220, 1.442695
  %v247 = vpow.pop %v246
  %v248 = vmul.f32 %v221, 1.442695
  %v249 = vpow.pop %v248
  %v250 = vmul.f32 %v222, 1.442695
  %v251 = vpow.pop %v250
  %v252 = vmul.f32 %v223, 1.442695
  %v253 = vpow.pop %v252
  %v254 = vmul.f32 %v224, 1.442695
  %v255 = vpow.pop %v254
  %v256 = vmul.f32 %v225, 1.442695
  %v257 = vpow.pop %v256
  %v258 = vadd.f32 %v227, 1.0
  %v259 = vadd.f32 %v229, 1.0
  %v260 = vadd.f32 %v231, 1.0
  %v261 = vadd.f32 %v233, 1.0
  %v262 = vadd.f32 %v235, 1.0
  %v263 = vadd.f32 %v237, 1.0
  %v264 = vadd.f32 %v239, 1.0
  %v265 = vadd.f32 %v241, 1.0
  %v266 = vadd.f32 %v243, 1.0
  %v267 = vadd.f32 %v245, 1.0
  %v268 = vadd.f32 %v247, 1.0
  %v269 = vadd.f32 %v249, 1.0
  %v270 = vadd.f32 %v251, 1.0
  %v271 = vadd.f32 %v253, 1.0
  %v272 = vadd.f32 %v255, 1.0
  %v273 = vadd.f32 %v257, 1.0
  %v274 = vrcp.pop %v258
  %v275 = vmul.f32 %v258, %v274
  %v276 = vsub.f32 1.0, %v275
  %v277 = vmul.f32 %v274, %v276
  %v278 = vadd.f32 %v274, %v277
  %vm279 = vweird.f32 %v258
  %vm280 = vweird.f32 %v274
  %vm281 = vmor %vm279, %vm280
  %v282 = vsel %vm281, %v274, %v278
  %v283 = vand.u32 2147483647, %v258
  %vm284 = vcmp.eq.f32.partialorder %v283, 8.507059e+37
  %v285 = vand.u32 %v258, 2147483648
  %v286 = vor.u32 1.1754944e-38, %v285
  %v287 = vsel %vm284, %v286, %v282
  %v288 = vmul.f32 1.0, %v287
  %v289 = vrcp.pop %v259
  %v290 = vmul.f32 %v259, %v289
  %v291 = vsub.f32 1.0, %v290
  %v292 = vmul.f32 %v289, %v291
  %v293 = vadd.f32 %v289, %v292
  %vm294 = vweird.f32 %v259
  %vm295 = vweird.f32 %v289
  %vm296 = vmor %vm294, %vm295
  %v297 = vsel %vm296, %v289, %v293
  %v298 = vand.u32 2147483647, %v259
  %vm299 = vcmp.eq.f32.partialorder %v298, 8.507059e+37
  %v300 = vand.u32 %v259, 2147483648
  %v301 = vor.u32 1.1754944e-38, %v300
  %v302 = vsel %vm299, %v301, %v297
  %v303 = vmul.f32 1.0, %v302
  %v304 = vrcp.pop %v260
  %v305 = vmul.f32 %v260, %v304
  %v306 = vsub.f32 1.0, %v305
  %v307 = vmul.f32 %v304, %v306
  %v308 = vadd.f32 %v304, %v307
  %vm309 = vweird.f32 %v260
  %vm310 = vweird.f32 %v304
  %vm311 = vmor %vm309, %vm310
  %v312 = vsel %vm311, %v304, %v308
  %v313 = vand.u32 2147483647, %v260
  %vm314 = vcmp.eq.f32.partialorder %v313, 8.507059e+37
  %v315 = vand.u32 %v260, 2147483648
  %v316 = vor.u32 1.1754944e-38, %v315
  %v317 = vsel %vm314, %v316, %v312
  %v318 = vmul.f32 1.0, %v317
  %v319 = vrcp.pop %v261
  %v320 = vmul.f32 %v261, %v319
  %v321 = vsub.f32 1.0, %v320
  %v322 = vmul.f32 %v319, %v321
  %v323 = vadd.f32 %v319, %v322
  %vm324 = vweird.f32 %v261
  %vm325 = vweird.f32 %v319
  %vm326 = vmor %vm324, %vm325
  %v327 = vsel %vm326, %v319, %v323
  %v328 = vand.u32 2147483647, %v261
  %vm329 = vcmp.eq.f32.partialorder %v328, 8.507059e+37
  %v330 = vand.u32 %v261, 2147483648
  %v331 = vor.u32 1.1754944e-38, %v330
  %v332 = vsel %vm329, %v331, %v327
  %v333 = vmul.f32 1.0, %v332
  %v334 = vrcp.pop %v262
  %v335 = vmul.f32 %v262, %v334
  %v336 = vsub.f32 1.0, %v335
  %v337 = vmul.f32 %v334, %v336
  %v338 = vadd.f32 %v334, %v337
  %vm339 = vweird.f32 %v262
  %vm340 = vweird.f32 %v334
  %vm341 = vmor %vm339, %vm340
  %v342 = vsel %vm341, %v334, %v338
  %v343 = vand.u32 2147483647, %v262
  %vm344 = vcmp.eq.f32.partialorder %v343, 8.507059e+37
  %v345 = vand.u32 %v262, 2147483648
  %v346 = vor.u32 1.1754944e-38, %v345
  %v347 = vsel %vm344, %v346, %v342
  %v348 = vmul.f32 1.0, %v347
  %v349 = vrcp.pop %v263
  %v350 = vmul.f32 %v263, %v349
  %v351 = vsub.f32 1.0, %v350
  %v352 = vmul.f32 %v349, %v351
  %v353 = vadd.f32 %v349, %v352
  %vm354 = vweird.f32 %v263
  %vm355 = vweird.f32 %v349
  %vm356 = vmor %vm354, %vm355
  %v357 = vsel %vm356, %v349, %v353
  %v358 = vand.u32 2147483647, %v263
  %vm359 = vcmp.eq.f32.partialorder %v358, 8.507059e+37
  %v360 = vand.u32 %v263, 2147483648
  %v361 = vor.u32 1.1754944e-38, %v360
  %v362 = vsel %vm359, %v361, %v357
  %v363 = vmul.f32 1.0, %v362
  %v364 = vrcp.pop %v264
  %v365 = vmul.f32 %v264, %v364
  %v366 = vsub.f32 1.0, %v365
  %v367 = vmul.f32 %v364, %v366
  %v368 = vadd.f32 %v364, %v367
  %vm369 = vweird.f32 %v264
  %vm370 = vweird.f32 %v364
  %vm371 = vmor %vm369, %vm370
  %v372 = vsel %vm371, %v364, %v368
  %v373 = vand.u32 2147483647, %v264
  %vm374 = vcmp.eq.f32.partialorder %v373, 8.507059e+37
  %v375 = vand.u32 %v264, 2147483648
  %v376 = vor.u32 1.1754944e-38, %v375
  %v377 = vsel %vm374, %v376, %v372
  %v378 = vmul.f32 1.0, %v377
  %v379 = vrcp.pop %v265
  %v380 = vmul.f32 %v265, %v379
  %v381 = vsub.f32 1.0, %v380
  %v382 = vmul.f32 %v379, %v381
  %v383 = vadd.f32 %v379, %v382
  %vm384 = vweird.f32 %v265
  %vm385 = vweird.f32 %v379
  %vm386 = vmor %vm384, %vm385
  %v387 = vsel %vm386, %v379, %v383
  %v388 = vand.u32 2147483647, %v265
  %vm389 = vcmp.eq.f32.partialorder %v388, 8.507059e+37
  %v390 = vand.u32 %v265, 2147483648
  %v391 = vor.u32 1.1754944e-38, %v390
  %v392 = vsel %vm389, %v391, %v387
  %v393 = vmul.f32 1.0, %v392
  %v394 = vrcp.pop %v266
  %v395 = vmul.f32 %v266, %v394
  %v396 = vsub.f32 1.0, %v395
  %v397 = vmul.f32 %v394, %v396
  %v398 = vadd.f32 %v394, %v397
  %vm399 = vweird.f32 %v266
  %vm400 = vweird.f32 %v394
  %vm401 = vmor %vm399, %vm400
  %v402 = vsel %vm401, %v394, %v398
  %v403 = vand.u32 2147483647, %v266
  %vm404 = vcmp.eq.f32.partialorder %v403, 8.507059e+37
  %v405 = vand.u32 %v266, 2147483648
  %v406 = vor.u32 1.1754944e-38, %v405
  %v407 = vsel %vm404, %v406, %v402
  %v408 = vmul.f32 1.0, %v407
  %v409 = vrcp.pop %v267
  %v410 = vmul.f32 %v267, %v409
  %v411 = vsub.f32 1.0, %v410
  %v412 = vmul.f32 %v409, %v411
  %v413 = vadd.f32 %v409, %v412
  %vm414 = vweird.f32 %v267
  %vm415 = vweird.f32 %v409
  %vm416 = vmor %vm414, %vm415
  %v417 = vsel %vm416, %v409, %v413
  %v418 = vand.u32 2147483647, %v267
  %vm419 = vcmp.eq.f32.partialorder %v418, 8.507059e+37
  %v420 = vand.u32 %v267, 2147483648
  %v421 = vor.u32 1.1754944e-38, %v420
  %v422 = vsel %vm419, %v421, %v417
  %v423 = vmul.f32 1.0, %v422
  %v424 = vrcp.pop %v268
  %v425 = vmul.f32 %v268, %v424
  %v426 = vsub.f32 1.0, %v425
  %v427 = vmul.f32 %v424, %v426
  %v428 = vadd.f32 %v424, %v427
  %vm429 = vweird.f32 %v268
  %vm430 = vweird.f32 %v424
  %vm431 = vmor %vm429, %vm430
  %v432 = vsel %vm431, %v424, %v428
  %v433 = vand.u32 2147483647, %v268
  %vm434 = vcmp.eq.f32.partialorder %v433, 8.507059e+37
  %v435 = vand.u32 %v268, 2147483648
  %v436 = vor.u32 1.1754944e-38, %v435
  %v437 = vsel %vm434, %v436, %v432
  %v438 = vmul.f32 1.0, %v437
  %v439 = vrcp.pop %v269
  %v440 = vmul.f32 %v269, %v439
  %v441 = vsub.f32 1.0, %v440
  %v442 = vmul.f32 %v439, %v441
  %v443 = vadd.f32 %v439, %v442
  %vm444 = vweird.f32 %v269
  %vm445 = vweird.f32 %v439
  %vm446 = vmor %vm444, %vm445
  %v447 = vsel %vm446, %v439, %v443
  %v448 = vand.u32 2147483647, %v269
  %vm449 = vcmp.eq.f32.partialorder %v448, 8.507059e+37
  %v450 = vand.u32 %v269, 2147483648
  %v451 = vor.u32 1.1754944e-38, %v450
  %v452 = vsel %vm449, %v451, %v447
  %v453 = vmul.f32 1.0, %v452
  %v454 = vrcp.pop %v270
  %v455 = vmul.f32 %v270, %v454
  %v456 = vsub.f32 1.0, %v455
  %v457 = vmul.f32 %v454, %v456
  %v458 = vadd.f32 %v454, %v457
  %vm459 = vweird.f32 %v270
  %vm460 = vweird.f32 %v454
  %vm461 = vmor %vm459, %vm460
  %v462 = vsel %vm461, %v454, %v458
  %v463 = vand.u32 2147483647, %v270
  %vm464 = vcmp.eq.f32.partialorder %v463, 8.507059e+37
  %v465 = vand.u32 %v270, 2147483648
  %v466 = vor.u32 1.1754944e-38, %v465
  %v467 = vsel %vm464, %v466, %v462
  %v468 = vmul.f32 1.0, %v467
  %v469 = vrcp.pop %v271
  %v470 = vmul.f32 %v271, %v469
  %v471 = vsub.f32 1.0, %v470
  %v472 = vmul.f32 %v469, %v471
  %v473 = vadd.f32 %v469, %v472
  %vm474 = vweird.f32 %v271
  %vm475 = vweird.f32 %v469
  %vm476 = vmor %vm474, %vm475
  %v477 = vsel %vm476, %v469, %v473
  %v478 = vand.u32 2147483647, %v271
  %vm479 = vcmp.eq.f32.partialorder %v478, 8.507059e+37
  %v480 = vand.u32 %v271, 2147483648
  %v481 = vor.u32 1.1754944e-38, %v480
  %v482 = vsel %vm479, %v481, %v477
  %v483 = vmul.f32 1.0, %v482
  %v484 = vrcp.pop %v272
  %v485 = vmul.f32 %v272, %v484
  %v486 = vsub.f32 1.0, %v485
  %v487 = vmul.f32 %v484, %v486
  %v488 = vadd.f32 %v484, %v487
  %vm489 = vweird.f32 %v272
  %vm490 = vweird.f32 %v484
  %vm491 = vmor %vm489, %vm490
  %v492 = vsel %vm491, %v484, %v488
  %v493 = vand.u32 2147483647, %v272
  %vm494 = vcmp.eq.f32.partialorder %v493, 8.507059e+37
  %v495 = vand.u32 %v272, 2147483648
  %v496 = vor.u32 1.1754944e-38, %v495
  %v497 = vsel %vm494, %v496, %v492
  %v498 = vmul.f32 1.0, %v497
  %v499 = vrcp.pop %v273
  %v500 = vmul.f32 %v273, %v499
  %v501 = vsub.f32 1.0, %v500
  %v502 = vmul.f32 %v499, %v501
  %v503 = vadd.f32 %v499, %v502
  %vm504 = vweird.f32 %v273
  %vm505 = vweird.f32 %v499
  %vm506 = vmor %vm504, %vm505
  %v507 = vsel %vm506, %v499, %v503
  %v508 = vand.u32 2147483647, %v273
  %vm509 = vcmp.eq.f32.partialorder %v508, 8.507059e+37
  %v510 = vand.u32 %v273, 2147483648
  %v511 = vor.u32 1.1754944e-38, %v510
  %v512 = vsel %vm509, %v511, %v507
  %v513 = vmul.f32 1.0, %v512
  %v514 = vmul.f32 %v194, %v288
  %v515 = vmul.f32 %v195, %v303
  %v516 = vmul.f32 %v196, %v318
  %v517 = vmul.f32 %v197, %v333
  %v518 = vmul.f32 %v198, %v348
  %v519 = vmul.f32 %v199, %v363
  %v520 = vmul.f32 %v200, %v378
  %v521 = vmul.f32 %v201, %v393
  %v522 = vmul.f32 %v202, %v408
  %v523 = vmul.f32 %v203, %v423
  %v524 = vmul.f32 %v204, %v438
  %v525 = vmul.f32 %v205, %v453
  %v526 = vmul.f32 %v206, %v468
  %v527 = vmul.f32 %v207, %v483
  %v528 = vmul.f32 %v208, %v498
  %v529 = vmul.f32 %v209, %v513
  %v530 = vpack.c.bf16 %v514, %v514
  %v531 = vpack.c.bf16 %v515, %v515
  %v532 = vpack.c.bf16 %v516, %v516
  %v533 = vpack.c.bf16 %v517, %v517
  %v534 = vpack.c.bf16 %v518, %v518
  %v535 = vpack.c.bf16 %v519, %v519
  %v536 = vpack.c.bf16 %v520, %v520
  %v537 = vpack.c.bf16 %v521, %v521
  %v538 = vpack.c.bf16 %v522, %v522
  %v539 = vpack.c.bf16 %v523, %v523
  %v540 = vpack.c.bf16 %v524, %v524
  %v541 = vpack.c.bf16 %v525, %v525
  %v542 = vpack.c.bf16 %v526, %v526
  %v543 = vpack.c.bf16 %v527, %v527
  %v544 = vpack.c.bf16 %v528, %v528
  %v545 = vpack.c.bf16 %v529, %v529
  %546 = vst [vmem:[%s4] sm:$0xf] %v530
  %547 = vst [vmem:[%s4 + $0x4] sm:$0xf] %v531
  %548 = vst [vmem:[%s4 + $0x8] sm:$0xf] %v532
  %549 = vst [vmem:[%s4 + $0xc] sm:$0xf] %v533
  %550 = vst [vmem:[%s4 + $0x10] sm:$0xf] %v534
  %551 = vst [vmem:[%s4 + $0x14] sm:$0xf] %v535
  %552 = vst [vmem:[%s4 + $0x18] sm:$0xf] %v536
  %553 = vst [vmem:[%s4 + $0x1c] sm:$0xf] %v537
  %554 = vst [vmem:[%s4 + $0x20] sm:$0xf] %v538
  %555 = vst [vmem:[%s4 + $0x24] sm:$0xf] %v539
  %556 = vst [vmem:[%s4 + $0x28] sm:$0xf] %v540
  %557 = vst [vmem:[%s4 + $0x2c] sm:$0xf] %v541
  %558 = vst [vmem:[%s4 + $0x30] sm:$0xf] %v542
  %559 = vst [vmem:[%s4 + $0x34] sm:$0xf] %v543
  %560 = vst [vmem:[%s4 + $0x38] sm:$0xf] %v544
  %561 = vst [vmem:[%s4 + $0x3c] sm:$0xf] %v545
  // Predicated region
  $region18: #{_lambda_.6} parent=0 // pred_check
    _
  $region19: #{_lambda_.6} parent=0 // pred_check_branch
    %563 = sbr.rel (0) target = $region21
  $region20: #{_lambda_.6} parent=0 // pred_region
    _
  $region21: #{_lambda_.6} parent=0 // pred_fallthru
    _
  // Predicated region
  $region22: #{_lambda_.6} parent=0 // pred_check
    _
  $region23: #{_lambda_.6} parent=0 // pred_check_branch
    %565 = sbr.rel (0) target = $region25
  $region24: #{_lambda_.6} parent=0 // pred_region
    _
  $region25: #{_lambda_.6} parent=0 // pred_fallthru
    _

// kernel: _lambda_.8
$region0: #{_lambda_.8}
  #allocation0 [shape = 'u32[]', space=smem, size = 0x4, offset = 0x4, fixed_abs, tag = 'smem constant byte address 0x4 - core index']
  #allocation1 [shape = 'u32[72,128]{1,0:T(1,128)}', space=vmem, size = 0x9000, scoped, tag = 'internal scratch']
  #allocation2 [shape = 'f32[1,128]{1,0:T(1,128)}', space=vmem, size = 0x200, scoped, tag = 'scratch operand']
  %s0 = inlined_call_operand.vmem [shape: bf16[2,64,128], index: 0, kind: input, shape index: {}]
  %s1 = inlined_call_operand.vmem [shape: f32[2,1,128], index: 1, kind: input, shape index: {}]
  %s2 = inlined_call_operand.vmem [shape: bf16[128,128], index: 2, kind: input, shape index: {}]
  %s3 = inlined_call_operand.vmem [shape: f32[1,128], index: 3, kind: input, shape index: {}]
  %s4 = inlined_call_operand.vmem [shape: bf16[128,128], index: 4, kind: input, shape index: {}]
  %s5 = inlined_call_operand.vmem [shape: f32[1,128], index: 5, kind: input, shape index: {}]
  %s6 = inlined_call_operand.vmem [shape: bf16[128,128], index: 6, kind: input, shape index: {}]
  %s7 = inlined_call_operand.vmem [shape: f32[1,128], index: 7, kind: input, shape index: {}]
  %s8 = inlined_call_operand.vmem [shape: f32[1,128], index: 8, kind: input, shape index: {}]
  %s9 = inlined_call_operand.vmem [shape: bf16[2,64,128], index: 9, kind: output, shape index: {}]
  %s10 = sld [smem:[#allocation0]]
  $region73: #{_lambda_.8} parent=0
    _
  %s12 = ssub.s32 1, %s10
  %s13 = scalar_select 0, %s12, %s10
  loop: start=0, step=1, limit=4
  $region2: #{_lambda_.8} parent=0 // loop_pre_header
    _
  $region3: #{_lambda_.8} parent=0 // loop_header
    %s15 = sphi 0, %s19
    %p16 = scmp.ge.s32.totalorder %s15, 4
    %s22 = sphi 0, %s34
    %s23 = sphi 0, %s30
    %s24 = sphi 0, %s22
    %s25 = sphi 0, %s23
    %s26 = sphi 0, %s24
    %s27 = sphi 0, %s25
    %s39 = sphi 0, %s41
    %s42 = sphi 0, %s39
    %s43 = sphi 0, %s42
    %s59 = sphi 0, %s43
    %s65 = sphi 0, %s67
    %s68 = sphi 0, %s65
    %s69 = sphi 0, %s68
    %s85 = sphi 0, %s69
    %s89 = sphi 0, %s89
    %s91 = sphi 0, %s89
    %s92 = sphi 0, %s91
    %s106 = sphi 0, %s92
    %s110 = sphi 0, %s110
    %s112 = sphi 0, %s110
    %s113 = sphi 0, %s112
    %s127 = sphi 0, %s113
    %s131 = sphi 0, %s131
    %s133 = sphi 0, %s131
    %s134 = sphi 0, %s133
    %s148 = sphi 0, %s134
    %s152 = sphi 0, %s152
    %s154 = sphi 0, %s152
    %s155 = sphi 0, %s154
    %s169 = sphi 0, %s155
    %s173 = sphi 0, %s173
    %s175 = sphi 0, %s173
    %s176 = sphi 0, %s175
    %s190 = sphi 0, %s176
    %s194 = sphi 0, %s194
    %s196 = sphi 0, %s194
    %s197 = sphi 0, %s196
    %s211 = sphi 0, %s197
    %s215 = sphi 0, %s215
    %s217 = sphi 0, %s215
    %s218 = sphi 0, %s217
    %s232 = sphi 0, %s218
    %s240 = sphi 0, %s242
    %s243 = sphi 0, %s240
    %s244 = sphi 0, %s243
    %s260 = sphi 0, %s244
  $region4: #{_lambda_.8} parent=0 // loop_header_branch
    %18 = sbr.rel (%p16) target = $region8
  $region5: #{_lambda_.8} parent=0 // loop_body
    %s20 = ssub.s32 %s15, 1
    %s21 = ssub.s32 %s15, 2
    %s28 = sadd.s32 1, %s23
    %p29 = scmp.ge.s32.totalorder %s28, 1
    %s30 = scalar_select %p29, 0, %s28
    %s31 = sadd.s32 1, %s22
    %s32 = scalar_select %p29, %s31, %s22
    %p33 = scmp.ge.s32.totalorder %s32, 2
    %s34 = scalar_select %p33, 0, %s32
    %s35 = ssub.s32 %s22, %s34
    %s36 = ssub.s32 %s23, %s30
    %s37 = sor.u32 %s35, %s36
    %p38 = scmp.eq.s32.totalorder %s37, 0
    %s40 = sadd.s32 %s39, 1
    %s41 = scalar_select %p38, %s39, %s40
    %p44 = pneg %p38
    %p45 = scmp.eq.s32.totalorder %s15, 1
    %p46 = por %p44, %p45
    %p47 = scmp.ne.s32.totalorder %s39, %s42
    %p48 = scmp.eq.s32.totalorder %s15, 0
    %p49 = por %p47, %p48
    %p50 = scmp.ne.s32.totalorder %s39, %s42
    %p51 = scmp.eq.s32.totalorder %s20, 1
    %p52 = por %p50, %p51
    %p53 = scmp.ne.s32.totalorder %s42, %s43
    %p54 = scmp.eq.s32.totalorder %s20, 0
    %p55 = por %p53, %p54
    %p56 = scmp.ne.s32.totalorder %s42, %s43
    %p57 = scmp.eq.s32.totalorder %s21, 1
    %p58 = por %p56, %p57
    %p60 = scmp.ne.s32.totalorder %s43, %s59
    %p61 = scmp.eq.s32.totalorder %s21, 0
    %p62 = por %p60, %p61
    %s63 = ssub.s32 %s22, %s34
    %p64 = scmp.eq.s32.totalorder %s63, 0
    %s66 = sadd.s32 %s65, 1
    %s67 = scalar_select %p64, %s65, %s66
    %p70 = pneg %p64
    %p71 = scmp.eq.s32.totalorder %s15, 1
    %p72 = por %p70, %p71
    %p73 = scmp.ne.s32.totalorder %s65, %s68
    %p74 = scmp.eq.s32.totalorder %s15, 0
    %p75 = por %p73, %p74
    %p76 = scmp.ne.s32.totalorder %s65, %s68
    %p77 = scmp.eq.s32.totalorder %s20, 1
    %p78 = por %p76, %p77
    %p79 = scmp.ne.s32.totalorder %s68, %s69
    %p80 = scmp.eq.s32.totalorder %s20, 0
    %p81 = por %p79, %p80
    %p82 = scmp.ne.s32.totalorder %s68, %s69
    %p83 = scmp.eq.s32.totalorder %s21, 1
    %p84 = por %p82, %p83
    %p86 = scmp.ne.s32.totalorder %s69, %s85
    %p87 = scmp.eq.s32.totalorder %s21, 0
    %p88 = por %p86, %p87
    %s90 = sadd.s32 %s89, 1
    %p93 = scmp.eq.s32.totalorder %s15, 1
    %p94 = scmp.ne.s32.totalorder %s89, %s91
    %p95 = scmp.eq.s32.totalorder %s15, 0
    %p96 = por %p94, %p95
    %p97 = scmp.ne.s32.totalorder %s89, %s91
    %p98 = scmp.eq.s32.totalorder %s20, 1
    %p99 = por %p97, %p98
    %p100 = scmp.ne.s32.totalorder %s91, %s92
    %p101 = scmp.eq.s32.totalorder %s20, 0
    %p102 = por %p100, %p101
    %p103 = scmp.ne.s32.totalorder %s91, %s92
    %p104 = scmp.eq.s32.totalorder %s21, 1
    %p105 = por %p103, %p104
    %p107 = scmp.ne.s32.totalorder %s92, %s106
    %p108 = scmp.eq.s32.totalorder %s21, 0
    %p109 = por %p107, %p108
    %s111 = sadd.s32 %s110, 1
    %p114 = scmp.eq.s32.totalorder %s15, 1
    %p115 = scmp.ne.s32.totalorder %s110, %s112
    %p116 = scmp.eq.s32.totalorder %s15, 0
    %p117 = por %p115, %p116
    %p118 = scmp.ne.s32.totalorder %s110, %s112
    %p119 = scmp.eq.s32.totalorder %s20, 1
    %p120 = por %p118, %p119
    %p121 = scmp.ne.s32.totalorder %s112, %s113
    %p122 = scmp.eq.s32.totalorder %s20, 0
    %p123 = por %p121, %p122
    %p124 = scmp.ne.s32.totalorder %s112, %s113
    %p125 = scmp.eq.s32.totalorder %s21, 1
    %p126 = por %p124, %p125
    %p128 = scmp.ne.s32.totalorder %s113, %s127
    %p129 = scmp.eq.s32.totalorder %s21, 0
    %p130 = por %p128, %p129
    %s132 = sadd.s32 %s131, 1
    %p135 = scmp.eq.s32.totalorder %s15, 1
    %p136 = scmp.ne.s32.totalorder %s131, %s133
    %p137 = scmp.eq.s32.totalorder %s15, 0
    %p138 = por %p136, %p137
    %p139 = scmp.ne.s32.totalorder %s131, %s133
    %p140 = scmp.eq.s32.totalorder %s20, 1
    %p141 = por %p139, %p140
    %p142 = scmp.ne.s32.totalorder %s133, %s134
    %p143 = scmp.eq.s32.totalorder %s20, 0
    %p144 = por %p142, %p143
    %p145 = scmp.ne.s32.totalorder %s133, %s134
    %p146 = scmp.eq.s32.totalorder %s21, 1
    %p147 = por %p145, %p146
    %p149 = scmp.ne.s32.totalorder %s134, %s148
    %p150 = scmp.eq.s32.totalorder %s21, 0
    %p151 = por %p149, %p150
    %s153 = sadd.s32 %s152, 1
    %p156 = scmp.eq.s32.totalorder %s15, 1
    %p157 = scmp.ne.s32.totalorder %s152, %s154
    %p158 = scmp.eq.s32.totalorder %s15, 0
    %p159 = por %p157, %p158
    %p160 = scmp.ne.s32.totalorder %s152, %s154
    %p161 = scmp.eq.s32.totalorder %s20, 1
    %p162 = por %p160, %p161
    %p163 = scmp.ne.s32.totalorder %s154, %s155
    %p164 = scmp.eq.s32.totalorder %s20, 0
    %p165 = por %p163, %p164
    %p166 = scmp.ne.s32.totalorder %s154, %s155
    %p167 = scmp.eq.s32.totalorder %s21, 1
    %p168 = por %p166, %p167
    %p170 = scmp.ne.s32.totalorder %s155, %s169
    %p171 = scmp.eq.s32.totalorder %s21, 0
    %p172 = por %p170, %p171
    %s174 = sadd.s32 %s173, 1
    %p177 = scmp.eq.s32.totalorder %s15, 1
    %p178 = scmp.ne.s32.totalorder %s173, %s175
    %p179 = scmp.eq.s32.totalorder %s15, 0
    %p180 = por %p178, %p179
    %p181 = scmp.ne.s32.totalorder %s173, %s175
    %p182 = scmp.eq.s32.totalorder %s20, 1
    %p183 = por %p181, %p182
    %p184 = scmp.ne.s32.totalorder %s175, %s176
    %p185 = scmp.eq.s32.totalorder %s20, 0
    %p186 = por %p184, %p185
    %p187 = scmp.ne.s32.totalorder %s175, %s176
    %p188 = scmp.eq.s32.totalorder %s21, 1
    %p189 = por %p187, %p188
    %p191 = scmp.ne.s32.totalorder %s176, %s190
    %p192 = scmp.eq.s32.totalorder %s21, 0
    %p193 = por %p191, %p192
    %s195 = sadd.s32 %s194, 1
    %p198 = scmp.eq.s32.totalorder %s15, 1
    %p199 = scmp.ne.s32.totalorder %s194, %s196
    %p200 = scmp.eq.s32.totalorder %s15, 0
    %p201 = por %p199, %p200
    %p202 = scmp.ne.s32.totalorder %s194, %s196
    %p203 = scmp.eq.s32.totalorder %s20, 1
    %p204 = por %p202, %p203
    %p205 = scmp.ne.s32.totalorder %s196, %s197
    %p206 = scmp.eq.s32.totalorder %s20, 0
    %p207 = por %p205, %p206
    %p208 = scmp.ne.s32.totalorder %s196, %s197
    %p209 = scmp.eq.s32.totalorder %s21, 1
    %p210 = por %p208, %p209
    %p212 = scmp.ne.s32.totalorder %s197, %s211
    %p213 = scmp.eq.s32.totalorder %s21, 0
    %p214 = por %p212, %p213
    %s216 = sadd.s32 %s215, 1
    %p219 = scmp.eq.s32.totalorder %s15, 1
    %p220 = scmp.ne.s32.totalorder %s215, %s217
    %p221 = scmp.eq.s32.totalorder %s15, 0
    %p222 = por %p220, %p221
    %p223 = scmp.ne.s32.totalorder %s215, %s217
    %p224 = scmp.eq.s32.totalorder %s20, 1
    %p225 = por %p223, %p224
    %p226 = scmp.ne.s32.totalorder %s217, %s218
    %p227 = scmp.eq.s32.totalorder %s20, 0
    %p228 = por %p226, %p227
    %p229 = scmp.ne.s32.totalorder %s217, %s218
    %p230 = scmp.eq.s32.totalorder %s21, 1
    %p231 = por %p229, %p230
    %p233 = scmp.ne.s32.totalorder %s218, %s232
    %p234 = scmp.eq.s32.totalorder %s21, 0
    %p235 = por %p233, %p234
    %s236 = ssub.s32 %s22, %s34
    %s237 = ssub.s32 %s23, %s30
    %s238 = sor.u32 %s236, %s237
    %p239 = scmp.eq.s32.totalorder %s238, 0
    %s241 = sadd.s32 %s240, 1
    %s242 = scalar_select %p239, %s240, %s241
    %p245 = pneg %p239
    %p246 = scmp.eq.s32.totalorder %s15, 1
    %p247 = por %p245, %p246
    %p248 = scmp.ne.s32.totalorder %s240, %s243
    %p249 = scmp.eq.s32.totalorder %s15, 0
    %p250 = por %p248, %p249
    %p251 = scmp.ne.s32.totalorder %s240, %s243
    %p252 = scmp.eq.s32.totalorder %s20, 1
    %p253 = por %p251, %p252
    %p254 = scmp.ne.s32.totalorder %s243, %s244
    %p255 = scmp.eq.s32.totalorder %s20, 0
    %p256 = por %p254, %p255
    %p257 = scmp.ne.s32.totalorder %s243, %s244
    %p258 = scmp.eq.s32.totalorder %s21, 1
    %p259 = por %p257, %p258
    %p261 = scmp.ne.s32.totalorder %s244, %s260
    %p262 = scmp.eq.s32.totalorder %s21, 0
    %p263 = por %p261, %p262
    %p264 = scmp.le.s32.totalorder 1, %s15
    %p265 = scmp.lt.s32.totalorder %s15, 3
    %p266 = pnand %p264, %p265
    %p267 = pneg %p266
    // Predicated region
    $region9: #{_lambda_.8} parent=5 // pred_check
      _
    $region10: #{_lambda_.8} parent=5 // pred_check_branch
      %269 = sbr.rel (%p266) target = $region12
    $region11: #{_lambda_.8} parent=5 // pred_region
      %s270 = ssub.s32 %s15, 1
      // Predicated region
      $region13: #{_lambda_.8} parent=11 // pred_check
        %p271 = pneg %p102
      $region14: #{_lambda_.8} parent=11 // pred_check_branch
        %273 = sbr.rel (%p271) target = $region16
      $region15: #{_lambda_.8} parent=11 // pred_region
        _
      $region16: #{_lambda_.8} parent=11 // pred_fallthru
        _
      // Predicated region
      $region17: #{_lambda_.8} parent=11 // pred_check
        %p274 = pneg %p123
      $region18: #{_lambda_.8} parent=11 // pred_check_branch
        %276 = sbr.rel (%p274) target = $region20
      $region19: #{_lambda_.8} parent=11 // pred_region
        _
      $region20: #{_lambda_.8} parent=11 // pred_fallthru
        _
      // Predicated region
      $region21: #{_lambda_.8} parent=11 // pred_check
        %p277 = pneg %p144
      $region22: #{_lambda_.8} parent=11 // pred_check_branch
        %279 = sbr.rel (%p277) target = $region24
      $region23: #{_lambda_.8} parent=11 // pred_region
        _
      $region24: #{_lambda_.8} parent=11 // pred_fallthru
        _
      // Predicated region
      $region25: #{_lambda_.8} parent=11 // pred_check
        %p280 = pneg %p165
      $region26: #{_lambda_.8} parent=11 // pred_check_branch
        %282 = sbr.rel (%p280) target = $region28
      $region27: #{_lambda_.8} parent=11 // pred_region
        _
      $region28: #{_lambda_.8} parent=11 // pred_fallthru
        _
      // Predicated region
      $region29: #{_lambda_.8} parent=11 // pred_check
        %p283 = pneg %p186
      $region30: #{_lambda_.8} parent=11 // pred_check_branch
        %285 = sbr.rel (%p283) target = $region32
      $region31: #{_lambda_.8} parent=11 // pred_region
        _
      $region32: #{_lambda_.8} parent=11 // pred_fallthru
        _
      // Predicated region
      $region33: #{_lambda_.8} parent=11 // pred_check
        %p286 = pneg %p207
      $region34: #{_lambda_.8} parent=11 // pred_check_branch
        %288 = sbr.rel (%p286) target = $region36
      $region35: #{_lambda_.8} parent=11 // pred_region
        _
      $region36: #{_lambda_.8} parent=11 // pred_fallthru
        _
      // Predicated region
      $region37: #{_lambda_.8} parent=11 // pred_check
        %p289 = pneg %p228
      $region38: #{_lambda_.8} parent=11 // pred_check_branch
        %291 = sbr.rel (%p289) target = $region40
      $region39: #{_lambda_.8} parent=11 // pred_region
        _
      $region40: #{_lambda_.8} parent=11 // pred_fallthru
        _
    $region12: #{_lambda_.8} parent=5 // pred_fallthru
      _
    %p292 = scmp.lt.s32.totalorder %s15, 2
    // Predicated region
    $region41: #{_lambda_.8} parent=5 // pred_check
      %p293 = pneg %p292
    $region42: #{_lambda_.8} parent=5 // pred_check_branch
      %295 = sbr.rel (%p293) target = $region44
    $region43: #{_lambda_.8} parent=5 // pred_region
      // Predicated region
      $region45: #{_lambda_.8} parent=43 // pred_check
        %p296 = pneg %p49
      $region46: #{_lambda_.8} parent=43 // pred_check_branch
        %298 = sbr.rel (%p296) target = $region48
      $region47: #{_lambda_.8} parent=43 // pred_region
        %s299 = smul.u32 8, %s23
        %p300 = scmp.lt.s32.totalorder %s22, 1
        %s301 = scalar_select %p300, %s22, 1
        %p302 = scmp.lt.s32.totalorder %s299, 7
        %s303 = scalar_select %p302, %s299, 7
        %s304 = smul.addr %s301, 8
        %s305 = sadd.s32 %s303, %s304
        %s306 = smul.addr %s305, 4
        %s307 = scalar_lea.vmem %s0, %s306
        %s308 = smul.u32 8, %s23
      $region48: #{_lambda_.8} parent=43 // pred_fallthru
        _
      // Predicated region
      $region49: #{_lambda_.8} parent=43 // pred_check
        %p309 = pneg %p75
      $region50: #{_lambda_.8} parent=43 // pred_check_branch
        %311 = sbr.rel (%p309) target = $region52
      $region51: #{_lambda_.8} parent=43 // pred_region
        %p312 = scmp.lt.s32.totalorder %s22, 1
        %s313 = scalar_select %p312, %s22, 1
        %s314 = scalar_lea.vmem %s1, %s313
      $region52: #{_lambda_.8} parent=43 // pred_fallthru
        _
    $region44: #{_lambda_.8} parent=5 // pred_fallthru
      _
    %p315 = scmp.le.s32.totalorder 1, %s15
    %p316 = scmp.lt.s32.totalorder %s15, 3
    %p317 = pnand %p315, %p316
    %p318 = pneg %p317
    // Predicated region
    $region53: #{_lambda_.8} parent=5 // pred_check
      _
    $region54: #{_lambda_.8} parent=5 // pred_check_branch
      %320 = sbr.rel (%p317) target = $region56
    $region55: #{_lambda_.8} parent=5 // pred_region
      %s321 = ssub.s32 %s15, 1
      %s322 = smul.u32 8, %s25
      %p323 = scmp.lt.s32.totalorder %s24, 1
      %s324 = scalar_select %p323, %s24, 1
      %p325 = scmp.lt.s32.totalorder %s322, 7
      %s326 = scalar_select %p325, %s322, 7
      %s327 = smul.addr %s324, 8
      %s328 = sadd.s32 %s326, %s327
      %s329 = smul.addr %s328, 4
      %s330 = scalar_lea.vmem %s0, %s329
      %p331 = pneg %p55
      %p332 = pneg %p52
      %p333 = scmp.lt.s32.totalorder %s24, 1
      %s334 = scalar_select %p333, %s24, 1
      %s335 = scalar_lea.vmem %s1, %s334
      %p336 = pneg %p81
      %p337 = pneg %p78
      %p338 = pneg %p102
      %p339 = pneg %p99
      %p340 = pneg %p123
      %p341 = pneg %p120
      %p342 = pneg %p144
      %p343 = pneg %p141
      %p344 = pneg %p165
      %p345 = pneg %p162
      %p346 = pneg %p186
      %p347 = pneg %p183
      %p348 = pneg %p207
      %p349 = pneg %p204
      %p350 = pneg %p228
      %p351 = pneg %p225
      %p352 = pneg %p256
      %p353 = pneg %p253
      %s354 = smul.u32 8, %s25
      %p355 = scmp.lt.s32.totalorder %s24, 1
      %s356 = scalar_select %p355, %s24, 1
      %p357 = scmp.lt.s32.totalorder %s354, 7
      %s358 = scalar_select %p357, %s354, 7
      %s359 = smul.addr %s356, 8
      %s360 = sadd.s32 %s358, %s359
      %s361 = smul.addr %s360, 4
      %s362 = scalar_lea.vmem %s9, %s361
      %s363 = smul.u32 8, %s25
      %p364 = scmp.lt.s32.totalorder %s24, 1
      %s365 = scalar_select %p364, %s24, 1
      %p366 = scmp.lt.s32.totalorder %s363, 7
      %s367 = scalar_select %p366, %s363, 7
      %s368 = smul.addr %s365, 8
      %s369 = sadd.s32 %s367, %s368
      %s370 = smul.addr %s369, 4
      %s371 = scalar_lea.vmem %s0, %s370
      %s372 = smul.u32 8, %s25
      %p373 = scmp.lt.s32.totalorder %s24, 1
      %s374 = scalar_select %p373, %s24, 1
      %s375 = scalar_lea.vmem %s1, %s374
      %s376 = smul.u32 8, %s25
      %p377 = scmp.lt.s32.totalorder %s24, 1
      %s378 = scalar_select %p377, %s24, 1
      %p379 = scmp.lt.s32.totalorder %s376, 7
      %s380 = scalar_select %p379, %s376, 7
      %s381 = smul.addr %s378, 8
      %s382 = sadd.s32 %s380, %s381
      %s383 = smul.addr %s382, 4
      %s384 = scalar_lea.vmem %s9, %s383
      %s385 = smul.u32 8, %s25
      %p386 = scmp.eq.s32.totalorder %s25, 0
      // Predicated region
      $region57: #{_lambda_.8} parent=55 // pred_check
        %p387 = pneg %p386
      $region58: #{_lambda_.8} parent=55 // pred_check_branch
        %389 = sbr.rel (%p387) target = $region60
      $region59: #{_lambda_.8} parent=55 // pred_region
        %v390 = vld [vmem:[%s375] sm:$0x1]
        %v391 = vpack.c.bf16 %v390, %v390
        %v392 = vld [vmem:[%s2] sm:$0xf]
        %v393 = vld [vmem:[%s2 + $0x4] sm:$0xf]
        %v394 = vld [vmem:[%s2 + $0x8] sm:$0xf]
        %v395 = vld [vmem:[%s2 + $0xc] sm:$0xf]
        %v396 = vld [vmem:[%s2 + $0x10] sm:$0xf]
        %v397 = vld [vmem:[%s2 + $0x14] sm:$0xf]
        %v398 = vld [vmem:[%s2 + $0x18] sm:$0xf]
        %v399 = vld [vmem:[%s2 + $0x1c] sm:$0xf]
        %v400 = vld [vmem:[%s2 + $0x20] sm:$0xf]
        %v401 = vld [vmem:[%s2 + $0x24] sm:$0xf]
        %v402 = vld [vmem:[%s2 + $0x28] sm:$0xf]
        %v403 = vld [vmem:[%s2 + $0x2c] sm:$0xf]
        %v404 = vld [vmem:[%s2 + $0x30] sm:$0xf]
        %v405 = vld [vmem:[%s2 + $0x34] sm:$0xf]
        %v406 = vld [vmem:[%s2 + $0x38] sm:$0xf]
        %v407 = vld [vmem:[%s2 + $0x3c] sm:$0xf]
        %v408 = vld [vmem:[%s3] sm:$0x1]
        %v425 = vunpack.c.l.b16 %v392
        %v426 = vunpack.c.l.b16 %v393
        %v427 = vunpack.c.l.b16 %v394
        %v428 = vunpack.c.l.b16 %v395
        %v429 = vunpack.c.l.b16 %v396
        %v430 = vunpack.c.l.b16 %v397
        %v431 = vunpack.c.l.b16 %v398
        %v432 = vunpack.c.l.b16 %v399
        %v433 = vunpack.c.l.b16 %v400
        %v434 = vunpack.c.l.b16 %v401
        %v435 = vunpack.c.l.b16 %v402
        %v436 = vunpack.c.l.b16 %v403
        %v437 = vunpack.c.l.b16 %v404
        %v438 = vunpack.c.l.b16 %v405
        %v439 = vunpack.c.l.b16 %v406
        %v440 = vunpack.c.l.b16 %v407
        %v441 = vpack.c.b16 %v426, %v425
        %v442 = vpack.c.b16 %v428, %v427
        %v443 = vpack.c.b16 %v430, %v429
        %v444 = vpack.c.b16 %v432, %v431
        %v445 = vpack.c.b16 %v434, %v433
        %v446 = vpack.c.b16 %v436, %v435
        %v447 = vpack.c.b16 %v438, %v437
        %v448 = vpack.c.b16 %v440, %v439
        %457 = vmatpush.bf16.msra.mxu0 %v448
        %458 = vmatpush.bf16.msra.mxu0 %v447
        %459 = vmatpush.bf16.msra.mxu0 %v446
        %460 = vmatpush.bf16.msra.mxu0 %v445
        %461 = vmatpush.bf16.msra.mxu0 %v444
        %462 = vmatpush.bf16.msra.mxu0 %v443
        %463 = vmatpush.bf16.msra.mxu0 %v442
        %464 = vmatpush.bf16.msra.mxu0 %v441
        %465 = vmatmul.bf16.gmra.mxu0 %v391
        %v466 = vpop.f32.mrf.mxu0
        %v467 = vadd.f32 %v408, %v466
        %v468 = vpop.f32.mrf.mxu0
        %469 = vdwg.mxu0
        %v470 = vxor.u32 %v467, 2147483648
        %v471 = vmul.f32 %v470, 1.442695
        %v472 = vpow.pop %v471
        %v473 = vadd.f32 %v472, 1.0
        %v474 = vrcp.pop %v473
        %v475 = vmul.f32 %v473, %v474
        %v476 = vsub.f32 1.0, %v475
        %v477 = vmul.f32 %v474, %v476
        %v478 = vadd.f32 %v474, %v477
        %vm479 = vweird.f32 %v473
        %vm480 = vweird.f32 %v474
        %vm481 = vmor %vm479, %vm480
        %v482 = vsel %vm481, %v474, %v478
        %v483 = vand.u32 2147483647, %v473
        %vm484 = vcmp.eq.f32.partialorder %v483, 8.507059e+37
        %v485 = vand.u32 %v473, 2147483648
        %v486 = vor.u32 1.1754944e-38, %v485
        %v487 = vsel %vm484, %v486, %v482
        %v488 = vmul.f32 1.0, %v487
        %v489 = vmul.f32 %v467, %v488
        %v490 = vpack.c.bf16 %v489, %v489
        %v491 = vld [vmem:[%s4] sm:$0xf]
        %v492 = vld [vmem:[%s4 + $0x4] sm:$0xf]
        %v493 = vld [vmem:[%s4 + $0x8] sm:$0xf]
        %v494 = vld [vmem:[%s4 + $0xc] sm:$0xf]
        %v495 = vld [vmem:[%s4 + $0x10] sm:$0xf]
        %v496 = vld [vmem:[%s4 + $0x14] sm:$0xf]
        %v497 = vld [vmem:[%s4 + $0x18] sm:$0xf]
        %v498 = vld [vmem:[%s4 + $0x1c] sm:$0xf]
        %v499 = vld [vmem:[%s4 + $0x20] sm:$0xf]
        %v500 = vld [vmem:[%s4 + $0x24] sm:$0xf]
        %v501 = vld [vmem:[%s4 + $0x28] sm:$0xf]
        %v502 = vld [vmem:[%s4 + $0x2c] sm:$0xf]
        %v503 = vld [vmem:[%s4 + $0x30] sm:$0xf]
        %v504 = vld [vmem:[%s4 + $0x34] sm:$0xf]
        %v505 = vld [vmem:[%s4 + $0x38] sm:$0xf]
        %v506 = vld [vmem:[%s4 + $0x3c] sm:$0xf]
        %v507 = vld [vmem:[%s5] sm:$0x1]
        %v524 = vunpack.c.l.b16 %v491
        %v525 = vunpack.c.l.b16 %v492
        %v526 = vunpack.c.l.b16 %v493
        %v527 = vunpack.c.l.b16 %v494
        %v528 = vunpack.c.l.b16 %v495
        %v529 = vunpack.c.l.b16 %v496
        %v530 = vunpack.c.l.b16 %v497
        %v531 = vunpack.c.l.b16 %v498
        %v532 = vunpack.c.l.b16 %v499
        %v533 = vunpack.c.l.b16 %v500
        %v534 = vunpack.c.l.b16 %v501
        %v535 = vunpack.c.l.b16 %v502
        %v536 = vunpack.c.l.b16 %v503
        %v537 = vunpack.c.l.b16 %v504
        %v538 = vunpack.c.l.b16 %v505
        %v539 = vunpack.c.l.b16 %v506
        %v540 = vpack.c.b16 %v525, %v524
        %v541 = vpack.c.b16 %v527, %v526
        %v542 = vpack.c.b16 %v529, %v528
        %v543 = vpack.c.b16 %v531, %v530
        %v544 = vpack.c.b16 %v533, %v532
        %v545 = vpack.c.b16 %v535, %v534
        %v546 = vpack.c.b16 %v537, %v536
        %v547 = vpack.c.b16 %v539, %v538
        %556 = vmatpush.bf16.msra.mxu0 %v547
        %557 = vmatpush.bf16.msra.mxu0 %v546
        %558 = vmatpush.bf16.msra.mxu0 %v545
        %559 = vmatpush.bf16.msra.mxu0 %v544
        %560 = vmatpush.bf16.msra.mxu0 %v543
        %561 = vmatpush.bf16.msra.mxu0 %v542
        %562 = vmatpush.bf16.msra.mxu0 %v541
        %563 = vmatpush.bf16.msra.mxu0 %v540
        %564 = vmatmul.bf16.gmra.mxu0 %v490
        %v565 = vpop.f32.mrf.mxu0
        %v566 = vadd.f32 %v507, %v565
        %v567 = vpop.f32.mrf.mxu0
        %568 = vdwg.mxu0
        %v569 = vxor.u32 %v566, 2147483648
        %v570 = vmul.f32 %v569, 1.442695
        %v571 = vpow.pop %v570
        %v572 = vadd.f32 %v571, 1.0
        %v573 = vrcp.pop %v572
        %v574 = vmul.f32 %v572, %v573
        %v575 = vsub.f32 1.0, %v574
        %v576 = vmul.f32 %v573, %v575
        %v577 = vadd.f32 %v573, %v576
        %vm578 = vweird.f32 %v572
        %vm579 = vweird.f32 %v573
        %vm580 = vmor %vm578, %vm579
        %v581 = vsel %vm580, %v573, %v577
        %v582 = vand.u32 2147483647, %v572
        %vm583 = vcmp.eq.f32.partialorder %v582, 8.507059e+37
        %v584 = vand.u32 %v572, 2147483648
        %v585 = vor.u32 1.1754944e-38, %v584
        %v586 = vsel %vm583, %v585, %v581
        %v587 = vmul.f32 1.0, %v586
        %588 = vst [vmem:[#allocation2] sm:$0x1] %v587
      $region60: #{_lambda_.8} parent=55 // pred_fallthru
        _
      %v589 = vld [vmem:[%s371] sm:$0xf]
      %v590 = vld [vmem:[%s371 + $0x4] sm:$0xf]
      %v591 = vld [vmem:[%s371 + $0x8] sm:$0xf]
      %v592 = vld [vmem:[%s371 + $0xc] sm:$0xf]
      %v593 = vld [vmem:[%s371 + $0x10] sm:$0xf]
      %v594 = vld [vmem:[%s371 + $0x14] sm:$0xf]
      %v595 = vld [vmem:[%s371 + $0x18] sm:$0xf]
      %v596 = vld [vmem:[%s371 + $0x1c] sm:$0xf]
      %v597 = vunpack.c.l.bf16 %v589
      %v598 = vunpack.c.l.bf16 %v590
      %v599 = vunpack.c.l.bf16 %v591
      %v600 = vunpack.c.l.bf16 %v592
      %v601 = vunpack.c.l.bf16 %v593
      %v602 = vunpack.c.l.bf16 %v594
      %v603 = vunpack.c.l.bf16 %v595
      %v604 = vunpack.c.l.bf16 %v596
      %v605 = vld [vmem:[#allocation2] sm:$0x1]
      %v607 = vperm.slane %v605, 0
      %v609 = vmul.f32 %v597, %v607
      %v610 = vmul.f32 %v598, %v607
      %v611 = vmul.f32 %v599, %v607
      %v612 = vmul.f32 %v600, %v607
      %v613 = vmul.f32 %v601, %v607
      %v614 = vmul.f32 %v602, %v607
      %v615 = vmul.f32 %v603, %v607
      %v616 = vmul.f32 %v604, %v607
      %v617 = vpack.c.bf16 %v610, %v609
      %v618 = vpack.c.bf16 %v612, %v611
      %v619 = vpack.c.bf16 %v614, %v613
      %v620 = vpack.c.bf16 %v616, %v615
      %v621 = vld [vmem:[%s6] sm:$0xf]
      %v622 = vld [vmem:[%s6 + $0x4] sm:$0xf]
      %v623 = vld [vmem:[%s6 + $0x8] sm:$0xf]
      %v624 = vld [vmem:[%s6 + $0xc] sm:$0xf]
      %v625 = vld [vmem:[%s6 + $0x10] sm:$0xf]
      %v626 = vld [vmem:[%s6 + $0x14] sm:$0xf]
      %v627 = vld [vmem:[%s6 + $0x18] sm:$0xf]
      %v628 = vld [vmem:[%s6 + $0x1c] sm:$0xf]
      %v629 = vld [vmem:[%s6 + $0x20] sm:$0xf]
      %v630 = vld [vmem:[%s6 + $0x24] sm:$0xf]
      %v631 = vld [vmem:[%s6 + $0x28] sm:$0xf]
      %v632 = vld [vmem:[%s6 + $0x2c] sm:$0xf]
      %v633 = vld [vmem:[%s6 + $0x30] sm:$0xf]
      %v634 = vld [vmem:[%s6 + $0x34] sm:$0xf]
      %v635 = vld [vmem:[%s6 + $0x38] sm:$0xf]
      %v636 = vld [vmem:[%s6 + $0x3c] sm:$0xf]
      %v653 = vunpack.c.l.b16 %v621
      %v654 = vunpack.c.l.b16 %v622
      %v655 = vunpack.c.l.b16 %v623
      %v656 = vunpack.c.l.b16 %v624
      %v657 = vunpack.c.l.b16 %v625
      %v658 = vunpack.c.l.b16 %v626
      %v659 = vunpack.c.l.b16 %v627
      %v660 = vunpack.c.l.b16 %v628
      %v661 = vunpack.c.l.b16 %v629
      %v662 = vunpack.c.l.b16 %v630
      %v663 = vunpack.c.l.b16 %v631
      %v664 = vunpack.c.l.b16 %v632
      %v665 = vunpack.c.l.b16 %v633
      %v666 = vunpack.c.l.b16 %v634
      %v667 = vunpack.c.l.b16 %v635
      %v668 = vunpack.c.l.b16 %v636
      %v669 = vpack.c.b16 %v654, %v653
      %v670 = vpack.c.b16 %v656, %v655
      %v671 = vpack.c.b16 %v658, %v657
      %v672 = vpack.c.b16 %v660, %v659
      %v673 = vpack.c.b16 %v662, %v661
      %v674 = vpack.c.b16 %v664, %v663
      %v675 = vpack.c.b16 %v666, %v665
      %v676 = vpack.c.b16 %v668, %v667
      %685 = vmatpush.bf16.msra.mxu0 %v676
      %686 = vmatpush.bf16.msra.mxu0 %v675
      %687 = vmatpush.bf16.msra.mxu0 %v674
      %688 = vmatpush.bf16.msra.mxu0 %v673
      %689 = vmatpush.bf16.msra.mxu0 %v672
      %690 = vmatpush.bf16.msra.mxu0 %v671
      %691 = vmatpush.bf16.msra.mxu0 %v670
      %692 = vmatpush.bf16.msra.mxu0 %v669
      %693 = vmatmul.bf16.gmra.mxu0 %v617
      %v694 = vpop.f32.mrf.mxu0
      %v695 = vadd.f32 0.0, %v694
      %v696 = vpop.f32.mrf.mxu0
      %v697 = vadd.f32 0.0, %v696
      %698 = vmatmul.bf16.gmra.mxu0 %v618
      %v699 = vpop.f32.mrf.mxu0
      %v700 = vadd.f32 0.0, %v699
      %v701 = vpop.f32.mrf.mxu0
      %v702 = vadd.f32 0.0, %v701
      %703 = vmatmul.bf16.gmra.mxu0 %v619
      %v704 = vpop.f32.mrf.mxu0
      %v705 = vadd.f32 0.0, %v704
      %v706 = vpop.f32.mrf.mxu0
      %v707 = vadd.f32 0.0, %v706
      %708 = vmatmul.bf16.gmra.mxu0 %v620
      %v709 = vpop.f32.mrf.mxu0
      %v710 = vadd.f32 0.0, %v709
      %v711 = vpop.f32.mrf.mxu0
      %v712 = vadd.f32 0.0, %v711
      %713 = vdwg.mxu0
      %v714 = vld [vmem:[%s7] sm:$0x1]
      %v716 = vperm.slane %v714, 0
      %v718 = vmul.f32 %v695, %v716
      %v719 = vmul.f32 %v697, %v716
      %v720 = vmul.f32 %v700, %v716
      %v721 = vmul.f32 %v702, %v716
      %v722 = vmul.f32 %v705, %v716
      %v723 = vmul.f32 %v707, %v716
      %v724 = vmul.f32 %v710, %v716
      %v725 = vmul.f32 %v712, %v716
      %v726 = vld [vmem:[%s8] sm:$0x1]
      %v728 = vperm.slane %v726, 0
      %v730 = vadd.f32 %v718, %v728
      %v731 = vadd.f32 %v719, %v728
      %v732 = vadd.f32 %v720, %v728
      %v733 = vadd.f32 %v721, %v728
      %v734 = vadd.f32 %v722, %v728
      %v735 = vadd.f32 %v723, %v728
      %v736 = vadd.f32 %v724, %v728
      %v737 = vadd.f32 %v725, %v728
      %v738 = vpack.c.bf16 %v730, %v730
      %v739 = vpack.c.bf16 %v731, %v731
      %v740 = vpack.c.bf16 %v732, %v732
      %v741 = vpack.c.bf16 %v733, %v733
      %v742 = vpack.c.bf16 %v734, %v734
      %v743 = vpack.c.bf16 %v735, %v735
      %v744 = vpack.c.bf16 %v736, %v736
      %v745 = vpack.c.bf16 %v737, %v737
      %746 = vst [vmem:[%s384] sm:$0xf] %v738
      %747 = vst [vmem:[%s384 + $0x4] sm:$0xf] %v739
      %748 = vst [vmem:[%s384 + $0x8] sm:$0xf] %v740
      %749 = vst [vmem:[%s384 + $0xc] sm:$0xf] %v741
      %750 = vst [vmem:[%s384 + $0x10] sm:$0xf] %v742
      %751 = vst [vmem:[%s384 + $0x14] sm:$0xf] %v743
      %752 = vst [vmem:[%s384 + $0x18] sm:$0xf] %v744
      %753 = vst [vmem:[%s384 + $0x1c] sm:$0xf] %v745
      %s754 = smul.u32 8, %s25
      %p755 = scmp.lt.s32.totalorder %s24, 1
      %s756 = scalar_select %p755, %s24, 1
      %p757 = scmp.lt.s32.totalorder %s754, 7
      %s758 = scalar_select %p757, %s754, 7
      %s759 = smul.addr %s756, 8
      %s760 = sadd.s32 %s758, %s759
      %s761 = smul.addr %s760, 4
      %s762 = scalar_lea.vmem %s9, %s761
      // Predicated region
      $region61: #{_lambda_.8} parent=55 // pred_check
        %p763 = pneg %p253
      $region62: #{_lambda_.8} parent=55 // pred_check_branch
        %765 = sbr.rel (%p763) target = $region64
      $region63: #{_lambda_.8} parent=55 // pred_region
        %s766 = smul.u32 8, %s25
      $region64: #{_lambda_.8} parent=55 // pred_fallthru
        _
    $region56: #{_lambda_.8} parent=5 // pred_fallthru
      _
    %p767 = scmp.le.s32.totalorder 2, %s15
    // Predicated region
    $region65: #{_lambda_.8} parent=5 // pred_check
      %p768 = pneg %p767
    $region66: #{_lambda_.8} parent=5 // pred_check_branch
      %770 = sbr.rel (%p768) target = $region68
    $region67: #{_lambda_.8} parent=5 // pred_region
      %s771 = ssub.s32 %s15, 2
      // Predicated region
      $region69: #{_lambda_.8} parent=67 // pred_check
        %p772 = pneg %p259
      $region70: #{_lambda_.8} parent=67 // pred_check_branch
        %774 = sbr.rel (%p772) target = $region72
      $region71: #{_lambda_.8} parent=67 // pred_region
        %s775 = smul.u32 8, %s27
        %p776 = scmp.lt.s32.totalorder %s26, 1
        %s777 = scalar_select %p776, %s26, 1
        %p778 = scmp.lt.s32.totalorder %s775, 7
        %s779 = scalar_select %p778, %s775, 7
        %s780 = smul.addr %s777, 8
        %s781 = sadd.s32 %s779, %s780
        %s782 = smul.addr %s781, 4
        %s783 = scalar_lea.vmem %s9, %s782
      $region72: #{_lambda_.8} parent=67 // pred_fallthru
        _
    $region68: #{_lambda_.8} parent=5 // pred_fallthru
      _
  $region6: #{_lambda_.8} parent=0 // loop_footer
    %s19 = sadd.s32 1, %s15
  $region7: #{_lambda_.8} parent=0 // loop_footer_branch
    %14 = sbr.rel target = $region3
  $region8: #{_lambda_.8} parent=0 // loop_exit
    _

// kernel: _lambda_.7
$region0: #{_lambda_.7}
  #allocation0 [shape = 'u32[]', space=smem, size = 0x4, offset = 0x4, fixed_abs, tag = 'smem constant byte address 0x4 - core index']
  #allocation1 [shape = 'u32[72,128]{1,0:T(1,128)}', space=vmem, size = 0x9000, scoped, tag = 'internal scratch']
  #allocation2 [shape = 'f32[10,10,128]{2,1,0:T(8,128)}', space=vmem, size = 0x14000, scoped, tag = 'scratch operand']
  %s0 = inlined_call_operand.vmem [shape: bf16[2,8,8,128], index: 0, kind: input, shape index: {}]
  %s1 = inlined_call_operand.vmem [shape: f32[9,128], index: 1, kind: input, shape index: {}]
  %s2 = inlined_call_operand.vmem [shape: f32[1,128], index: 2, kind: input, shape index: {}]
  %s3 = inlined_call_operand.vmem [shape: f32[1,128], index: 3, kind: input, shape index: {}]
  %s4 = inlined_call_operand.vmem [shape: bf16[2,8,8,128], index: 4, kind: output, shape index: {0}]
  %s5 = inlined_call_operand.vmem [shape: f32[2,1,128], index: 5, kind: output, shape index: {1}]
  %6 = xla_tuple %s4, %s5
  %s7 = sld [smem:[#allocation0]]
  $region61: #{_lambda_.7} parent=0
    _
  %s9 = ssub.s32 1, %s7
  %s10 = scalar_select 0, %s9, %s7
  loop: start=0, step=1, limit=4
  $region2: #{_lambda_.7} parent=0 // loop_pre_header
    _
  $region3: #{_lambda_.7} parent=0 // loop_header
    %s12 = sphi 0, %s16
    %p13 = scmp.ge.s32.totalorder %s12, 4
    %s19 = sphi 0, %s31
    %s20 = sphi 0, %s27
    %s21 = sphi 0, %s19
    %s22 = sphi 0, %s20
    %s23 = sphi 0, %s21
    %s24 = sphi 0, %s22
    %s34 = sphi 0, %s36
    %s37 = sphi 0, %s34
    %s38 = sphi 0, %s37
    %s54 = sphi 0, %s38
    %s58 = sphi 0, %s58
    %s60 = sphi 0, %s58
    %s61 = sphi 0, %s60
    %s75 = sphi 0, %s61
    %s79 = sphi 0, %s79
    %s81 = sphi 0, %s79
    %s82 = sphi 0, %s81
    %s96 = sphi 0, %s82
    %s100 = sphi 0, %s100
    %s102 = sphi 0, %s100
    %s103 = sphi 0, %s102
    %s117 = sphi 0, %s103
    %s125 = sphi 0, %s127
    %s128 = sphi 0, %s125
    %s129 = sphi 0, %s128
    %s145 = sphi 0, %s129
    %s151 = sphi 0, %s153
    %s154 = sphi 0, %s151
    %s155 = sphi 0, %s154
    %s171 = sphi 0, %s155
  $region4: #{_lambda_.7} parent=0 // loop_header_branch
    %15 = sbr.rel (%p13) target = $region8
  $region5: #{_lambda_.7} parent=0 // loop_body
    %s17 = ssub.s32 %s12, 1
    %s18 = ssub.s32 %s12, 2
    %s25 = sadd.s32 1, %s20
    %p26 = scmp.ge.s32.totalorder %s25, 1
    %s27 = scalar_select %p26, 0, %s25
    %s28 = sadd.s32 1, %s19
    %s29 = scalar_select %p26, %s28, %s19
    %p30 = scmp.ge.s32.totalorder %s29, 2
    %s31 = scalar_select %p30, 0, %s29
    %s32 = ssub.s32 %s19, %s31
    %p33 = scmp.eq.s32.totalorder %s32, 0
    %s35 = sadd.s32 %s34, 1
    %s36 = scalar_select %p33, %s34, %s35
    %p39 = pneg %p33
    %p40 = scmp.eq.s32.totalorder %s12, 1
    %p41 = por %p39, %p40
    %p42 = scmp.ne.s32.totalorder %s34, %s37
    %p43 = scmp.eq.s32.totalorder %s12, 0
    %p44 = por %p42, %p43
    %p45 = scmp.ne.s32.totalorder %s34, %s37
    %p46 = scmp.eq.s32.totalorder %s17, 1
    %p47 = por %p45, %p46
    %p48 = scmp.ne.s32.totalorder %s37, %s38
    %p49 = scmp.eq.s32.totalorder %s17, 0
    %p50 = por %p48, %p49
    %p51 = scmp.ne.s32.totalorder %s37, %s38
    %p52 = scmp.eq.s32.totalorder %s18, 1
    %p53 = por %p51, %p52
    %p55 = scmp.ne.s32.totalorder %s38, %s54
    %p56 = scmp.eq.s32.totalorder %s18, 0
    %p57 = por %p55, %p56
    %s59 = sadd.s32 %s58, 1
    %p62 = scmp.eq.s32.totalorder %s12, 1
    %p63 = scmp.ne.s32.totalorder %s58, %s60
    %p64 = scmp.eq.s32.totalorder %s12, 0
    %p65 = por %p63, %p64
    %p66 = scmp.ne.s32.totalorder %s58, %s60
    %p67 = scmp.eq.s32.totalorder %s17, 1
    %p68 = por %p66, %p67
    %p69 = scmp.ne.s32.totalorder %s60, %s61
    %p70 = scmp.eq.s32.totalorder %s17, 0
    %p71 = por %p69, %p70
    %p72 = scmp.ne.s32.totalorder %s60, %s61
    %p73 = scmp.eq.s32.totalorder %s18, 1
    %p74 = por %p72, %p73
    %p76 = scmp.ne.s32.totalorder %s61, %s75
    %p77 = scmp.eq.s32.totalorder %s18, 0
    %p78 = por %p76, %p77
    %s80 = sadd.s32 %s79, 1
    %p83 = scmp.eq.s32.totalorder %s12, 1
    %p84 = scmp.ne.s32.totalorder %s79, %s81
    %p85 = scmp.eq.s32.totalorder %s12, 0
    %p86 = por %p84, %p85
    %p87 = scmp.ne.s32.totalorder %s79, %s81
    %p88 = scmp.eq.s32.totalorder %s17, 1
    %p89 = por %p87, %p88
    %p90 = scmp.ne.s32.totalorder %s81, %s82
    %p91 = scmp.eq.s32.totalorder %s17, 0
    %p92 = por %p90, %p91
    %p93 = scmp.ne.s32.totalorder %s81, %s82
    %p94 = scmp.eq.s32.totalorder %s18, 1
    %p95 = por %p93, %p94
    %p97 = scmp.ne.s32.totalorder %s82, %s96
    %p98 = scmp.eq.s32.totalorder %s18, 0
    %p99 = por %p97, %p98
    %s101 = sadd.s32 %s100, 1
    %p104 = scmp.eq.s32.totalorder %s12, 1
    %p105 = scmp.ne.s32.totalorder %s100, %s102
    %p106 = scmp.eq.s32.totalorder %s12, 0
    %p107 = por %p105, %p106
    %p108 = scmp.ne.s32.totalorder %s100, %s102
    %p109 = scmp.eq.s32.totalorder %s17, 1
    %p110 = por %p108, %p109
    %p111 = scmp.ne.s32.totalorder %s102, %s103
    %p112 = scmp.eq.s32.totalorder %s17, 0
    %p113 = por %p111, %p112
    %p114 = scmp.ne.s32.totalorder %s102, %s103
    %p115 = scmp.eq.s32.totalorder %s18, 1
    %p116 = por %p114, %p115
    %p118 = scmp.ne.s32.totalorder %s103, %s117
    %p119 = scmp.eq.s32.totalorder %s18, 0
    %p120 = por %p118, %p119
    %s121 = ssub.s32 %s19, %s31
    %s122 = ssub.s32 %s20, %s27
    %s123 = sor.u32 %s121, %s122
    %p124 = scmp.eq.s32.totalorder %s123, 0
    %s126 = sadd.s32 %s125, 1
    %s127 = scalar_select %p124, %s125, %s126
    %p130 = pneg %p124
    %p131 = scmp.eq.s32.totalorder %s12, 1
    %p132 = por %p130, %p131
    %p133 = scmp.ne.s32.totalorder %s125, %s128
    %p134 = scmp.eq.s32.totalorder %s12, 0
    %p135 = por %p133, %p134
    %p136 = scmp.ne.s32.totalorder %s125, %s128
    %p137 = scmp.eq.s32.totalorder %s17, 1
    %p138 = por %p136, %p137
    %p139 = scmp.ne.s32.totalorder %s128, %s129
    %p140 = scmp.eq.s32.totalorder %s17, 0
    %p141 = por %p139, %p140
    %p142 = scmp.ne.s32.totalorder %s128, %s129
    %p143 = scmp.eq.s32.totalorder %s18, 1
    %p144 = por %p142, %p143
    %p146 = scmp.ne.s32.totalorder %s129, %s145
    %p147 = scmp.eq.s32.totalorder %s18, 0
    %p148 = por %p146, %p147
    %s149 = ssub.s32 %s19, %s31
    %p150 = scmp.eq.s32.totalorder %s149, 0
    %s152 = sadd.s32 %s151, 1
    %s153 = scalar_select %p150, %s151, %s152
    %p156 = pneg %p150
    %p157 = scmp.eq.s32.totalorder %s12, 1
    %p158 = por %p156, %p157
    %p159 = scmp.ne.s32.totalorder %s151, %s154
    %p160 = scmp.eq.s32.totalorder %s12, 0
    %p161 = por %p159, %p160
    %p162 = scmp.ne.s32.totalorder %s151, %s154
    %p163 = scmp.eq.s32.totalorder %s17, 1
    %p164 = por %p162, %p163
    %p165 = scmp.ne.s32.totalorder %s154, %s155
    %p166 = scmp.eq.s32.totalorder %s17, 0
    %p167 = por %p165, %p166
    %p168 = scmp.ne.s32.totalorder %s154, %s155
    %p169 = scmp.eq.s32.totalorder %s18, 1
    %p170 = por %p168, %p169
    %p172 = scmp.ne.s32.totalorder %s155, %s171
    %p173 = scmp.eq.s32.totalorder %s18, 0
    %p174 = por %p172, %p173
    %p175 = scmp.le.s32.totalorder 1, %s12
    %p176 = scmp.lt.s32.totalorder %s12, 3
    %p177 = pnand %p175, %p176
    %p178 = pneg %p177
    // Predicated region
    $region9: #{_lambda_.7} parent=5 // pred_check
      _
    $region10: #{_lambda_.7} parent=5 // pred_check_branch
      %180 = sbr.rel (%p177) target = $region12
    $region11: #{_lambda_.7} parent=5 // pred_region
      %s181 = ssub.s32 %s12, 1
      // Predicated region
      $region13: #{_lambda_.7} parent=11 // pred_check
        %p182 = pneg %p71
      $region14: #{_lambda_.7} parent=11 // pred_check_branch
        %184 = sbr.rel (%p182) target = $region16
      $region15: #{_lambda_.7} parent=11 // pred_region
        _
      $region16: #{_lambda_.7} parent=11 // pred_fallthru
        _
      // Predicated region
      $region17: #{_lambda_.7} parent=11 // pred_check
        %p185 = pneg %p92
      $region18: #{_lambda_.7} parent=11 // pred_check_branch
        %187 = sbr.rel (%p185) target = $region20
      $region19: #{_lambda_.7} parent=11 // pred_region
        _
      $region20: #{_lambda_.7} parent=11 // pred_fallthru
        _
      // Predicated region
      $region21: #{_lambda_.7} parent=11 // pred_check
        %p188 = pneg %p113
      $region22: #{_lambda_.7} parent=11 // pred_check_branch
        %190 = sbr.rel (%p188) target = $region24
      $region23: #{_lambda_.7} parent=11 // pred_region
        _
      $region24: #{_lambda_.7} parent=11 // pred_fallthru
        _
    $region12: #{_lambda_.7} parent=5 // pred_fallthru
      _
    %p191 = scmp.lt.s32.totalorder %s12, 2
    // Predicated region
    $region25: #{_lambda_.7} parent=5 // pred_check
      %p192 = pneg %p191
    $region26: #{_lambda_.7} parent=5 // pred_check_branch
      %194 = sbr.rel (%p192) target = $region28
    $region27: #{_lambda_.7} parent=5 // pred_region
      // Predicated region
      $region29: #{_lambda_.7} parent=27 // pred_check
        %p195 = pneg %p44
      $region30: #{_lambda_.7} parent=27 // pred_check_branch
        %197 = sbr.rel (%p195) target = $region32
      $region31: #{_lambda_.7} parent=27 // pred_region
        %p198 = scmp.lt.s32.totalorder %s19, 1
        %s199 = scalar_select %p198, %s19, 1
        %s200 = smul.addr %s199, 8
        %s201 = smul.addr %s200, 4
        %s202 = scalar_lea.vmem %s0, %s201
      $region32: #{_lambda_.7} parent=27 // pred_fallthru
        _
    $region28: #{_lambda_.7} parent=5 // pred_fallthru
      _
    %p203 = scmp.le.s32.totalorder 1, %s12
    %p204 = scmp.lt.s32.totalorder %s12, 3
    %p205 = pnand %p203, %p204
    %p206 = pneg %p205
    // Predicated region
    $region33: #{_lambda_.7} parent=5 // pred_check
      _
    $region34: #{_lambda_.7} parent=5 // pred_check_branch
      %208 = sbr.rel (%p205) target = $region36
    $region35: #{_lambda_.7} parent=5 // pred_region
      %s209 = ssub.s32 %s12, 1
      %p210 = scmp.lt.s32.totalorder %s21, 1
      %s211 = scalar_select %p210, %s21, 1
      %s212 = smul.addr %s211, 8
      %s213 = smul.addr %s212, 4
      %s214 = scalar_lea.vmem %s0, %s213
      %p215 = pneg %p50
      %p216 = pneg %p47
      %p217 = pneg %p71
      %p218 = pneg %p68
      %p219 = pneg %p92
      %p220 = pneg %p89
      %p221 = pneg %p113
      %p222 = pneg %p110
      %p223 = pneg %p141
      %p224 = pneg %p138
      %s225 = smul.u32 8, %s22
      %p226 = scmp.lt.s32.totalorder %s21, 1
      %s227 = scalar_select %p226, %s21, 1
      %p228 = scmp.lt.s32.totalorder %s225, 7
      %s229 = scalar_select %p228, %s225, 7
      %s230 = smul.addr %s227, 8
      %s231 = sadd.s32 %s229, %s230
      %s232 = smul.addr %s231, 4
      %s233 = scalar_lea.vmem %s4, %s232
      %p234 = pneg %p167
      %p235 = pneg %p164
      %p236 = scmp.lt.s32.totalorder %s21, 1
      %s237 = scalar_select %p236, %s21, 1
      %s238 = scalar_lea.vmem %s5, %s237
      %p239 = scmp.lt.s32.totalorder %s21, 1
      %s240 = scalar_select %p239, %s21, 1
      %s241 = smul.addr %s240, 8
      %s242 = smul.addr %s241, 4
      %s243 = scalar_lea.vmem %s0, %s242
      %s244 = smul.u32 8, %s22
      %p245 = scmp.lt.s32.totalorder %s21, 1
      %s246 = scalar_select %p245, %s21, 1
      %p247 = scmp.lt.s32.totalorder %s244, 7
      %s248 = scalar_select %p247, %s244, 7
      %s249 = smul.addr %s246, 8
      %s250 = sadd.s32 %s248, %s249
      %s251 = smul.addr %s250, 4
      %s252 = scalar_lea.vmem %s4, %s251
      %s253 = smul.u32 8, %s22
      %p254 = scmp.lt.s32.totalorder %s21, 1
      %s255 = scalar_select %p254, %s21, 1
      %s256 = scalar_lea.vmem %s5, %s255
      %p257 = scmp.eq.s32.totalorder %s22, 0
      // Predicated region
      $region37: #{_lambda_.7} parent=35 // pred_check
        %p258 = pneg %p257
      $region38: #{_lambda_.7} parent=35 // pred_check_branch
        %260 = sbr.rel (%p258) target = $region40
      $region39: #{_lambda_.7} parent=35 // pred_region
        %261 = vst [vmem:[#allocation2] sm:$0xff] 0.0
        %262 = vst [vmem:[#allocation2 + $0x8] sm:$0x3] 0.0
        %263 = vst [vmem:[#allocation2 + $0x10] sm:$0xff] 0.0
        %264 = vst [vmem:[#allocation2 + $0x18] sm:$0x3] 0.0
        %265 = vst [vmem:[#allocation2 + $0x20] sm:$0xff] 0.0
        %266 = vst [vmem:[#allocation2 + $0x28] sm:$0x3] 0.0
        %267 = vst [vmem:[#allocation2 + $0x30] sm:$0xff] 0.0
        %268 = vst [vmem:[#allocation2 + $0x38] sm:$0x3] 0.0
        %269 = vst [vmem:[#allocation2 + $0x40] sm:$0xff] 0.0
        %270 = vst [vmem:[#allocation2 + $0x48] sm:$0x3] 0.0
        %271 = vst [vmem:[#allocation2 + $0x50] sm:$0xff] 0.0
        %272 = vst [vmem:[#allocation2 + $0x58] sm:$0x3] 0.0
        %273 = vst [vmem:[#allocation2 + $0x60] sm:$0xff] 0.0
        %274 = vst [vmem:[#allocation2 + $0x68] sm:$0x3] 0.0
        %275 = vst [vmem:[#allocation2 + $0x70] sm:$0xff] 0.0
        %276 = vst [vmem:[#allocation2 + $0x78] sm:$0x3] 0.0
        %277 = vst [vmem:[#allocation2 + $0x80] sm:$0xff] 0.0
        %278 = vst [vmem:[#allocation2 + $0x88] sm:$0x3] 0.0
        %279 = vst [vmem:[#allocation2 + $0x90] sm:$0xff] 0.0
        %280 = vst [vmem:[#allocation2 + $0x98] sm:$0x3] 0.0
        %v281 = vld [vmem:[%s243] sm:$0xf]
        %v282 = vld [vmem:[%s243 + $0x4] sm:$0xf]
        %v283 = vld [vmem:[%s243 + $0x8] sm:$0xf]
        %v284 = vld [vmem:[%s243 + $0xc] sm:$0xf]
        %v285 = vld [vmem:[%s243 + $0x10] sm:$0xf]
        %v286 = vld [vmem:[%s243 + $0x14] sm:$0xf]
        %v287 = vld [vmem:[%s243 + $0x18] sm:$0xf]
        %v288 = vld [vmem:[%s243 + $0x1c] sm:$0xf]
        %v289 = vunpack.c.l.bf16 %v281
        %v290 = vunpack.c.l.bf16 %v282
        %v291 = vunpack.c.l.bf16 %v283
        %v292 = vunpack.c.l.bf16 %v284
        %v293 = vunpack.c.l.bf16 %v285
        %v294 = vunpack.c.l.bf16 %v286
        %v295 = vunpack.c.l.bf16 %v287
        %v296 = vunpack.c.l.bf16 %v288
        %s297 = scalar_lea.vmem [#allocation2], 16
        %298 = vst [vmem:[%s297 + $0x1] sm:$0xff] %v289
        %299 = vst [vmem:[%s297 + $0x11] sm:$0xff] %v290
        %300 = vst [vmem:[%s297 + $0x21] sm:$0xff] %v291
        %301 = vst [vmem:[%s297 + $0x31] sm:$0xff] %v292
        %302 = vst [vmem:[%s297 + $0x41] sm:$0xff] %v293
        %303 = vst [vmem:[%s297 + $0x51] sm:$0xff] %v294
        %304 = vst [vmem:[%s297 + $0x61] sm:$0xff] %v295
        %305 = vst [vmem:[%s297 + $0x71] sm:$0xff] %v296
        %306 = vst [vmem:[%s256] sm:$0x1] 0.0
      $region40: #{_lambda_.7} parent=35 // pred_fallthru
        _
      %s307 = smul.u32 %s22, 8
      %s308 = smul.u32 %s307, 16
      %s309 = scalar_lea.vmem [#allocation2], %s308
      %v310 = vld [vmem:[%s309] sm:$0xff]
      %v311 = vld [vmem:[%s309 + $0x8] sm:$0x3]
      %v312 = vld [vmem:[%s309 + $0x10] sm:$0xff]
      %v313 = vld [vmem:[%s309 + $0x18] sm:$0x3]
      %v314 = vld [vmem:[%s309 + $0x20] sm:$0xff]
      %v315 = vld [vmem:[%s309 + $0x28] sm:$0x3]
      %v316 = vld [vmem:[%s309 + $0x30] sm:$0xff]
      %v317 = vld [vmem:[%s309 + $0x38] sm:$0x3]
      %v318 = vld [vmem:[%s309 + $0x40] sm:$0xff]
      %v319 = vld [vmem:[%s309 + $0x48] sm:$0x3]
      %v320 = vld [vmem:[%s309 + $0x50] sm:$0xff]
      %v321 = vld [vmem:[%s309 + $0x58] sm:$0x3]
      %v322 = vld [vmem:[%s309 + $0x60] sm:$0xff]
      %v323 = vld [vmem:[%s309 + $0x68] sm:$0x3]
      %v324 = vld [vmem:[%s309 + $0x70] sm:$0xff]
      %v325 = vld [vmem:[%s309 + $0x78] sm:$0x3]
      %v326 = vld [vmem:[%s1] sm:$0x1]
      %v327 = vperm.slane %v326, 0
      %v328 = vmul.f32 %v310, %v327
      %v329 = vmul.f32 %v312, %v327
      %v330 = vmul.f32 %v314, %v327
      %v331 = vmul.f32 %v316, %v327
      %v332 = vmul.f32 %v318, %v327
      %v333 = vmul.f32 %v320, %v327
      %v334 = vmul.f32 %v322, %v327
      %v335 = vmul.f32 %v324, %v327
      %v336 = vadd.f32 %v328, 0.0
      %v337 = vadd.f32 %v329, 0.0
      %v338 = vadd.f32 %v330, 0.0
      %v339 = vadd.f32 %v331, 0.0
      %v340 = vadd.f32 %v332, 0.0
      %v341 = vadd.f32 %v333, 0.0
      %v342 = vadd.f32 %v334, 0.0
      %v343 = vadd.f32 %v335, 0.0
      %v344 = vld [vmem:[%s1 + $0x1] sm:$0x1]
      %v345 = vperm.slane %v344, 0
      %v346 = vmul.f32 %v310, %v345
      %v347 = vmul.f32 %v311, %v345
      %v348 = vmul.f32 %v312, %v345
      %v349 = vmul.f32 %v313, %v345
      %v350 = vmul.f32 %v314, %v345
      %v351 = vmul.f32 %v315, %v345
      %v352 = vmul.f32 %v316, %v345
      %v353 = vmul.f32 %v317, %v345
      %v354 = vmul.f32 %v318, %v345
      %v355 = vmul.f32 %v319, %v345
      %v356 = vmul.f32 %v320, %v345
      %v357 = vmul.f32 %v321, %v345
      %v358 = vmul.f32 %v322, %v345
      %v359 = vmul.f32 %v323, %v345
      %v360 = vmul.f32 %v324, %v345
      %v361 = vmul.f32 %v325, %v345
      %vm378 = vcmask 1046528
      %v379 = vrot.slane %v346, 1
      %v380 = vrot.slane %v347, 1
      %v381 = vsel %vm378, %v379, %v380
      %v382 = vrot.slane %v348, 1
      %v383 = vrot.slane %v349, 1
      %v384 = vsel %vm378, %v382, %v383
      %v385 = vrot.slane %v350, 1
      %v386 = vrot.slane %v351, 1
      %v387 = vsel %vm378, %v385, %v386
      %v388 = vrot.slane %v352, 1
      %v389 = vrot.slane %v353, 1
      %v390 = vsel %vm378, %v388, %v389
      %v391 = vrot.slane %v354, 1
      %v392 = vrot.slane %v355, 1
      %v393 = vsel %vm378, %v391, %v392
      %v394 = vrot.slane %v356, 1
      %v395 = vrot.slane %v357, 1
      %v396 = vsel %vm378, %v394, %v395
      %v397 = vrot.slane %v358, 1
      %v398 = vrot.slane %v359, 1
      %v399 = vsel %vm378, %v397, %v398
      %v400 = vrot.slane %v360, 1
      %v401 = vrot.slane %v361, 1
      %v402 = vsel %vm378, %v400, %v401
      %v411 = vadd.f32 %v336, %v381
      %v412 = vadd.f32 %v337, %v384
      %v413 = vadd.f32 %v338, %v387
      %v414 = vadd.f32 %v339, %v390
      %v415 = vadd.f32 %v340, %v393
      %v416 = vadd.f32 %v341, %v396
      %v417 = vadd.f32 %v342, %v399
      %v418 = vadd.f32 %v343, %v402
      %v419 = vld [vmem:[%s1 + $0x2] sm:$0x1]
      %v420 = vperm.slane %v419, 0
      %v421 = vmul.f32 %v310, %v420
      %v422 = vmul.f32 %v311, %v420
      %v423 = vmul.f32 %v312, %v420
      %v424 = vmul.f32 %v313, %v420
      %v425 = vmul.f32 %v314, %v420
      %v426 = vmul.f32 %v315, %v420
      %v427 = vmul.f32 %v316, %v420
      %v428 = vmul.f32 %v317, %v420
      %v429 = vmul.f32 %v318, %v420
      %v430 = vmul.f32 %v319, %v420
      %v431 = vmul.f32 %v320, %v420
      %v432 = vmul.f32 %v321, %v420
      %v433 = vmul.f32 %v322, %v420
      %v434 = vmul.f32 %v323, %v420
      %v435 = vmul.f32 %v324, %v420
      %v436 = vmul.f32 %v325, %v420
      %vm453 = vcmask 1045504
      %v454 = vrot.slane %v421, 2
      %v455 = vrot.slane %v422, 2
      %v456 = vsel %vm453, %v454, %v455
      %v457 = vrot.slane %v423, 2
      %v458 = vrot.slane %v424, 2
      %v459 = vsel %vm453, %v457, %v458
      %v460 = vrot.slane %v425, 2
      %v461 = vrot.slane %v426, 2
      %v462 = vsel %vm453, %v460, %v461
      %v463 = vrot.slane %v427, 2
      %v464 = vrot.slane %v428, 2
      %v465 = vsel %vm453, %v463, %v464
      %v466 = vrot.slane %v429, 2
      %v467 = vrot.slane %v430, 2
      %v468 = vsel %vm453, %v466, %v467
      %v469 = vrot.slane %v431, 2
      %v470 = vrot.slane %v432, 2
      %v471 = vsel %vm453, %v469, %v470
      %v472 = vrot.slane %v433, 2
      %v473 = vrot.slane %v434, 2
      %v474 = vsel %vm453, %v472, %v473
      %v475 = vrot.slane %v435, 2
      %v476 = vrot.slane %v436, 2
      %v477 = vsel %vm453, %v475, %v476
      %v486 = vadd.f32 %v411, %v456
      %v487 = vadd.f32 %v412, %v459
      %v488 = vadd.f32 %v413, %v462
      %v489 = vadd.f32 %v414, %v465
      %v490 = vadd.f32 %v415, %v468
      %v491 = vadd.f32 %v416, %v471
      %v492 = vadd.f32 %v417, %v474
      %v493 = vadd.f32 %v418, %v477
      %s494 = sadd.s32 %s307, 1
      %s495 = smul.u32 %s494, 16
      %s496 = scalar_lea.vmem [#allocation2], %s495
      %v497 = vld [vmem:[%s496] sm:$0xff]
      %v498 = vld [vmem:[%s496 + $0x8] sm:$0x3]
      %v499 = vld [vmem:[%s496 + $0x10] sm:$0xff]
      %v500 = vld [vmem:[%s496 + $0x18] sm:$0x3]
      %v501 = vld [vmem:[%s496 + $0x20] sm:$0xff]
      %v502 = vld [vmem:[%s496 + $0x28] sm:$0x3]
      %v503 = vld [vmem:[%s496 + $0x30] sm:$0xff]
      %v504 = vld [vmem:[%s496 + $0x38] sm:$0x3]
      %v505 = vld [vmem:[%s496 + $0x40] sm:$0xff]
      %v506 = vld [vmem:[%s496 + $0x48] sm:$0x3]
      %v507 = vld [vmem:[%s496 + $0x50] sm:$0xff]
      %v508 = vld [vmem:[%s496 + $0x58] sm:$0x3]
      %v509 = vld [vmem:[%s496 + $0x60] sm:$0xff]
      %v510 = vld [vmem:[%s496 + $0x68] sm:$0x3]
      %v511 = vld [vmem:[%s496 + $0x70] sm:$0xff]
      %v512 = vld [vmem:[%s496 + $0x78] sm:$0x3]
      %v513 = vld [vmem:[%s1 + $0x3] sm:$0x1]
      %v514 = vperm.slane %v513, 0
      %v515 = vmul.f32 %v497, %v514
      %v516 = vmul.f32 %v499, %v514
      %v517 = vmul.f32 %v501, %v514
      %v518 = vmul.f32 %v503, %v514
      %v519 = vmul.f32 %v505, %v514
      %v520 = vmul.f32 %v507, %v514
      %v521 = vmul.f32 %v509, %v514
      %v522 = vmul.f32 %v511, %v514
      %v523 = vadd.f32 %v486, %v515
      %v524 = vadd.f32 %v487, %v516
      %v525 = vadd.f32 %v488, %v517
      %v526 = vadd.f32 %v489, %v518
      %v527 = vadd.f32 %v490, %v519
      %v528 = vadd.f32 %v491, %v520
      %v529 = vadd.f32 %v492, %v521
      %v530 = vadd.f32 %v493, %v522
      %v531 = vld [vmem:[%s1 + $0x4] sm:$0x1]
      %v532 = vperm.slane %v531, 0
      %v533 = vmul.f32 %v497, %v532
      %v534 = vmul.f32 %v498, %v532
      %v535 = vmul.f32 %v499, %v532
      %v536 = vmul.f32 %v500, %v532
      %v537 = vmul.f32 %v501, %v532
      %v538 = vmul.f32 %v502, %v532
      %v539 = vmul.f32 %v503, %v532
      %v540 = vmul.f32 %v504, %v532
      %v541 = vmul.f32 %v505, %v532
      %v542 = vmul.f32 %v506, %v532
      %v543 = vmul.f32 %v507, %v532
      %v544 = vmul.f32 %v508, %v532
      %v545 = vmul.f32 %v509, %v532
      %v546 = vmul.f32 %v510, %v532
      %v547 = vmul.f32 %v511, %v532
      %v548 = vmul.f32 %v512, %v532
      %v565 = vrot.slane %v533, 1
      %v566 = vrot.slane %v534, 1
      %v567 = vsel %vm378, %v565, %v566
      %v568 = vrot.slane %v535, 1
      %v569 = vrot.slane %v536, 1
      %v570 = vsel %vm378, %v568, %v569
      %v571 = vrot.slane %v537, 1
      %v572 = vrot.slane %v538, 1
      %v573 = vsel %vm378, %v571, %v572
      %v574 = vrot.slane %v539, 1
      %v575 = vrot.slane %v540, 1
      %v576 = vsel %vm378, %v574, %v575
      %v577 = vrot.slane %v541, 1
      %v578 = vrot.slane %v542, 1
      %v579 = vsel %vm378, %v577, %v578
      %v580 = vrot.slane %v543, 1
      %v581 = vrot.slane %v544, 1
      %v582 = vsel %vm378, %v580, %v581
      %v583 = vrot.slane %v545, 1
      %v584 = vrot.slane %v546, 1
      %v585 = vsel %vm378, %v583, %v584
      %v586 = vrot.slane %v547, 1
      %v587 = vrot.slane %v548, 1
      %v588 = vsel %vm378, %v586, %v587
      %v597 = vadd.f32 %v523, %v567
      %v598 = vadd.f32 %v524, %v570
      %v599 = vadd.f32 %v525, %v573
      %v600 = vadd.f32 %v526, %v576
      %v601 = vadd.f32 %v527, %v579
      %v602 = vadd.f32 %v528, %v582
      %v603 = vadd.f32 %v529, %v585
      %v604 = vadd.f32 %v530, %v588
      %v605 = vld [vmem:[%s1 + $0x5] sm:$0x1]
      %v606 = vperm.slane %v605, 0
      %v607 = vmul.f32 %v497, %v606
      %v608 = vmul.f32 %v498, %v606
      %v609 = vmul.f32 %v499, %v606
      %v610 = vmul.f32 %v500, %v606
      %v611 = vmul.f32 %v501, %v606
      %v612 = vmul.f32 %v502, %v606
      %v613 = vmul.f32 %v503, %v606
      %v614 = vmul.f32 %v504, %v606
      %v615 = vmul.f32 %v505, %v606
      %v616 = vmul.f32 %v506, %v606
      %v617 = vmul.f32 %v507, %v606
      %v618 = vmul.f32 %v508, %v606
      %v619 = vmul.f32 %v509, %v606
      %v620 = vmul.f32 %v510, %v606
      %v621 = vmul.f32 %v511, %v606
      %v622 = vmul.f32 %v512, %v606
      %v639 = vrot.slane %v607, 2
      %v640 = vrot.slane %v608, 2
      %v641 = vsel %vm453, %v639, %v640
      %v642 = vrot.slane %v609, 2
      %v643 = vrot.slane %v610, 2
      %v644 = vsel %vm453, %v642, %v643
      %v645 = vrot.slane %v611, 2
      %v646 = vrot.slane %v612, 2
      %v647 = vsel %vm453, %v645, %v646
      %v648 = vrot.slane %v613, 2
      %v649 = vrot.slane %v614, 2
      %v650 = vsel %vm453, %v648, %v649
      %v651 = vrot.slane %v615, 2
      %v652 = vrot.slane %v616, 2
      %v653 = vsel %vm453, %v651, %v652
      %v654 = vrot.slane %v617, 2
      %v655 = vrot.slane %v618, 2
      %v656 = vsel %vm453, %v654, %v655
      %v657 = vrot.slane %v619, 2
      %v658 = vrot.slane %v620, 2
      %v659 = vsel %vm453, %v657, %v658
      %v660 = vrot.slane %v621, 2
      %v661 = vrot.slane %v622, 2
      %v662 = vsel %vm453, %v660, %v661
      %v671 = vadd.f32 %v597, %v641
      %v672 = vadd.f32 %v598, %v644
      %v673 = vadd.f32 %v599, %v647
      %v674 = vadd.f32 %v600, %v650
      %v675 = vadd.f32 %v601, %v653
      %v676 = vadd.f32 %v602, %v656
      %v677 = vadd.f32 %v603, %v659
      %v678 = vadd.f32 %v604, %v662
      %s679 = sadd.s32 %s307, 2
      %s680 = smul.u32 %s679, 16
      %s681 = scalar_lea.vmem [#allocation2], %s680
      %v682 = vld [vmem:[%s681] sm:$0xff]
      %v683 = vld [vmem:[%s681 + $0x8] sm:$0x3]
      %v684 = vld [vmem:[%s681 + $0x10] sm:$0xff]
      %v685 = vld [vmem:[%s681 + $0x18] sm:$0x3]
      %v686 = vld [vmem:[%s681 + $0x20] sm:$0xff]
      %v687 = vld [vmem:[%s681 + $0x28] sm:$0x3]
      %v688 = vld [vmem:[%s681 + $0x30] sm:$0xff]
      %v689 = vld [vmem:[%s681 + $0x38] sm:$0x3]
      %v690 = vld [vmem:[%s681 + $0x40] sm:$0xff]
      %v691 = vld [vmem:[%s681 + $0x48] sm:$0x3]
      %v692 = vld [vmem:[%s681 + $0x50] sm:$0xff]
      %v693 = vld [vmem:[%s681 + $0x58] sm:$0x3]
      %v694 = vld [vmem:[%s681 + $0x60] sm:$0xff]
      %v695 = vld [vmem:[%s681 + $0x68] sm:$0x3]
      %v696 = vld [vmem:[%s681 + $0x70] sm:$0xff]
      %v697 = vld [vmem:[%s681 + $0x78] sm:$0x3]
      %v698 = vld [vmem:[%s1 + $0x6] sm:$0x1]
      %v699 = vperm.slane %v698, 0
      %v700 = vmul.f32 %v682, %v699
      %v701 = vmul.f32 %v684, %v699
      %v702 = vmul.f32 %v686, %v699
      %v703 = vmul.f32 %v688, %v699
      %v704 = vmul.f32 %v690, %v699
      %v705 = vmul.f32 %v692, %v699
      %v706 = vmul.f32 %v694, %v699
      %v707 = vmul.f32 %v696, %v699
      %v708 = vadd.f32 %v671, %v700
      %v709 = vadd.f32 %v672, %v701
      %v710 = vadd.f32 %v673, %v702
      %v711 = vadd.f32 %v674, %v703
      %v712 = vadd.f32 %v675, %v704
      %v713 = vadd.f32 %v676, %v705
      %v714 = vadd.f32 %v677, %v706
      %v715 = vadd.f32 %v678, %v707
      %v716 = vld [vmem:[%s1 + $0x7] sm:$0x1]
      %v717 = vperm.slane %v716, 0
      %v718 = vmul.f32 %v682, %v717
      %v719 = vmul.f32 %v683, %v717
      %v720 = vmul.f32 %v684, %v717
      %v721 = vmul.f32 %v685, %v717
      %v722 = vmul.f32 %v686, %v717
      %v723 = vmul.f32 %v687, %v717
      %v724 = vmul.f32 %v688, %v717
      %v725 = vmul.f32 %v689, %v717
      %v726 = vmul.f32 %v690, %v717
      %v727 = vmul.f32 %v691, %v717
      %v728 = vmul.f32 %v692, %v717
      %v729 = vmul.f32 %v693, %v717
      %v730 = vmul.f32 %v694, %v717
      %v731 = vmul.f32 %v695, %v717
      %v732 = vmul.f32 %v696, %v717
      %v733 = vmul.f32 %v697, %v717
      %v750 = vrot.slane %v718, 1
      %v751 = vrot.slane %v719, 1
      %v752 = vsel %vm378, %v750, %v751
      %v753 = vrot.slane %v720, 1
      %v754 = vrot.slane %v721, 1
      %v755 = vsel %vm378, %v753, %v754
      %v756 = vrot.slane %v722, 1
      %v757 = vrot.slane %v723, 1
      %v758 = vsel %vm378, %v756, %v757
      %v759 = vrot.slane %v724, 1
      %v760 = vrot.slane %v725, 1
      %v761 = vsel %vm378, %v759, %v760
      %v762 = vrot.slane %v726, 1
      %v763 = vrot.slane %v727, 1
      %v764 = vsel %vm378, %v762, %v763
      %v765 = vrot.slane %v728, 1
      %v766 = vrot.slane %v729, 1
      %v767 = vsel %vm378, %v765, %v766
      %v768 = vrot.slane %v730, 1
      %v769 = vrot.slane %v731, 1
      %v770 = vsel %vm378, %v768, %v769
      %v771 = vrot.slane %v732, 1
      %v772 = vrot.slane %v733, 1
      %v773 = vsel %vm378, %v771, %v772
      %v782 = vadd.f32 %v708, %v752
      %v783 = vadd.f32 %v709, %v755
      %v784 = vadd.f32 %v710, %v758
      %v785 = vadd.f32 %v711, %v761
      %v786 = vadd.f32 %v712, %v764
      %v787 = vadd.f32 %v713, %v767
      %v788 = vadd.f32 %v714, %v770
      %v789 = vadd.f32 %v715, %v773
      %v790 = vld [vmem:[%s1 + $0x8] sm:$0x1]
      %v791 = vperm.slane %v790, 0
      %v792 = vmul.f32 %v682, %v791
      %v793 = vmul.f32 %v683, %v791
      %v794 = vmul.f32 %v684, %v791
      %v795 = vmul.f32 %v685, %v791
      %v796 = vmul.f32 %v686, %v791
      %v797 = vmul.f32 %v687, %v791
      %v798 = vmul.f32 %v688, %v791
      %v799 = vmul.f32 %v689, %v791
      %v800 = vmul.f32 %v690, %v791
      %v801 = vmul.f32 %v691, %v791
      %v802 = vmul.f32 %v692, %v791
      %v803 = vmul.f32 %v693, %v791
      %v804 = vmul.f32 %v694, %v791
      %v805 = vmul.f32 %v695, %v791
      %v806 = vmul.f32 %v696, %v791
      %v807 = vmul.f32 %v697, %v791
      %v824 = vrot.slane %v792, 2
      %v825 = vrot.slane %v793, 2
      %v826 = vsel %vm453, %v824, %v825
      %v827 = vrot.slane %v794, 2
      %v828 = vrot.slane %v795, 2
      %v829 = vsel %vm453, %v827, %v828
      %v830 = vrot.slane %v796, 2
      %v831 = vrot.slane %v797, 2
      %v832 = vsel %vm453, %v830, %v831
      %v833 = vrot.slane %v798, 2
      %v834 = vrot.slane %v799, 2
      %v835 = vsel %vm453, %v833, %v834
      %v836 = vrot.slane %v800, 2
      %v837 = vrot.slane %v801, 2
      %v838 = vsel %vm453, %v836, %v837
      %v839 = vrot.slane %v802, 2
      %v840 = vrot.slane %v803, 2
      %v841 = vsel %vm453, %v839, %v840
      %v842 = vrot.slane %v804, 2
      %v843 = vrot.slane %v805, 2
      %v844 = vsel %vm453, %v842, %v843
      %v845 = vrot.slane %v806, 2
      %v846 = vrot.slane %v807, 2
      %v847 = vsel %vm453, %v845, %v846
      %v856 = vadd.f32 %v782, %v826
      %v857 = vadd.f32 %v783, %v829
      %v858 = vadd.f32 %v784, %v832
      %v859 = vadd.f32 %v785, %v835
      %v860 = vadd.f32 %v786, %v838
      %v861 = vadd.f32 %v787, %v841
      %v862 = vadd.f32 %v788, %v844
      %v863 = vadd.f32 %v789, %v847
      %v864 = vld [vmem:[%s2] sm:$0x1]
      %v866 = vperm.slane %v864, 0
      %v868 = vmul.f32 %v856, %v866
      %v869 = vmul.f32 %v857, %v866
      %v870 = vmul.f32 %v858, %v866
      %v871 = vmul.f32 %v859, %v866
      %v872 = vmul.f32 %v860, %v866
      %v873 = vmul.f32 %v861, %v866
      %v874 = vmul.f32 %v862, %v866
      %v875 = vmul.f32 %v863, %v866
      %v876 = vld [vmem:[%s3] sm:$0x1]
      %v878 = vperm.slane %v876, 0
      %v880 = vadd.f32 %v868, %v878
      %v881 = vadd.f32 %v869, %v878
      %v882 = vadd.f32 %v870, %v878
      %v883 = vadd.f32 %v871, %v878
      %v884 = vadd.f32 %v872, %v878
      %v885 = vadd.f32 %v873, %v878
      %v886 = vadd.f32 %v874, %v878
      %v887 = vadd.f32 %v875, %v878
      %v888 = vxor.u32 %v880, 2147483648
      %v889 = vxor.u32 %v881, 2147483648
      %v890 = vxor.u32 %v882, 2147483648
      %v891 = vxor.u32 %v883, 2147483648
      %v892 = vxor.u32 %v884, 2147483648
      %v893 = vxor.u32 %v885, 2147483648
      %v894 = vxor.u32 %v886, 2147483648
      %v895 = vxor.u32 %v887, 2147483648
      %v896 = vmul.f32 %v888, 1.442695
      %v897 = vpow.pop %v896
      %v898 = vmul.f32 %v889, 1.442695
      %v899 = vpow.pop %v898
      %v900 = vmul.f32 %v890, 1.442695
      %v901 = vpow.pop %v900
      %v902 = vmul.f32 %v891, 1.442695
      %v903 = vpow.pop %v902
      %v904 = vmul.f32 %v892, 1.442695
      %v905 = vpow.pop %v904
      %v906 = vmul.f32 %v893, 1.442695
      %v907 = vpow.pop %v906
      %v908 = vmul.f32 %v894, 1.442695
      %v909 = vpow.pop %v908
      %v910 = vmul.f32 %v895, 1.442695
      %v911 = vpow.pop %v910
      %v912 = vadd.f32 %v897, 1.0
      %v913 = vadd.f32 %v899, 1.0
      %v914 = vadd.f32 %v901, 1.0
      %v915 = vadd.f32 %v903, 1.0
      %v916 = vadd.f32 %v905, 1.0
      %v917 = vadd.f32 %v907, 1.0
      %v918 = vadd.f32 %v909, 1.0
      %v919 = vadd.f32 %v911, 1.0
      %v920 = vrcp.pop %v912
      %v921 = vmul.f32 %v912, %v920
      %v922 = vsub.f32 1.0, %v921
      %v923 = vmul.f32 %v920, %v922
      %v924 = vadd.f32 %v920, %v923
      %vm925 = vweird.f32 %v912
      %vm926 = vweird.f32 %v920
      %vm927 = vmor %vm925, %vm926
      %v928 = vsel %vm927, %v920, %v924
      %v929 = vand.u32 2147483647, %v912
      %vm930 = vcmp.eq.f32.partialorder %v929, 8.507059e+37
      %v931 = vand.u32 %v912, 2147483648
      %v932 = vor.u32 1.1754944e-38, %v931
      %v933 = vsel %vm930, %v932, %v928
      %v934 = vmul.f32 1.0, %v933
      %v935 = vrcp.pop %v913
      %v936 = vmul.f32 %v913, %v935
      %v937 = vsub.f32 1.0, %v936
      %v938 = vmul.f32 %v935, %v937
      %v939 = vadd.f32 %v935, %v938
      %vm940 = vweird.f32 %v913
      %vm941 = vweird.f32 %v935
      %vm942 = vmor %vm940, %vm941
      %v943 = vsel %vm942, %v935, %v939
      %v944 = vand.u32 2147483647, %v913
      %vm945 = vcmp.eq.f32.partialorder %v944, 8.507059e+37
      %v946 = vand.u32 %v913, 2147483648
      %v947 = vor.u32 1.1754944e-38, %v946
      %v948 = vsel %vm945, %v947, %v943
      %v949 = vmul.f32 1.0, %v948
      %v950 = vrcp.pop %v914
      %v951 = vmul.f32 %v914, %v950
      %v952 = vsub.f32 1.0, %v951
      %v953 = vmul.f32 %v950, %v952
      %v954 = vadd.f32 %v950, %v953
      %vm955 = vweird.f32 %v914
      %vm956 = vweird.f32 %v950
      %vm957 = vmor %vm955, %vm956
      %v958 = vsel %vm957, %v950, %v954
      %v959 = vand.u32 2147483647, %v914
      %vm960 = vcmp.eq.f32.partialorder %v959, 8.507059e+37
      %v961 = vand.u32 %v914, 2147483648
      %v962 = vor.u32 1.1754944e-38, %v961
      %v963 = vsel %vm960, %v962, %v958
      %v964 = vmul.f32 1.0, %v963
      %v965 = vrcp.pop %v915
      %v966 = vmul.f32 %v915, %v965
      %v967 = vsub.f32 1.0, %v966
      %v968 = vmul.f32 %v965, %v967
      %v969 = vadd.f32 %v965, %v968
      %vm970 = vweird.f32 %v915
      %vm971 = vweird.f32 %v965
      %vm972 = vmor %vm970, %vm971
      %v973 = vsel %vm972, %v965, %v969
      %v974 = vand.u32 2147483647, %v915
      %vm975 = vcmp.eq.f32.partialorder %v974, 8.507059e+37
      %v976 = vand.u32 %v915, 2147483648
      %v977 = vor.u32 1.1754944e-38, %v976
      %v978 = vsel %vm975, %v977, %v973
      %v979 = vmul.f32 1.0, %v978
      %v980 = vrcp.pop %v916
      %v981 = vmul.f32 %v916, %v980
      %v982 = vsub.f32 1.0, %v981
      %v983 = vmul.f32 %v980, %v982
      %v984 = vadd.f32 %v980, %v983
      %vm985 = vweird.f32 %v916
      %vm986 = vweird.f32 %v980
      %vm987 = vmor %vm985, %vm986
      %v988 = vsel %vm987, %v980, %v984
      %v989 = vand.u32 2147483647, %v916
      %vm990 = vcmp.eq.f32.partialorder %v989, 8.507059e+37
      %v991 = vand.u32 %v916, 2147483648
      %v992 = vor.u32 1.1754944e-38, %v991
      %v993 = vsel %vm990, %v992, %v988
      %v994 = vmul.f32 1.0, %v993
      %v995 = vrcp.pop %v917
      %v996 = vmul.f32 %v917, %v995
      %v997 = vsub.f32 1.0, %v996
      %v998 = vmul.f32 %v995, %v997
      %v999 = vadd.f32 %v995, %v998
      %vm1000 = vweird.f32 %v917
      %vm1001 = vweird.f32 %v995
      %vm1002 = vmor %vm1000, %vm1001
      %v1003 = vsel %vm1002, %v995, %v999
      %v1004 = vand.u32 2147483647, %v917
      %vm1005 = vcmp.eq.f32.partialorder %v1004, 8.507059e+37
      %v1006 = vand.u32 %v917, 2147483648
      %v1007 = vor.u32 1.1754944e-38, %v1006
      %v1008 = vsel %vm1005, %v1007, %v1003
      %v1009 = vmul.f32 1.0, %v1008
      %v1010 = vrcp.pop %v918
      %v1011 = vmul.f32 %v918, %v1010
      %v1012 = vsub.f32 1.0, %v1011
      %v1013 = vmul.f32 %v1010, %v1012
      %v1014 = vadd.f32 %v1010, %v1013
      %vm1015 = vweird.f32 %v918
      %vm1016 = vweird.f32 %v1010
      %vm1017 = vmor %vm1015, %vm1016
      %v1018 = vsel %vm1017, %v1010, %v1014
      %v1019 = vand.u32 2147483647, %v918
      %vm1020 = vcmp.eq.f32.partialorder %v1019, 8.507059e+37
      %v1021 = vand.u32 %v918, 2147483648
      %v1022 = vor.u32 1.1754944e-38, %v1021
      %v1023 = vsel %vm1020, %v1022, %v1018
      %v1024 = vmul.f32 1.0, %v1023
      %v1025 = vrcp.pop %v919
      %v1026 = vmul.f32 %v919, %v1025
      %v1027 = vsub.f32 1.0, %v1026
      %v1028 = vmul.f32 %v1025, %v1027
      %v1029 = vadd.f32 %v1025, %v1028
      %vm1030 = vweird.f32 %v919
      %vm1031 = vweird.f32 %v1025
      %vm1032 = vmor %vm1030, %vm1031
      %v1033 = vsel %vm1032, %v1025, %v1029
      %v1034 = vand.u32 2147483647, %v919
      %vm1035 = vcmp.eq.f32.partialorder %v1034, 8.507059e+37
      %v1036 = vand.u32 %v919, 2147483648
      %v1037 = vor.u32 1.1754944e-38, %v1036
      %v1038 = vsel %vm1035, %v1037, %v1033
      %v1039 = vmul.f32 1.0, %v1038
      %v1040 = vmul.f32 %v880, %v934
      %v1041 = vmul.f32 %v881, %v949
      %v1042 = vmul.f32 %v882, %v964
      %v1043 = vmul.f32 %v883, %v979
      %v1044 = vmul.f32 %v884, %v994
      %v1045 = vmul.f32 %v885, %v1009
      %v1046 = vmul.f32 %v886, %v1024
      %v1047 = vmul.f32 %v887, %v1039
      %v1048 = vpack.c.bf16 %v1040, %v1040
      %v1049 = vpack.c.bf16 %v1041, %v1041
      %v1050 = vpack.c.bf16 %v1042, %v1042
      %v1051 = vpack.c.bf16 %v1043, %v1043
      %v1052 = vpack.c.bf16 %v1044, %v1044
      %v1053 = vpack.c.bf16 %v1045, %v1045
      %v1054 = vpack.c.bf16 %v1046, %v1046
      %v1055 = vpack.c.bf16 %v1047, %v1047
      %1056 = vst [vmem:[%s252] sm:$0xf] %v1048
      %1057 = vst [vmem:[%s252 + $0x4] sm:$0xf] %v1049
      %1058 = vst [vmem:[%s252 + $0x8] sm:$0xf] %v1050
      %1059 = vst [vmem:[%s252 + $0xc] sm:$0xf] %v1051
      %1060 = vst [vmem:[%s252 + $0x10] sm:$0xf] %v1052
      %1061 = vst [vmem:[%s252 + $0x14] sm:$0xf] %v1053
      %1062 = vst [vmem:[%s252 + $0x18] sm:$0xf] %v1054
      %1063 = vst [vmem:[%s252 + $0x1c] sm:$0xf] %v1055
      %v1064 = vld [vmem:[%s256] sm:$0x1]
      %v1065 = vadd.f32 %v1040, %v1041
      %v1066 = vadd.f32 %v1065, %v1042
      %v1067 = vadd.f32 %v1066, %v1043
      %v1068 = vadd.f32 %v1067, %v1044
      %v1069 = vadd.f32 %v1068, %v1045
      %v1070 = vadd.f32 %v1069, %v1046
      %v1071 = vadd.f32 %v1070, %v1047
      %v1072 = vrot.slane %v1071, 4
      %v1073 = vadd.f32 %v1071, %v1072
      %v1074 = vrot.slane %v1073, 2
      %v1075 = vadd.f32 %v1073, %v1074
      %v1076 = vrot.slane %v1075, 1
      %v1077 = vadd.f32 %v1075, %v1076
      %v1078 = vmul.f32 %v1077, 0.015625
      %v1079 = vadd.f32 %v1064, %v1078
      %1080 = vst [vmem:[%s256] sm:$0x1] %v1079
      %s1081 = smul.u32 8, %s22
      %p1082 = scmp.lt.s32.totalorder %s21, 1
      %s1083 = scalar_select %p1082, %s21, 1
      %p1084 = scmp.lt.s32.totalorder %s1081, 7
      %s1085 = scalar_select %p1084, %s1081, 7
      %s1086 = smul.addr %s1083, 8
      %s1087 = sadd.s32 %s1085, %s1086
      %s1088 = smul.addr %s1087, 4
      %s1089 = scalar_lea.vmem %s4, %s1088
      %p1090 = scmp.lt.s32.totalorder %s21, 1
      %s1091 = scalar_select %p1090, %s21, 1
      %s1092 = scalar_lea.vmem %s5, %s1091
      // Predicated region
      $region41: #{_lambda_.7} parent=35 // pred_check
        %p1093 = pneg %p138
      $region42: #{_lambda_.7} parent=35 // pred_check_branch
        %1095 = sbr.rel (%p1093) target = $region44
      $region43: #{_lambda_.7} parent=35 // pred_region
        %s1096 = smul.u32 8, %s22
      $region44: #{_lambda_.7} parent=35 // pred_fallthru
        _
      // Predicated region
      $region45: #{_lambda_.7} parent=35 // pred_check
        %p1097 = pneg %p164
      $region46: #{_lambda_.7} parent=35 // pred_check_branch
        %1099 = sbr.rel (%p1097) target = $region48
      $region47: #{_lambda_.7} parent=35 // pred_region
        _
      $region48: #{_lambda_.7} parent=35 // pred_fallthru
        _
    $region36: #{_lambda_.7} parent=5 // pred_fallthru
      _
    %p1100 = scmp.le.s32.totalorder 2, %s12
    // Predicated region
    $region49: #{_lambda_.7} parent=5 // pred_check
      %p1101 = pneg %p1100
    $region50: #{_lambda_.7} parent=5 // pred_check_branch
      %1103 = sbr.rel (%p1101) target = $region52
    $region51: #{_lambda_.7} parent=5 // pred_region
      %s1104 = ssub.s32 %s12, 2
      // Predicated region
      $region53: #{_lambda_.7} parent=51 // pred_check
        %p1105 = pneg %p144
      $region54: #{_lambda_.7} parent=51 // pred_check_branch
        %1107 = sbr.rel (%p1105) target = $region56
      $region55: #{_lambda_.7} parent=51 // pred_region
        %s1108 = smul.u32 8, %s24
        %p1109 = scmp.lt.s32.totalorder %s23, 1
        %s1110 = scalar_select %p1109, %s23, 1
        %p1111 = scmp.lt.s32.totalorder %s1108, 7
        %s1112 = scalar_select %p1111, %s1108, 7
        %s1113 = smul.addr %s1110, 8
        %s1114 = sadd.s32 %s1112, %s1113
        %s1115 = smul.addr %s1114, 4
        %s1116 = scalar_lea.vmem %s4, %s1115
      $region56: #{_lambda_.7} parent=51 // pred_fallthru
        _
      // Predicated region
      $region57: #{_lambda_.7} parent=51 // pred_check
        %p1117 = pneg %p170
      $region58: #{_lambda_.7} parent=51 // pred_check_branch
        %1119 = sbr.rel (%p1117) target = $region60
      $region59: #{_lambda_.7} parent=51 // pred_region
        %p1120 = scmp.lt.s32.totalorder %s23, 1
        %s1121 = scalar_select %p1120, %s23, 1
        %s1122 = scalar_lea.vmem %s5, %s1121
      $region60: #{_lambda_.7} parent=51 // pred_fallthru
        _
    $region52: #{_lambda_.7} parent=5 // pred_fallthru
      _
  $region6: #{_lambda_.7} parent=0 // loop_footer
    %s16 = sadd.s32 1, %s12
  $region7: #{_lambda_.7} parent=0 // loop_footer_branch
    %11 = sbr.rel target = $region3
  $region8: #{_lambda_.7} parent=0 // loop_exit
    _

// kernel: _lambda_.9
$region0: #{_lambda_.9}
  #allocation0 [shape = 'u32[]', space=smem, size = 0x4, offset = 0x4, fixed_abs, tag = 'smem constant byte address 0x4 - core index']
  #allocation1 [shape = 'u32[72,128]{1,0:T(1,128)}', space=vmem, size = 0x9000, scoped, tag = 'internal scratch']
  #allocation2 [shape = 'f32[10,10,128]{2,1,0:T(8,128)}', space=vmem, size = 0x14000, scoped, tag = 'scratch operand']
  %s0 = inlined_call_operand.vmem [shape: bf16[2,8,8,128], index: 0, kind: input, shape index: {}]
  %s1 = inlined_call_operand.vmem [shape: bf16[128,128], index: 1, kind: input, shape index: {}]
  %s2 = inlined_call_operand.vmem [shape: f32[1,128], index: 2, kind: input, shape index: {}]
  %s3 = inlined_call_operand.vmem [shape: f32[1,128], index: 3, kind: input, shape index: {}]
  %s4 = inlined_call_operand.vmem [shape: f32[9,128], index: 4, kind: input, shape index: {}]
  %s5 = inlined_call_operand.vmem [shape: f32[1,128], index: 5, kind: input, shape index: {}]
  %s6 = inlined_call_operand.vmem [shape: f32[1,128], index: 6, kind: input, shape index: {}]
  %s7 = inlined_call_operand.vmem [shape: bf16[2,8,8,128], index: 7, kind: output, shape index: {0}]
  %s8 = inlined_call_operand.vmem [shape: f32[2,1,128], index: 8, kind: output, shape index: {1}]
  %9 = xla_tuple %s7, %s8
  %s10 = sld [smem:[#allocation0]]
  $region73: #{_lambda_.9} parent=0
    _
  %s12 = ssub.s32 1, %s10
  %s13 = scalar_select 0, %s12, %s10
  loop: start=0, step=1, limit=4
  $region2: #{_lambda_.9} parent=0 // loop_pre_header
    _
  $region3: #{_lambda_.9} parent=0 // loop_header
    %s15 = sphi 0, %s19
    %p16 = scmp.ge.s32.totalorder %s15, 4
    %s22 = sphi 0, %s34
    %s23 = sphi 0, %s30
    %s24 = sphi 0, %s22
    %s25 = sphi 0, %s23
    %s26 = sphi 0, %s24
    %s27 = sphi 0, %s25
    %s37 = sphi 0, %s39
    %s40 = sphi 0, %s37
    %s41 = sphi 0, %s40
    %s57 = sphi 0, %s41
    %s61 = sphi 0, %s61
    %s63 = sphi 0, %s61
    %s64 = sphi 0, %s63
    %s78 = sphi 0, %s64
    %s82 = sphi 0, %s82
    %s84 = sphi 0, %s82
    %s85 = sphi 0, %s84
    %s99 = sphi 0, %s85
    %s103 = sphi 0, %s103
    %s105 = sphi 0, %s103
    %s106 = sphi 0, %s105
    %s120 = sphi 0, %s106
    %s124 = sphi 0, %s124
    %s126 = sphi 0, %s124
    %s127 = sphi 0, %s126
    %s141 = sphi 0, %s127
    %s145 = sphi 0, %s145
    %s147 = sphi 0, %s145
    %s148 = sphi 0, %s147
    %s162 = sphi 0, %s148
    %s166 = sphi 0, %s166
    %s168 = sphi 0, %s166
    %s169 = sphi 0, %s168
    %s183 = sphi 0, %s169
    %s191 = sphi 0, %s193
    %s194 = sphi 0, %s191
    %s195 = sphi 0, %s194
    %s211 = sphi 0, %s195
    %s217 = sphi 0, %s219
    %s220 = sphi 0, %s217
    %s221 = sphi 0, %s220
    %s237 = sphi 0, %s221
  $region4: #{_lambda_.9} parent=0 // loop_header_branch
    %18 = sbr.rel (%p16) target = $region8
  $region5: #{_lambda_.9} parent=0 // loop_body
    %s20 = ssub.s32 %s15, 1
    %s21 = ssub.s32 %s15, 2
    %s28 = sadd.s32 1, %s23
    %p29 = scmp.ge.s32.totalorder %s28, 1
    %s30 = scalar_select %p29, 0, %s28
    %s31 = sadd.s32 1, %s22
    %s32 = scalar_select %p29, %s31, %s22
    %p33 = scmp.ge.s32.totalorder %s32, 2
    %s34 = scalar_select %p33, 0, %s32
    %s35 = ssub.s32 %s22, %s34
    %p36 = scmp.eq.s32.totalorder %s35, 0
    %s38 = sadd.s32 %s37, 1
    %s39 = scalar_select %p36, %s37, %s38
    %p42 = pneg %p36
    %p43 = scmp.eq.s32.totalorder %s15, 1
    %p44 = por %p42, %p43
    %p45 = scmp.ne.s32.totalorder %s37, %s40
    %p46 = scmp.eq.s32.totalorder %s15, 0
    %p47 = por %p45, %p46
    %p48 = scmp.ne.s32.totalorder %s37, %s40
    %p49 = scmp.eq.s32.totalorder %s20, 1
    %p50 = por %p48, %p49
    %p51 = scmp.ne.s32.totalorder %s40, %s41
    %p52 = scmp.eq.s32.totalorder %s20, 0
    %p53 = por %p51, %p52
    %p54 = scmp.ne.s32.totalorder %s40, %s41
    %p55 = scmp.eq.s32.totalorder %s21, 1
    %p56 = por %p54, %p55
    %p58 = scmp.ne.s32.totalorder %s41, %s57
    %p59 = scmp.eq.s32.totalorder %s21, 0
    %p60 = por %p58, %p59
    %s62 = sadd.s32 %s61, 1
    %p65 = scmp.eq.s32.totalorder %s15, 1
    %p66 = scmp.ne.s32.totalorder %s61, %s63
    %p67 = scmp.eq.s32.totalorder %s15, 0
    %p68 = por %p66, %p67
    %p69 = scmp.ne.s32.totalorder %s61, %s63
    %p70 = scmp.eq.s32.totalorder %s20, 1
    %p71 = por %p69, %p70
    %p72 = scmp.ne.s32.totalorder %s63, %s64
    %p73 = scmp.eq.s32.totalorder %s20, 0
    %p74 = por %p72, %p73
    %p75 = scmp.ne.s32.totalorder %s63, %s64
    %p76 = scmp.eq.s32.totalorder %s21, 1
    %p77 = por %p75, %p76
    %p79 = scmp.ne.s32.totalorder %s64, %s78
    %p80 = scmp.eq.s32.totalorder %s21, 0
    %p81 = por %p79, %p80
    %s83 = sadd.s32 %s82, 1
    %p86 = scmp.eq.s32.totalorder %s15, 1
    %p87 = scmp.ne.s32.totalorder %s82, %s84
    %p88 = scmp.eq.s32.totalorder %s15, 0
    %p89 = por %p87, %p88
    %p90 = scmp.ne.s32.totalorder %s82, %s84
    %p91 = scmp.eq.s32.totalorder %s20, 1
    %p92 = por %p90, %p91
    %p93 = scmp.ne.s32.totalorder %s84, %s85
    %p94 = scmp.eq.s32.totalorder %s20, 0
    %p95 = por %p93, %p94
    %p96 = scmp.ne.s32.totalorder %s84, %s85
    %p97 = scmp.eq.s32.totalorder %s21, 1
    %p98 = por %p96, %p97
    %p100 = scmp.ne.s32.totalorder %s85, %s99
    %p101 = scmp.eq.s32.totalorder %s21, 0
    %p102 = por %p100, %p101
    %s104 = sadd.s32 %s103, 1
    %p107 = scmp.eq.s32.totalorder %s15, 1
    %p108 = scmp.ne.s32.totalorder %s103, %s105
    %p109 = scmp.eq.s32.totalorder %s15, 0
    %p110 = por %p108, %p109
    %p111 = scmp.ne.s32.totalorder %s103, %s105
    %p112 = scmp.eq.s32.totalorder %s20, 1
    %p113 = por %p111, %p112
    %p114 = scmp.ne.s32.totalorder %s105, %s106
    %p115 = scmp.eq.s32.totalorder %s20, 0
    %p116 = por %p114, %p115
    %p117 = scmp.ne.s32.totalorder %s105, %s106
    %p118 = scmp.eq.s32.totalorder %s21, 1
    %p119 = por %p117, %p118
    %p121 = scmp.ne.s32.totalorder %s106, %s120
    %p122 = scmp.eq.s32.totalorder %s21, 0
    %p123 = por %p121, %p122
    %s125 = sadd.s32 %s124, 1
    %p128 = scmp.eq.s32.totalorder %s15, 1
    %p129 = scmp.ne.s32.totalorder %s124, %s126
    %p130 = scmp.eq.s32.totalorder %s15, 0
    %p131 = por %p129, %p130
    %p132 = scmp.ne.s32.totalorder %s124, %s126
    %p133 = scmp.eq.s32.totalorder %s20, 1
    %p134 = por %p132, %p133
    %p135 = scmp.ne.s32.totalorder %s126, %s127
    %p136 = scmp.eq.s32.totalorder %s20, 0
    %p137 = por %p135, %p136
    %p138 = scmp.ne.s32.totalorder %s126, %s127
    %p139 = scmp.eq.s32.totalorder %s21, 1
    %p140 = por %p138, %p139
    %p142 = scmp.ne.s32.totalorder %s127, %s141
    %p143 = scmp.eq.s32.totalorder %s21, 0
    %p144 = por %p142, %p143
    %s146 = sadd.s32 %s145, 1
    %p149 = scmp.eq.s32.totalorder %s15, 1
    %p150 = scmp.ne.s32.totalorder %s145, %s147
    %p151 = scmp.eq.s32.totalorder %s15, 0
    %p152 = por %p150, %p151
    %p153 = scmp.ne.s32.totalorder %s145, %s147
    %p154 = scmp.eq.s32.totalorder %s20, 1
    %p155 = por %p153, %p154
    %p156 = scmp.ne.s32.totalorder %s147, %s148
    %p157 = scmp.eq.s32.totalorder %s20, 0
    %p158 = por %p156, %p157
    %p159 = scmp.ne.s32.totalorder %s147, %s148
    %p160 = scmp.eq.s32.totalorder %s21, 1
    %p161 = por %p159, %p160
    %p163 = scmp.ne.s32.totalorder %s148, %s162
    %p164 = scmp.eq.s32.totalorder %s21, 0
    %p165 = por %p163, %p164
    %s167 = sadd.s32 %s166, 1
    %p170 = scmp.eq.s32.totalorder %s15, 1
    %p171 = scmp.ne.s32.totalorder %s166, %s168
    %p172 = scmp.eq.s32.totalorder %s15, 0
    %p173 = por %p171, %p172
    %p174 = scmp.ne.s32.totalorder %s166, %s168
    %p175 = scmp.eq.s32.totalorder %s20, 1
    %p176 = por %p174, %p175
    %p177 = scmp.ne.s32.totalorder %s168, %s169
    %p178 = scmp.eq.s32.totalorder %s20, 0
    %p179 = por %p177, %p178
    %p180 = scmp.ne.s32.totalorder %s168, %s169
    %p181 = scmp.eq.s32.totalorder %s21, 1
    %p182 = por %p180, %p181
    %p184 = scmp.ne.s32.totalorder %s169, %s183
    %p185 = scmp.eq.s32.totalorder %s21, 0
    %p186 = por %p184, %p185
    %s187 = ssub.s32 %s22, %s34
    %s188 = ssub.s32 %s23, %s30
    %s189 = sor.u32 %s187, %s188
    %p190 = scmp.eq.s32.totalorder %s189, 0
    %s192 = sadd.s32 %s191, 1
    %s193 = scalar_select %p190, %s191, %s192
    %p196 = pneg %p190
    %p197 = scmp.eq.s32.totalorder %s15, 1
    %p198 = por %p196, %p197
    %p199 = scmp.ne.s32.totalorder %s191, %s194
    %p200 = scmp.eq.s32.totalorder %s15, 0
    %p201 = por %p199, %p200
    %p202 = scmp.ne.s32.totalorder %s191, %s194
    %p203 = scmp.eq.s32.totalorder %s20, 1
    %p204 = por %p202, %p203
    %p205 = scmp.ne.s32.totalorder %s194, %s195
    %p206 = scmp.eq.s32.totalorder %s20, 0
    %p207 = por %p205, %p206
    %p208 = scmp.ne.s32.totalorder %s194, %s195
    %p209 = scmp.eq.s32.totalorder %s21, 1
    %p210 = por %p208, %p209
    %p212 = scmp.ne.s32.totalorder %s195, %s211
    %p213 = scmp.eq.s32.totalorder %s21, 0
    %p214 = por %p212, %p213
    %s215 = ssub.s32 %s22, %s34
    %p216 = scmp.eq.s32.totalorder %s215, 0
    %s218 = sadd.s32 %s217, 1
    %s219 = scalar_select %p216, %s217, %s218
    %p222 = pneg %p216
    %p223 = scmp.eq.s32.totalorder %s15, 1
    %p224 = por %p222, %p223
    %p225 = scmp.ne.s32.totalorder %s217, %s220
    %p226 = scmp.eq.s32.totalorder %s15, 0
    %p227 = por %p225, %p226
    %p228 = scmp.ne.s32.totalorder %s217, %s220
    %p229 = scmp.eq.s32.totalorder %s20, 1
    %p230 = por %p228, %p229
    %p231 = scmp.ne.s32.totalorder %s220, %s221
    %p232 = scmp.eq.s32.totalorder %s20, 0
    %p233 = por %p231, %p232
    %p234 = scmp.ne.s32.totalorder %s220, %s221
    %p235 = scmp.eq.s32.totalorder %s21, 1
    %p236 = por %p234, %p235
    %p238 = scmp.ne.s32.totalorder %s221, %s237
    %p239 = scmp.eq.s32.totalorder %s21, 0
    %p240 = por %p238, %p239
    %p241 = scmp.le.s32.totalorder 1, %s15
    %p242 = scmp.lt.s32.totalorder %s15, 3
    %p243 = pnand %p241, %p242
    %p244 = pneg %p243
    // Predicated region
    $region9: #{_lambda_.9} parent=5 // pred_check
      _
    $region10: #{_lambda_.9} parent=5 // pred_check_branch
      %246 = sbr.rel (%p243) target = $region12
    $region11: #{_lambda_.9} parent=5 // pred_region
      %s247 = ssub.s32 %s15, 1
      // Predicated region
      $region13: #{_lambda_.9} parent=11 // pred_check
        %p248 = pneg %p74
      $region14: #{_lambda_.9} parent=11 // pred_check_branch
        %250 = sbr.rel (%p248) target = $region16
      $region15: #{_lambda_.9} parent=11 // pred_region
        _
      $region16: #{_lambda_.9} parent=11 // pred_fallthru
        _
      // Predicated region
      $region17: #{_lambda_.9} parent=11 // pred_check
        %p251 = pneg %p95
      $region18: #{_lambda_.9} parent=11 // pred_check_branch
        %253 = sbr.rel (%p251) target = $region20
      $region19: #{_lambda_.9} parent=11 // pred_region
        _
      $region20: #{_lambda_.9} parent=11 // pred_fallthru
        _
      // Predicated region
      $region21: #{_lambda_.9} parent=11 // pred_check
        %p254 = pneg %p116
      $region22: #{_lambda_.9} parent=11 // pred_check_branch
        %256 = sbr.rel (%p254) target = $region24
      $region23: #{_lambda_.9} parent=11 // pred_region
        _
      $region24: #{_lambda_.9} parent=11 // pred_fallthru
        _
      // Predicated region
      $region25: #{_lambda_.9} parent=11 // pred_check
        %p257 = pneg %p137
      $region26: #{_lambda_.9} parent=11 // pred_check_branch
        %259 = sbr.rel (%p257) target = $region28
      $region27: #{_lambda_.9} parent=11 // pred_region
        _
      $region28: #{_lambda_.9} parent=11 // pred_fallthru
        _
      // Predicated region
      $region29: #{_lambda_.9} parent=11 // pred_check
        %p260 = pneg %p158
      $region30: #{_lambda_.9} parent=11 // pred_check_branch
        %262 = sbr.rel (%p260) target = $region32
      $region31: #{_lambda_.9} parent=11 // pred_region
        _
      $region32: #{_lambda_.9} parent=11 // pred_fallthru
        _
      // Predicated region
      $region33: #{_lambda_.9} parent=11 // pred_check
        %p263 = pneg %p179
      $region34: #{_lambda_.9} parent=11 // pred_check_branch
        %265 = sbr.rel (%p263) target = $region36
      $region35: #{_lambda_.9} parent=11 // pred_region
        _
      $region36: #{_lambda_.9} parent=11 // pred_fallthru
        _
    $region12: #{_lambda_.9} parent=5 // pred_fallthru
      _
    %p266 = scmp.lt.s32.totalorder %s15, 2
    // Predicated region
    $region37: #{_lambda_.9} parent=5 // pred_check
      %p267 = pneg %p266
    $region38: #{_lambda_.9} parent=5 // pred_check_branch
      %269 = sbr.rel (%p267) target = $region40
    $region39: #{_lambda_.9} parent=5 // pred_region
      // Predicated region
      $region41: #{_lambda_.9} parent=39 // pred_check
        %p270 = pneg %p47
      $region42: #{_lambda_.9} parent=39 // pred_check_branch
        %272 = sbr.rel (%p270) target = $region44
      $region43: #{_lambda_.9} parent=39 // pred_region
        %p273 = scmp.lt.s32.totalorder %s22, 1
        %s274 = scalar_select %p273, %s22, 1
        %s275 = smul.addr %s274, 8
        %s276 = smul.addr %s275, 4
        %s277 = scalar_lea.vmem %s0, %s276
      $region44: #{_lambda_.9} parent=39 // pred_fallthru
        _
    $region40: #{_lambda_.9} parent=5 // pred_fallthru
      _
    %p278 = scmp.le.s32.totalorder 1, %s15
    %p279 = scmp.lt.s32.totalorder %s15, 3
    %p280 = pnand %p278, %p279
    %p281 = pneg %p280
    // Predicated region
    $region45: #{_lambda_.9} parent=5 // pred_check
      _
    $region46: #{_lambda_.9} parent=5 // pred_check_branch
      %283 = sbr.rel (%p280) target = $region48
    $region47: #{_lambda_.9} parent=5 // pred_region
      %s284 = ssub.s32 %s15, 1
      %p285 = scmp.lt.s32.totalorder %s24, 1
      %s286 = scalar_select %p285, %s24, 1
      %s287 = smul.addr %s286, 8
      %s288 = smul.addr %s287, 4
      %s289 = scalar_lea.vmem %s0, %s288
      %p290 = pneg %p53
      %p291 = pneg %p50
      %p292 = pneg %p74
      %p293 = pneg %p71
      %p294 = pneg %p95
      %p295 = pneg %p92
      %p296 = pneg %p116
      %p297 = pneg %p113
      %p298 = pneg %p137
      %p299 = pneg %p134
      %p300 = pneg %p158
      %p301 = pneg %p155
      %p302 = pneg %p179
      %p303 = pneg %p176
      %p304 = pneg %p207
      %p305 = pneg %p204
      %s306 = smul.u32 8, %s25
      %p307 = scmp.lt.s32.totalorder %s24, 1
      %s308 = scalar_select %p307, %s24, 1
      %p309 = scmp.lt.s32.totalorder %s306, 7
      %s310 = scalar_select %p309, %s306, 7
      %s311 = smul.addr %s308, 8
      %s312 = sadd.s32 %s310, %s311
      %s313 = smul.addr %s312, 4
      %s314 = scalar_lea.vmem %s7, %s313
      %p315 = pneg %p233
      %p316 = pneg %p230
      %p317 = scmp.lt.s32.totalorder %s24, 1
      %s318 = scalar_select %p317, %s24, 1
      %s319 = scalar_lea.vmem %s8, %s318
      %p320 = scmp.lt.s32.totalorder %s24, 1
      %s321 = scalar_select %p320, %s24, 1
      %s322 = smul.addr %s321, 8
      %s323 = smul.addr %s322, 4
      %s324 = scalar_lea.vmem %s0, %s323
      %s325 = smul.u32 8, %s25
      %p326 = scmp.lt.s32.totalorder %s24, 1
      %s327 = scalar_select %p326, %s24, 1
      %p328 = scmp.lt.s32.totalorder %s325, 7
      %s329 = scalar_select %p328, %s325, 7
      %s330 = smul.addr %s327, 8
      %s331 = sadd.s32 %s329, %s330
      %s332 = smul.addr %s331, 4
      %s333 = scalar_lea.vmem %s7, %s332
      %s334 = smul.u32 8, %s25
      %p335 = scmp.lt.s32.totalorder %s24, 1
      %s336 = scalar_select %p335, %s24, 1
      %s337 = scalar_lea.vmem %s8, %s336
      %p338 = scmp.eq.s32.totalorder %s25, 0
      // Predicated region
      $region49: #{_lambda_.9} parent=47 // pred_check
        %p339 = pneg %p338
      $region50: #{_lambda_.9} parent=47 // pred_check_branch
        %341 = sbr.rel (%p339) target = $region52
      $region51: #{_lambda_.9} parent=47 // pred_region
        %342 = vst [vmem:[#allocation2] sm:$0xff] 0.0
        %343 = vst [vmem:[#allocation2 + $0x8] sm:$0x3] 0.0
        %344 = vst [vmem:[#allocation2 + $0x10] sm:$0xff] 0.0
        %345 = vst [vmem:[#allocation2 + $0x18] sm:$0x3] 0.0
        %346 = vst [vmem:[#allocation2 + $0x20] sm:$0xff] 0.0
        %347 = vst [vmem:[#allocation2 + $0x28] sm:$0x3] 0.0
        %348 = vst [vmem:[#allocation2 + $0x30] sm:$0xff] 0.0
        %349 = vst [vmem:[#allocation2 + $0x38] sm:$0x3] 0.0
        %350 = vst [vmem:[#allocation2 + $0x40] sm:$0xff] 0.0
        %351 = vst [vmem:[#allocation2 + $0x48] sm:$0x3] 0.0
        %352 = vst [vmem:[#allocation2 + $0x50] sm:$0xff] 0.0
        %353 = vst [vmem:[#allocation2 + $0x58] sm:$0x3] 0.0
        %354 = vst [vmem:[#allocation2 + $0x60] sm:$0xff] 0.0
        %355 = vst [vmem:[#allocation2 + $0x68] sm:$0x3] 0.0
        %356 = vst [vmem:[#allocation2 + $0x70] sm:$0xff] 0.0
        %357 = vst [vmem:[#allocation2 + $0x78] sm:$0x3] 0.0
        %358 = vst [vmem:[#allocation2 + $0x80] sm:$0xff] 0.0
        %359 = vst [vmem:[#allocation2 + $0x88] sm:$0x3] 0.0
        %360 = vst [vmem:[#allocation2 + $0x90] sm:$0xff] 0.0
        %361 = vst [vmem:[#allocation2 + $0x98] sm:$0x3] 0.0
        %v362 = vld [vmem:[%s324] sm:$0xf]
        %v363 = vld [vmem:[%s324 + $0x4] sm:$0xf]
        %v364 = vld [vmem:[%s324 + $0x8] sm:$0xf]
        %v365 = vld [vmem:[%s324 + $0xc] sm:$0xf]
        %v366 = vld [vmem:[%s324 + $0x10] sm:$0xf]
        %v367 = vld [vmem:[%s324 + $0x14] sm:$0xf]
        %v368 = vld [vmem:[%s324 + $0x18] sm:$0xf]
        %v369 = vld [vmem:[%s324 + $0x1c] sm:$0xf]
        %v370 = vld [vmem:[%s1] sm:$0xf]
        %v371 = vld [vmem:[%s1 + $0x4] sm:$0xf]
        %v372 = vld [vmem:[%s1 + $0x8] sm:$0xf]
        %v373 = vld [vmem:[%s1 + $0xc] sm:$0xf]
        %v374 = vld [vmem:[%s1 + $0x10] sm:$0xf]
        %v375 = vld [vmem:[%s1 + $0x14] sm:$0xf]
        %v376 = vld [vmem:[%s1 + $0x18] sm:$0xf]
        %v377 = vld [vmem:[%s1 + $0x1c] sm:$0xf]
        %v378 = vld [vmem:[%s1 + $0x20] sm:$0xf]
        %v379 = vld [vmem:[%s1 + $0x24] sm:$0xf]
        %v380 = vld [vmem:[%s1 + $0x28] sm:$0xf]
        %v381 = vld [vmem:[%s1 + $0x2c] sm:$0xf]
        %v382 = vld [vmem:[%s1 + $0x30] sm:$0xf]
        %v383 = vld [vmem:[%s1 + $0x34] sm:$0xf]
        %v384 = vld [vmem:[%s1 + $0x38] sm:$0xf]
        %v385 = vld [vmem:[%s1 + $0x3c] sm:$0xf]
        %v394 = vunpack.c.l.b16 %v362
        %v395 = vunpack.c.l.b16 %v363
        %v396 = vunpack.c.l.b16 %v364
        %v397 = vunpack.c.l.b16 %v365
        %v398 = vunpack.c.l.b16 %v366
        %v399 = vunpack.c.l.b16 %v367
        %v400 = vunpack.c.l.b16 %v368
        %v401 = vunpack.c.l.b16 %v369
        %v402 = vpack.c.b16 %v395, %v394
        %v403 = vpack.c.b16 %v397, %v396
        %v404 = vpack.c.b16 %v399, %v398
        %v405 = vpack.c.b16 %v401, %v400
        %v426 = vunpack.c.l.b16 %v370
        %v427 = vunpack.c.l.b16 %v371
        %v428 = vunpack.c.l.b16 %v372
        %v429 = vunpack.c.l.b16 %v373
        %v430 = vunpack.c.l.b16 %v374
        %v431 = vunpack.c.l.b16 %v375
        %v432 = vunpack.c.l.b16 %v376
        %v433 = vunpack.c.l.b16 %v377
        %v434 = vunpack.c.l.b16 %v378
        %v435 = vunpack.c.l.b16 %v379
        %v436 = vunpack.c.l.b16 %v380
        %v437 = vunpack.c.l.b16 %v381
        %v438 = vunpack.c.l.b16 %v382
        %v439 = vunpack.c.l.b16 %v383
        %v440 = vunpack.c.l.b16 %v384
        %v441 = vunpack.c.l.b16 %v385
        %v442 = vpack.c.b16 %v427, %v426
        %v443 = vpack.c.b16 %v429, %v428
        %v444 = vpack.c.b16 %v431, %v430
        %v445 = vpack.c.b16 %v433, %v432
        %v446 = vpack.c.b16 %v435, %v434
        %v447 = vpack.c.b16 %v437, %v436
        %v448 = vpack.c.b16 %v439, %v438
        %v449 = vpack.c.b16 %v441, %v440
        %458 = vmatpush.bf16.msra.mxu0 %v449
        %459 = vmatpush.bf16.msra.mxu0 %v448
        %460 = vmatpush.bf16.msra.mxu0 %v447
        %461 = vmatpush.bf16.msra.mxu0 %v446
        %462 = vmatpush.bf16.msra.mxu0 %v445
        %463 = vmatpush.bf16.msra.mxu0 %v444
        %464 = vmatpush.bf16.msra.mxu0 %v443
        %465 = vmatpush.bf16.msra.mxu0 %v442
        %466 = vmatmul.bf16.gmra.mxu0 %v402
        %v467 = vpop.f32.mrf.mxu0
        %v468 = vadd.f32 0.0, %v467
        %v469 = vpop.f32.mrf.mxu0
        %v470 = vadd.f32 0.0, %v469
        %471 = vmatmul.bf16.gmra.mxu0 %v403
        %v472 = vpop.f32.mrf.mxu0
        %v473 = vadd.f32 0.0, %v472
        %v474 = vpop.f32.mrf.mxu0
        %v475 = vadd.f32 0.0, %v474
        %476 = vmatmul.bf16.gmra.mxu0 %v404
        %v477 = vpop.f32.mrf.mxu0
        %v478 = vadd.f32 0.0, %v477
        %v479 = vpop.f32.mrf.mxu0
        %v480 = vadd.f32 0.0, %v479
        %481 = vmatmul.bf16.gmra.mxu0 %v405
        %v482 = vpop.f32.mrf.mxu0
        %v483 = vadd.f32 0.0, %v482
        %v484 = vpop.f32.mrf.mxu0
        %v485 = vadd.f32 0.0, %v484
        %486 = vdwg.mxu0
        %v487 = vld [vmem:[%s2] sm:$0x1]
        %v489 = vperm.slane %v487, 0
        %v491 = vmul.f32 %v468, %v489
        %v492 = vmul.f32 %v470, %v489
        %v493 = vmul.f32 %v473, %v489
        %v494 = vmul.f32 %v475, %v489
        %v495 = vmul.f32 %v478, %v489
        %v496 = vmul.f32 %v480, %v489
        %v497 = vmul.f32 %v483, %v489
        %v498 = vmul.f32 %v485, %v489
        %v499 = vld [vmem:[%s3] sm:$0x1]
        %v501 = vperm.slane %v499, 0
        %v503 = vadd.f32 %v491, %v501
        %v504 = vadd.f32 %v492, %v501
        %v505 = vadd.f32 %v493, %v501
        %v506 = vadd.f32 %v494, %v501
        %v507 = vadd.f32 %v495, %v501
        %v508 = vadd.f32 %v496, %v501
        %v509 = vadd.f32 %v497, %v501
        %v510 = vadd.f32 %v498, %v501
        %v511 = vxor.u32 %v503, 2147483648
        %v512 = vxor.u32 %v504, 2147483648
        %v513 = vxor.u32 %v505, 2147483648
        %v514 = vxor.u32 %v506, 2147483648
        %v515 = vxor.u32 %v507, 2147483648
        %v516 = vxor.u32 %v508, 2147483648
        %v517 = vxor.u32 %v509, 2147483648
        %v518 = vxor.u32 %v510, 2147483648
        %v519 = vmul.f32 %v511, 1.442695
        %v520 = vpow.pop %v519
        %v521 = vmul.f32 %v512, 1.442695
        %v522 = vpow.pop %v521
        %v523 = vmul.f32 %v513, 1.442695
        %v524 = vpow.pop %v523
        %v525 = vmul.f32 %v514, 1.442695
        %v526 = vpow.pop %v525
        %v527 = vmul.f32 %v515, 1.442695
        %v528 = vpow.pop %v527
        %v529 = vmul.f32 %v516, 1.442695
        %v530 = vpow.pop %v529
        %v531 = vmul.f32 %v517, 1.442695
        %v532 = vpow.pop %v531
        %v533 = vmul.f32 %v518, 1.442695
        %v534 = vpow.pop %v533
        %v535 = vadd.f32 %v520, 1.0
        %v536 = vadd.f32 %v522, 1.0
        %v537 = vadd.f32 %v524, 1.0
        %v538 = vadd.f32 %v526, 1.0
        %v539 = vadd.f32 %v528, 1.0
        %v540 = vadd.f32 %v530, 1.0
        %v541 = vadd.f32 %v532, 1.0
        %v542 = vadd.f32 %v534, 1.0
        %v543 = vrcp.pop %v535
        %v544 = vmul.f32 %v535, %v543
        %v545 = vsub.f32 1.0, %v544
        %v546 = vmul.f32 %v543, %v545
        %v547 = vadd.f32 %v543, %v546
        %vm548 = vweird.f32 %v535
        %vm549 = vweird.f32 %v543
        %vm550 = vmor %vm548, %vm549
        %v551 = vsel %vm550, %v543, %v547
        %v552 = vand.u32 2147483647, %v535
        %vm553 = vcmp.eq.f32.partialorder %v552, 8.507059e+37
        %v554 = vand.u32 %v535, 2147483648
        %v555 = vor.u32 1.1754944e-38, %v554
        %v556 = vsel %vm553, %v555, %v551
        %v557 = vmul.f32 1.0, %v556
        %v558 = vrcp.pop %v536
        %v559 = vmul.f32 %v536, %v558
        %v560 = vsub.f32 1.0, %v559
        %v561 = vmul.f32 %v558, %v560
        %v562 = vadd.f32 %v558, %v561
        %vm563 = vweird.f32 %v536
        %vm564 = vweird.f32 %v558
        %vm565 = vmor %vm563, %vm564
        %v566 = vsel %vm565, %v558, %v562
        %v567 = vand.u32 2147483647, %v536
        %vm568 = vcmp.eq.f32.partialorder %v567, 8.507059e+37
        %v569 = vand.u32 %v536, 2147483648
        %v570 = vor.u32 1.1754944e-38, %v569
        %v571 = vsel %vm568, %v570, %v566
        %v572 = vmul.f32 1.0, %v571
        %v573 = vrcp.pop %v537
        %v574 = vmul.f32 %v537, %v573
        %v575 = vsub.f32 1.0, %v574
        %v576 = vmul.f32 %v573, %v575
        %v577 = vadd.f32 %v573, %v576
        %vm578 = vweird.f32 %v537
        %vm579 = vweird.f32 %v573
        %vm580 = vmor %vm578, %vm579
        %v581 = vsel %vm580, %v573, %v577
        %v582 = vand.u32 2147483647, %v537
        %vm583 = vcmp.eq.f32.partialorder %v582, 8.507059e+37
        %v584 = vand.u32 %v537, 2147483648
        %v585 = vor.u32 1.1754944e-38, %v584
        %v586 = vsel %vm583, %v585, %v581
        %v587 = vmul.f32 1.0, %v586
        %v588 = vrcp.pop %v538
        %v589 = vmul.f32 %v538, %v588
        %v590 = vsub.f32 1.0, %v589
        %v591 = vmul.f32 %v588, %v590
        %v592 = vadd.f32 %v588, %v591
        %vm593 = vweird.f32 %v538
        %vm594 = vweird.f32 %v588
        %vm595 = vmor %vm593, %vm594
        %v596 = vsel %vm595, %v588, %v592
        %v597 = vand.u32 2147483647, %v538
        %vm598 = vcmp.eq.f32.partialorder %v597, 8.507059e+37
        %v599 = vand.u32 %v538, 2147483648
        %v600 = vor.u32 1.1754944e-38, %v599
        %v601 = vsel %vm598, %v600, %v596
        %v602 = vmul.f32 1.0, %v601
        %v603 = vrcp.pop %v539
        %v604 = vmul.f32 %v539, %v603
        %v605 = vsub.f32 1.0, %v604
        %v606 = vmul.f32 %v603, %v605
        %v607 = vadd.f32 %v603, %v606
        %vm608 = vweird.f32 %v539
        %vm609 = vweird.f32 %v603
        %vm610 = vmor %vm608, %vm609
        %v611 = vsel %vm610, %v603, %v607
        %v612 = vand.u32 2147483647, %v539
        %vm613 = vcmp.eq.f32.partialorder %v612, 8.507059e+37
        %v614 = vand.u32 %v539, 2147483648
        %v615 = vor.u32 1.1754944e-38, %v614
        %v616 = vsel %vm613, %v615, %v611
        %v617 = vmul.f32 1.0, %v616
        %v618 = vrcp.pop %v540
        %v619 = vmul.f32 %v540, %v618
        %v620 = vsub.f32 1.0, %v619
        %v621 = vmul.f32 %v618, %v620
        %v622 = vadd.f32 %v618, %v621
        %vm623 = vweird.f32 %v540
        %vm624 = vweird.f32 %v618
        %vm625 = vmor %vm623, %vm624
        %v626 = vsel %vm625, %v618, %v622
        %v627 = vand.u32 2147483647, %v540
        %vm628 = vcmp.eq.f32.partialorder %v627, 8.507059e+37
        %v629 = vand.u32 %v540, 2147483648
        %v630 = vor.u32 1.1754944e-38, %v629
        %v631 = vsel %vm628, %v630, %v626
        %v632 = vmul.f32 1.0, %v631
        %v633 = vrcp.pop %v541
        %v634 = vmul.f32 %v541, %v633
        %v635 = vsub.f32 1.0, %v634
        %v636 = vmul.f32 %v633, %v635
        %v637 = vadd.f32 %v633, %v636
        %vm638 = vweird.f32 %v541
        %vm639 = vweird.f32 %v633
        %vm640 = vmor %vm638, %vm639
        %v641 = vsel %vm640, %v633, %v637
        %v642 = vand.u32 2147483647, %v541
        %vm643 = vcmp.eq.f32.partialorder %v642, 8.507059e+37
        %v644 = vand.u32 %v541, 2147483648
        %v645 = vor.u32 1.1754944e-38, %v644
        %v646 = vsel %vm643, %v645, %v641
        %v647 = vmul.f32 1.0, %v646
        %v648 = vrcp.pop %v542
        %v649 = vmul.f32 %v542, %v648
        %v650 = vsub.f32 1.0, %v649
        %v651 = vmul.f32 %v648, %v650
        %v652 = vadd.f32 %v648, %v651
        %vm653 = vweird.f32 %v542
        %vm654 = vweird.f32 %v648
        %vm655 = vmor %vm653, %vm654
        %v656 = vsel %vm655, %v648, %v652
        %v657 = vand.u32 2147483647, %v542
        %vm658 = vcmp.eq.f32.partialorder %v657, 8.507059e+37
        %v659 = vand.u32 %v542, 2147483648
        %v660 = vor.u32 1.1754944e-38, %v659
        %v661 = vsel %vm658, %v660, %v656
        %v662 = vmul.f32 1.0, %v661
        %v663 = vmul.f32 %v503, %v557
        %v664 = vmul.f32 %v504, %v572
        %v665 = vmul.f32 %v505, %v587
        %v666 = vmul.f32 %v506, %v602
        %v667 = vmul.f32 %v507, %v617
        %v668 = vmul.f32 %v508, %v632
        %v669 = vmul.f32 %v509, %v647
        %v670 = vmul.f32 %v510, %v662
        %s671 = scalar_lea.vmem [#allocation2], 16
        %672 = vst [vmem:[%s671 + $0x1] sm:$0xff] %v663
        %673 = vst [vmem:[%s671 + $0x11] sm:$0xff] %v664
        %674 = vst [vmem:[%s671 + $0x21] sm:$0xff] %v665
        %675 = vst [vmem:[%s671 + $0x31] sm:$0xff] %v666
        %676 = vst [vmem:[%s671 + $0x41] sm:$0xff] %v667
        %677 = vst [vmem:[%s671 + $0x51] sm:$0xff] %v668
        %678 = vst [vmem:[%s671 + $0x61] sm:$0xff] %v669
        %679 = vst [vmem:[%s671 + $0x71] sm:$0xff] %v670
        %680 = vst [vmem:[%s337] sm:$0x1] 0.0
      $region52: #{_lambda_.9} parent=47 // pred_fallthru
        _
      %s681 = smul.u32 %s25, 8
      %s682 = smul.u32 %s681, 16
      %s683 = scalar_lea.vmem [#allocation2], %s682
      %v684 = vld [vmem:[%s683] sm:$0xff]
      %v685 = vld [vmem:[%s683 + $0x8] sm:$0x3]
      %v686 = vld [vmem:[%s683 + $0x10] sm:$0xff]
      %v687 = vld [vmem:[%s683 + $0x18] sm:$0x3]
      %v688 = vld [vmem:[%s683 + $0x20] sm:$0xff]
      %v689 = vld [vmem:[%s683 + $0x28] sm:$0x3]
      %v690 = vld [vmem:[%s683 + $0x30] sm:$0xff]
      %v691 = vld [vmem:[%s683 + $0x38] sm:$0x3]
      %v692 = vld [vmem:[%s683 + $0x40] sm:$0xff]
      %v693 = vld [vmem:[%s683 + $0x48] sm:$0x3]
      %v694 = vld [vmem:[%s683 + $0x50] sm:$0xff]
      %v695 = vld [vmem:[%s683 + $0x58] sm:$0x3]
      %v696 = vld [vmem:[%s683 + $0x60] sm:$0xff]
      %v697 = vld [vmem:[%s683 + $0x68] sm:$0x3]
      %v698 = vld [vmem:[%s683 + $0x70] sm:$0xff]
      %v699 = vld [vmem:[%s683 + $0x78] sm:$0x3]
      %v700 = vld [vmem:[%s4] sm:$0x1]
      %v701 = vperm.slane %v700, 0
      %v702 = vmul.f32 %v684, %v701
      %v703 = vmul.f32 %v686, %v701
      %v704 = vmul.f32 %v688, %v701
      %v705 = vmul.f32 %v690, %v701
      %v706 = vmul.f32 %v692, %v701
      %v707 = vmul.f32 %v694, %v701
      %v708 = vmul.f32 %v696, %v701
      %v709 = vmul.f32 %v698, %v701
      %v710 = vadd.f32 %v702, 0.0
      %v711 = vadd.f32 %v703, 0.0
      %v712 = vadd.f32 %v704, 0.0
      %v713 = vadd.f32 %v705, 0.0
      %v714 = vadd.f32 %v706, 0.0
      %v715 = vadd.f32 %v707, 0.0
      %v716 = vadd.f32 %v708, 0.0
      %v717 = vadd.f32 %v709, 0.0
      %v718 = vld [vmem:[%s4 + $0x1] sm:$0x1]
      %v719 = vperm.slane %v718, 0
      %v720 = vmul.f32 %v684, %v719
      %v721 = vmul.f32 %v685, %v719
      %v722 = vmul.f32 %v686, %v719
      %v723 = vmul.f32 %v687, %v719
      %v724 = vmul.f32 %v688, %v719
      %v725 = vmul.f32 %v689, %v719
      %v726 = vmul.f32 %v690, %v719
      %v727 = vmul.f32 %v691, %v719
      %v728 = vmul.f32 %v692, %v719
      %v729 = vmul.f32 %v693, %v719
      %v730 = vmul.f32 %v694, %v719
      %v731 = vmul.f32 %v695, %v719
      %v732 = vmul.f32 %v696, %v719
      %v733 = vmul.f32 %v697, %v719
      %v734 = vmul.f32 %v698, %v719
      %v735 = vmul.f32 %v699, %v719
      %vm752 = vcmask 1046528
      %v753 = vrot.slane %v720, 1
      %v754 = vrot.slane %v721, 1
      %v755 = vsel %vm752, %v753, %v754
      %v756 = vrot.slane %v722, 1
      %v757 = vrot.slane %v723, 1
      %v758 = vsel %vm752, %v756, %v757
      %v759 = vrot.slane %v724, 1
      %v760 = vrot.slane %v725, 1
      %v761 = vsel %vm752, %v759, %v760
      %v762 = vrot.slane %v726, 1
      %v763 = vrot.slane %v727, 1
      %v764 = vsel %vm752, %v762, %v763
      %v765 = vrot.slane %v728, 1
      %v766 = vrot.slane %v729, 1
      %v767 = vsel %vm752, %v765, %v766
      %v768 = vrot.slane %v730, 1
      %v769 = vrot.slane %v731, 1
      %v770 = vsel %vm752, %v768, %v769
      %v771 = vrot.slane %v732, 1
      %v772 = vrot.slane %v733, 1
      %v773 = vsel %vm752, %v771, %v772
      %v774 = vrot.slane %v734, 1
      %v775 = vrot.slane %v735, 1
      %v776 = vsel %vm752, %v774, %v775
      %v785 = vadd.f32 %v710, %v755
      %v786 = vadd.f32 %v711, %v758
      %v787 = vadd.f32 %v712, %v761
      %v788 = vadd.f32 %v713, %v764
      %v789 = vadd.f32 %v714, %v767
      %v790 = vadd.f32 %v715, %v770
      %v791 = vadd.f32 %v716, %v773
      %v792 = vadd.f32 %v717, %v776
      %v793 = vld [vmem:[%s4 + $0x2] sm:$0x1]
      %v794 = vperm.slane %v793, 0
      %v795 = vmul.f32 %v684, %v794
      %v796 = vmul.f32 %v685, %v794
      %v797 = vmul.f32 %v686, %v794
      %v798 = vmul.f32 %v687, %v794
      %v799 = vmul.f32 %v688, %v794
      %v800 = vmul.f32 %v689, %v794
      %v801 = vmul.f32 %v690, %v794
      %v802 = vmul.f32 %v691, %v794
      %v803 = vmul.f32 %v692, %v794
      %v804 = vmul.f32 %v693, %v794
      %v805 = vmul.f32 %v694, %v794
      %v806 = vmul.f32 %v695, %v794
      %v807 = vmul.f32 %v696, %v794
      %v808 = vmul.f32 %v697, %v794
      %v809 = vmul.f32 %v698, %v794
      %v810 = vmul.f32 %v699, %v794
      %vm827 = vcmask 1045504
      %v828 = vrot.slane %v795, 2
      %v829 = vrot.slane %v796, 2
      %v830 = vsel %vm827, %v828, %v829
      %v831 = vrot.slane %v797, 2
      %v832 = vrot.slane %v798, 2
      %v833 = vsel %vm827, %v831, %v832
      %v834 = vrot.slane %v799, 2
      %v835 = vrot.slane %v800, 2
      %v836 = vsel %vm827, %v834, %v835
      %v837 = vrot.slane %v801, 2
      %v838 = vrot.slane %v802, 2
      %v839 = vsel %vm827, %v837, %v838
      %v840 = vrot.slane %v803, 2
      %v841 = vrot.slane %v804, 2
      %v842 = vsel %vm827, %v840, %v841
      %v843 = vrot.slane %v805, 2
      %v844 = vrot.slane %v806, 2
      %v845 = vsel %vm827, %v843, %v844
      %v846 = vrot.slane %v807, 2
      %v847 = vrot.slane %v808, 2
      %v848 = vsel %vm827, %v846, %v847
      %v849 = vrot.slane %v809, 2
      %v850 = vrot.slane %v810, 2
      %v851 = vsel %vm827, %v849, %v850
      %v860 = vadd.f32 %v785, %v830
      %v861 = vadd.f32 %v786, %v833
      %v862 = vadd.f32 %v787, %v836
      %v863 = vadd.f32 %v788, %v839
      %v864 = vadd.f32 %v789, %v842
      %v865 = vadd.f32 %v790, %v845
      %v866 = vadd.f32 %v791, %v848
      %v867 = vadd.f32 %v792, %v851
      %s868 = sadd.s32 %s681, 1
      %s869 = smul.u32 %s868, 16
      %s870 = scalar_lea.vmem [#allocation2], %s869
      %v871 = vld [vmem:[%s870] sm:$0xff]
      %v872 = vld [vmem:[%s870 + $0x8] sm:$0x3]
      %v873 = vld [vmem:[%s870 + $0x10] sm:$0xff]
      %v874 = vld [vmem:[%s870 + $0x18] sm:$0x3]
      %v875 = vld [vmem:[%s870 + $0x20] sm:$0xff]
      %v876 = vld [vmem:[%s870 + $0x28] sm:$0x3]
      %v877 = vld [vmem:[%s870 + $0x30] sm:$0xff]
      %v878 = vld [vmem:[%s870 + $0x38] sm:$0x3]
      %v879 = vld [vmem:[%s870 + $0x40] sm:$0xff]
      %v880 = vld [vmem:[%s870 + $0x48] sm:$0x3]
      %v881 = vld [vmem:[%s870 + $0x50] sm:$0xff]
      %v882 = vld [vmem:[%s870 + $0x58] sm:$0x3]
      %v883 = vld [vmem:[%s870 + $0x60] sm:$0xff]
      %v884 = vld [vmem:[%s870 + $0x68] sm:$0x3]
      %v885 = vld [vmem:[%s870 + $0x70] sm:$0xff]
      %v886 = vld [vmem:[%s870 + $0x78] sm:$0x3]
      %v887 = vld [vmem:[%s4 + $0x3] sm:$0x1]
      %v888 = vperm.slane %v887, 0
      %v889 = vmul.f32 %v871, %v888
      %v890 = vmul.f32 %v873, %v888
      %v891 = vmul.f32 %v875, %v888
      %v892 = vmul.f32 %v877, %v888
      %v893 = vmul.f32 %v879, %v888
      %v894 = vmul.f32 %v881, %v888
      %v895 = vmul.f32 %v883, %v888
      %v896 = vmul.f32 %v885, %v888
      %v897 = vadd.f32 %v860, %v889
      %v898 = vadd.f32 %v861, %v890
      %v899 = vadd.f32 %v862, %v891
      %v900 = vadd.f32 %v863, %v892
      %v901 = vadd.f32 %v864, %v893
      %v902 = vadd.f32 %v865, %v894
      %v903 = vadd.f32 %v866, %v895
      %v904 = vadd.f32 %v867, %v896
      %v905 = vld [vmem:[%s4 + $0x4] sm:$0x1]
      %v906 = vperm.slane %v905, 0
      %v907 = vmul.f32 %v871, %v906
      %v908 = vmul.f32 %v872, %v906
      %v909 = vmul.f32 %v873, %v906
      %v910 = vmul.f32 %v874, %v906
      %v911 = vmul.f32 %v875, %v906
      %v912 = vmul.f32 %v876, %v906
      %v913 = vmul.f32 %v877, %v906
      %v914 = vmul.f32 %v878, %v906
      %v915 = vmul.f32 %v879, %v906
      %v916 = vmul.f32 %v880, %v906
      %v917 = vmul.f32 %v881, %v906
      %v918 = vmul.f32 %v882, %v906
      %v919 = vmul.f32 %v883, %v906
      %v920 = vmul.f32 %v884, %v906
      %v921 = vmul.f32 %v885, %v906
      %v922 = vmul.f32 %v886, %v906
      %v939 = vrot.slane %v907, 1
      %v940 = vrot.slane %v908, 1
      %v941 = vsel %vm752, %v939, %v940
      %v942 = vrot.slane %v909, 1
      %v943 = vrot.slane %v910, 1
      %v944 = vsel %vm752, %v942, %v943
      %v945 = vrot.slane %v911, 1
      %v946 = vrot.slane %v912, 1
      %v947 = vsel %vm752, %v945, %v946
      %v948 = vrot.slane %v913, 1
      %v949 = vrot.slane %v914, 1
      %v950 = vsel %vm752, %v948, %v949
      %v951 = vrot.slane %v915, 1
      %v952 = vrot.slane %v916, 1
      %v953 = vsel %vm752, %v951, %v952
      %v954 = vrot.slane %v917, 1
      %v955 = vrot.slane %v918, 1
      %v956 = vsel %vm752, %v954, %v955
      %v957 = vrot.slane %v919, 1
      %v958 = vrot.slane %v920, 1
      %v959 = vsel %vm752, %v957, %v958
      %v960 = vrot.slane %v921, 1
      %v961 = vrot.slane %v922, 1
      %v962 = vsel %vm752, %v960, %v961
      %v971 = vadd.f32 %v897, %v941
      %v972 = vadd.f32 %v898, %v944
      %v973 = vadd.f32 %v899, %v947
      %v974 = vadd.f32 %v900, %v950
      %v975 = vadd.f32 %v901, %v953
      %v976 = vadd.f32 %v902, %v956
      %v977 = vadd.f32 %v903, %v959
      %v978 = vadd.f32 %v904, %v962
      %v979 = vld [vmem:[%s4 + $0x5] sm:$0x1]
      %v980 = vperm.slane %v979, 0
      %v981 = vmul.f32 %v871, %v980
      %v982 = vmul.f32 %v872, %v980
      %v983 = vmul.f32 %v873, %v980
      %v984 = vmul.f32 %v874, %v980
      %v985 = vmul.f32 %v875, %v980
      %v986 = vmul.f32 %v876, %v980
      %v987 = vmul.f32 %v877, %v980
      %v988 = vmul.f32 %v878, %v980
      %v989 = vmul.f32 %v879, %v980
      %v990 = vmul.f32 %v880, %v980
      %v991 = vmul.f32 %v881, %v980
      %v992 = vmul.f32 %v882, %v980
      %v993 = vmul.f32 %v883, %v980
      %v994 = vmul.f32 %v884, %v980
      %v995 = vmul.f32 %v885, %v980
      %v996 = vmul.f32 %v886, %v980
      %v1013 = vrot.slane %v981, 2
      %v1014 = vrot.slane %v982, 2
      %v1015 = vsel %vm827, %v1013, %v1014
      %v1016 = vrot.slane %v983, 2
      %v1017 = vrot.slane %v984, 2
      %v1018 = vsel %vm827, %v1016, %v1017
      %v1019 = vrot.slane %v985, 2
      %v1020 = vrot.slane %v986, 2
      %v1021 = vsel %vm827, %v1019, %v1020
      %v1022 = vrot.slane %v987, 2
      %v1023 = vrot.slane %v988, 2
      %v1024 = vsel %vm827, %v1022, %v1023
      %v1025 = vrot.slane %v989, 2
      %v1026 = vrot.slane %v990, 2
      %v1027 = vsel %vm827, %v1025, %v1026
      %v1028 = vrot.slane %v991, 2
      %v1029 = vrot.slane %v992, 2
      %v1030 = vsel %vm827, %v1028, %v1029
      %v1031 = vrot.slane %v993, 2
      %v1032 = vrot.slane %v994, 2
      %v1033 = vsel %vm827, %v1031, %v1032
      %v1034 = vrot.slane %v995, 2
      %v1035 = vrot.slane %v996, 2
      %v1036 = vsel %vm827, %v1034, %v1035
      %v1045 = vadd.f32 %v971, %v1015
      %v1046 = vadd.f32 %v972, %v1018
      %v1047 = vadd.f32 %v973, %v1021
      %v1048 = vadd.f32 %v974, %v1024
      %v1049 = vadd.f32 %v975, %v1027
      %v1050 = vadd.f32 %v976, %v1030
      %v1051 = vadd.f32 %v977, %v1033
      %v1052 = vadd.f32 %v978, %v1036
      %s1053 = sadd.s32 %s681, 2
      %s1054 = smul.u32 %s1053, 16
      %s1055 = scalar_lea.vmem [#allocation2], %s1054
      %v1056 = vld [vmem:[%s1055] sm:$0xff]
      %v1057 = vld [vmem:[%s1055 + $0x8] sm:$0x3]
      %v1058 = vld [vmem:[%s1055 + $0x10] sm:$0xff]
      %v1059 = vld [vmem:[%s1055 + $0x18] sm:$0x3]
      %v1060 = vld [vmem:[%s1055 + $0x20] sm:$0xff]
      %v1061 = vld [vmem:[%s1055 + $0x28] sm:$0x3]
      %v1062 = vld [vmem:[%s1055 + $0x30] sm:$0xff]
      %v1063 = vld [vmem:[%s1055 + $0x38] sm:$0x3]
      %v1064 = vld [vmem:[%s1055 + $0x40] sm:$0xff]
      %v1065 = vld [vmem:[%s1055 + $0x48] sm:$0x3]
      %v1066 = vld [vmem:[%s1055 + $0x50] sm:$0xff]
      %v1067 = vld [vmem:[%s1055 + $0x58] sm:$0x3]
      %v1068 = vld [vmem:[%s1055 + $0x60] sm:$0xff]
      %v1069 = vld [vmem:[%s1055 + $0x68] sm:$0x3]
      %v1070 = vld [vmem:[%s1055 + $0x70] sm:$0xff]
      %v1071 = vld [vmem:[%s1055 + $0x78] sm:$0x3]
      %v1072 = vld [vmem:[%s4 + $0x6] sm:$0x1]
      %v1073 = vperm.slane %v1072, 0
      %v1074 = vmul.f32 %v1056, %v1073
      %v1075 = vmul.f32 %v1058, %v1073
      %v1076 = vmul.f32 %v1060, %v1073
      %v1077 = vmul.f32 %v1062, %v1073
      %v1078 = vmul.f32 %v1064, %v1073
      %v1079 = vmul.f32 %v1066, %v1073
      %v1080 = vmul.f32 %v1068, %v1073
      %v1081 = vmul.f32 %v1070, %v1073
      %v1082 = vadd.f32 %v1045, %v1074
      %v1083 = vadd.f32 %v1046, %v1075
      %v1084 = vadd.f32 %v1047, %v1076
      %v1085 = vadd.f32 %v1048, %v1077
      %v1086 = vadd.f32 %v1049, %v1078
      %v1087 = vadd.f32 %v1050, %v1079
      %v1088 = vadd.f32 %v1051, %v1080
      %v1089 = vadd.f32 %v1052, %v1081
      %v1090 = vld [vmem:[%s4 + $0x7] sm:$0x1]
      %v1091 = vperm.slane %v1090, 0
      %v1092 = vmul.f32 %v1056, %v1091
      %v1093 = vmul.f32 %v1057, %v1091
      %v1094 = vmul.f32 %v1058, %v1091
      %v1095 = vmul.f32 %v1059, %v1091
      %v1096 = vmul.f32 %v1060, %v1091
      %v1097 = vmul.f32 %v1061, %v1091
      %v1098 = vmul.f32 %v1062, %v1091
      %v1099 = vmul.f32 %v1063, %v1091
      %v1100 = vmul.f32 %v1064, %v1091
      %v1101 = vmul.f32 %v1065, %v1091
      %v1102 = vmul.f32 %v1066, %v1091
      %v1103 = vmul.f32 %v1067, %v1091
      %v1104 = vmul.f32 %v1068, %v1091
      %v1105 = vmul.f32 %v1069, %v1091
      %v1106 = vmul.f32 %v1070, %v1091
      %v1107 = vmul.f32 %v1071, %v1091
      %v1124 = vrot.slane %v1092, 1
      %v1125 = vrot.slane %v1093, 1
      %v1126 = vsel %vm752, %v1124, %v1125
      %v1127 = vrot.slane %v1094, 1
      %v1128 = vrot.slane %v1095, 1
      %v1129 = vsel %vm752, %v1127, %v1128
      %v1130 = vrot.slane %v1096, 1
      %v1131 = vrot.slane %v1097, 1
      %v1132 = vsel %vm752, %v1130, %v1131
      %v1133 = vrot.slane %v1098, 1
      %v1134 = vrot.slane %v1099, 1
      %v1135 = vsel %vm752, %v1133, %v1134
      %v1136 = vrot.slane %v1100, 1
      %v1137 = vrot.slane %v1101, 1
      %v1138 = vsel %vm752, %v1136, %v1137
      %v1139 = vrot.slane %v1102, 1
      %v1140 = vrot.slane %v1103, 1
      %v1141 = vsel %vm752, %v1139, %v1140
      %v1142 = vrot.slane %v1104, 1
      %v1143 = vrot.slane %v1105, 1
      %v1144 = vsel %vm752, %v1142, %v1143
      %v1145 = vrot.slane %v1106, 1
      %v1146 = vrot.slane %v1107, 1
      %v1147 = vsel %vm752, %v1145, %v1146
      %v1156 = vadd.f32 %v1082, %v1126
      %v1157 = vadd.f32 %v1083, %v1129
      %v1158 = vadd.f32 %v1084, %v1132
      %v1159 = vadd.f32 %v1085, %v1135
      %v1160 = vadd.f32 %v1086, %v1138
      %v1161 = vadd.f32 %v1087, %v1141
      %v1162 = vadd.f32 %v1088, %v1144
      %v1163 = vadd.f32 %v1089, %v1147
      %v1164 = vld [vmem:[%s4 + $0x8] sm:$0x1]
      %v1165 = vperm.slane %v1164, 0
      %v1166 = vmul.f32 %v1056, %v1165
      %v1167 = vmul.f32 %v1057, %v1165
      %v1168 = vmul.f32 %v1058, %v1165
      %v1169 = vmul.f32 %v1059, %v1165
      %v1170 = vmul.f32 %v1060, %v1165
      %v1171 = vmul.f32 %v1061, %v1165
      %v1172 = vmul.f32 %v1062, %v1165
      %v1173 = vmul.f32 %v1063, %v1165
      %v1174 = vmul.f32 %v1064, %v1165
      %v1175 = vmul.f32 %v1065, %v1165
      %v1176 = vmul.f32 %v1066, %v1165
      %v1177 = vmul.f32 %v1067, %v1165
      %v1178 = vmul.f32 %v1068, %v1165
      %v1179 = vmul.f32 %v1069, %v1165
      %v1180 = vmul.f32 %v1070, %v1165
      %v1181 = vmul.f32 %v1071, %v1165
      %v1198 = vrot.slane %v1166, 2
      %v1199 = vrot.slane %v1167, 2
      %v1200 = vsel %vm827, %v1198, %v1199
      %v1201 = vrot.slane %v1168, 2
      %v1202 = vrot.slane %v1169, 2
      %v1203 = vsel %vm827, %v1201, %v1202
      %v1204 = vrot.slane %v1170, 2
      %v1205 = vrot.slane %v1171, 2
      %v1206 = vsel %vm827, %v1204, %v1205
      %v1207 = vrot.slane %v1172, 2
      %v1208 = vrot.slane %v1173, 2
      %v1209 = vsel %vm827, %v1207, %v1208
      %v1210 = vrot.slane %v1174, 2
      %v1211 = vrot.slane %v1175, 2
      %v1212 = vsel %vm827, %v1210, %v1211
      %v1213 = vrot.slane %v1176, 2
      %v1214 = vrot.slane %v1177, 2
      %v1215 = vsel %vm827, %v1213, %v1214
      %v1216 = vrot.slane %v1178, 2
      %v1217 = vrot.slane %v1179, 2
      %v1218 = vsel %vm827, %v1216, %v1217
      %v1219 = vrot.slane %v1180, 2
      %v1220 = vrot.slane %v1181, 2
      %v1221 = vsel %vm827, %v1219, %v1220
      %v1230 = vadd.f32 %v1156, %v1200
      %v1231 = vadd.f32 %v1157, %v1203
      %v1232 = vadd.f32 %v1158, %v1206
      %v1233 = vadd.f32 %v1159, %v1209
      %v1234 = vadd.f32 %v1160, %v1212
      %v1235 = vadd.f32 %v1161, %v1215
      %v1236 = vadd.f32 %v1162, %v1218
      %v1237 = vadd.f32 %v1163, %v1221
      %v1238 = vld [vmem:[%s5] sm:$0x1]
      %v1240 = vperm.slane %v1238, 0
      %v1242 = vmul.f32 %v1230, %v1240
      %v1243 = vmul.f32 %v1231, %v1240
      %v1244 = vmul.f32 %v1232, %v1240
      %v1245 = vmul.f32 %v1233, %v1240
      %v1246 = vmul.f32 %v1234, %v1240
      %v1247 = vmul.f32 %v1235, %v1240
      %v1248 = vmul.f32 %v1236, %v1240
      %v1249 = vmul.f32 %v1237, %v1240
      %v1250 = vld [vmem:[%s6] sm:$0x1]
      %v1252 = vperm.slane %v1250, 0
      %v1254 = vadd.f32 %v1242, %v1252
      %v1255 = vadd.f32 %v1243, %v1252
      %v1256 = vadd.f32 %v1244, %v1252
      %v1257 = vadd.f32 %v1245, %v1252
      %v1258 = vadd.f32 %v1246, %v1252
      %v1259 = vadd.f32 %v1247, %v1252
      %v1260 = vadd.f32 %v1248, %v1252
      %v1261 = vadd.f32 %v1249, %v1252
      %v1262 = vxor.u32 %v1254, 2147483648
      %v1263 = vxor.u32 %v1255, 2147483648
      %v1264 = vxor.u32 %v1256, 2147483648
      %v1265 = vxor.u32 %v1257, 2147483648
      %v1266 = vxor.u32 %v1258, 2147483648
      %v1267 = vxor.u32 %v1259, 2147483648
      %v1268 = vxor.u32 %v1260, 2147483648
      %v1269 = vxor.u32 %v1261, 2147483648
      %v1270 = vmul.f32 %v1262, 1.442695
      %v1271 = vpow.pop %v1270
      %v1272 = vmul.f32 %v1263, 1.442695
      %v1273 = vpow.pop %v1272
      %v1274 = vmul.f32 %v1264, 1.442695
      %v1275 = vpow.pop %v1274
      %v1276 = vmul.f32 %v1265, 1.442695
      %v1277 = vpow.pop %v1276
      %v1278 = vmul.f32 %v1266, 1.442695
      %v1279 = vpow.pop %v1278
      %v1280 = vmul.f32 %v1267, 1.442695
      %v1281 = vpow.pop %v1280
      %v1282 = vmul.f32 %v1268, 1.442695
      %v1283 = vpow.pop %v1282
      %v1284 = vmul.f32 %v1269, 1.442695
      %v1285 = vpow.pop %v1284
      %v1286 = vadd.f32 %v1271, 1.0
      %v1287 = vadd.f32 %v1273, 1.0
      %v1288 = vadd.f32 %v1275, 1.0
      %v1289 = vadd.f32 %v1277, 1.0
      %v1290 = vadd.f32 %v1279, 1.0
      %v1291 = vadd.f32 %v1281, 1.0
      %v1292 = vadd.f32 %v1283, 1.0
      %v1293 = vadd.f32 %v1285, 1.0
      %v1294 = vrcp.pop %v1286
      %v1295 = vmul.f32 %v1286, %v1294
      %v1296 = vsub.f32 1.0, %v1295
      %v1297 = vmul.f32 %v1294, %v1296
      %v1298 = vadd.f32 %v1294, %v1297
      %vm1299 = vweird.f32 %v1286
      %vm1300 = vweird.f32 %v1294
      %vm1301 = vmor %vm1299, %vm1300
      %v1302 = vsel %vm1301, %v1294, %v1298
      %v1303 = vand.u32 2147483647, %v1286
      %vm1304 = vcmp.eq.f32.partialorder %v1303, 8.507059e+37
      %v1305 = vand.u32 %v1286, 2147483648
      %v1306 = vor.u32 1.1754944e-38, %v1305
      %v1307 = vsel %vm1304, %v1306, %v1302
      %v1308 = vmul.f32 1.0, %v1307
      %v1309 = vrcp.pop %v1287
      %v1310 = vmul.f32 %v1287, %v1309
      %v1311 = vsub.f32 1.0, %v1310
      %v1312 = vmul.f32 %v1309, %v1311
      %v1313 = vadd.f32 %v1309, %v1312
      %vm1314 = vweird.f32 %v1287
      %vm1315 = vweird.f32 %v1309
      %vm1316 = vmor %vm1314, %vm1315
      %v1317 = vsel %vm1316, %v1309, %v1313
      %v1318 = vand.u32 2147483647, %v1287
      %vm1319 = vcmp.eq.f32.partialorder %v1318, 8.507059e+37
      %v1320 = vand.u32 %v1287, 2147483648
      %v1321 = vor.u32 1.1754944e-38, %v1320
      %v1322 = vsel %vm1319, %v1321, %v1317
      %v1323 = vmul.f32 1.0, %v1322
      %v1324 = vrcp.pop %v1288
      %v1325 = vmul.f32 %v1288, %v1324
      %v1326 = vsub.f32 1.0, %v1325
      %v1327 = vmul.f32 %v1324, %v1326
      %v1328 = vadd.f32 %v1324, %v1327
      %vm1329 = vweird.f32 %v1288
      %vm1330 = vweird.f32 %v1324
      %vm1331 = vmor %vm1329, %vm1330
      %v1332 = vsel %vm1331, %v1324, %v1328
      %v1333 = vand.u32 2147483647, %v1288
      %vm1334 = vcmp.eq.f32.partialorder %v1333, 8.507059e+37
      %v1335 = vand.u32 %v1288, 2147483648
      %v1336 = vor.u32 1.1754944e-38, %v1335
      %v1337 = vsel %vm1334, %v1336, %v1332
      %v1338 = vmul.f32 1.0, %v1337
      %v1339 = vrcp.pop %v1289
      %v1340 = vmul.f32 %v1289, %v1339
      %v1341 = vsub.f32 1.0, %v1340
      %v1342 = vmul.f32 %v1339, %v1341
      %v1343 = vadd.f32 %v1339, %v1342
      %vm1344 = vweird.f32 %v1289
      %vm1345 = vweird.f32 %v1339
      %vm1346 = vmor %vm1344, %vm1345
      %v1347 = vsel %vm1346, %v1339, %v1343
      %v1348 = vand.u32 2147483647, %v1289
      %vm1349 = vcmp.eq.f32.partialorder %v1348, 8.507059e+37
      %v1350 = vand.u32 %v1289, 2147483648
      %v1351 = vor.u32 1.1754944e-38, %v1350
      %v1352 = vsel %vm1349, %v1351, %v1347
      %v1353 = vmul.f32 1.0, %v1352
      %v1354 = vrcp.pop %v1290
      %v1355 = vmul.f32 %v1290, %v1354
      %v1356 = vsub.f32 1.0, %v1355
      %v1357 = vmul.f32 %v1354, %v1356
      %v1358 = vadd.f32 %v1354, %v1357
      %vm1359 = vweird.f32 %v1290
      %vm1360 = vweird.f32 %v1354
      %vm1361 = vmor %vm1359, %vm1360
      %v1362 = vsel %vm1361, %v1354, %v1358
      %v1363 = vand.u32 2147483647, %v1290
      %vm1364 = vcmp.eq.f32.partialorder %v1363, 8.507059e+37
      %v1365 = vand.u32 %v1290, 2147483648
      %v1366 = vor.u32 1.1754944e-38, %v1365
      %v1367 = vsel %vm1364, %v1366, %v1362
      %v1368 = vmul.f32 1.0, %v1367
      %v1369 = vrcp.pop %v1291
      %v1370 = vmul.f32 %v1291, %v1369
      %v1371 = vsub.f32 1.0, %v1370
      %v1372 = vmul.f32 %v1369, %v1371
      %v1373 = vadd.f32 %v1369, %v1372
      %vm1374 = vweird.f32 %v1291
      %vm1375 = vweird.f32 %v1369
      %vm1376 = vmor %vm1374, %vm1375
      %v1377 = vsel %vm1376, %v1369, %v1373
      %v1378 = vand.u32 2147483647, %v1291
      %vm1379 = vcmp.eq.f32.partialorder %v1378, 8.507059e+37
      %v1380 = vand.u32 %v1291, 2147483648
      %v1381 = vor.u32 1.1754944e-38, %v1380
      %v1382 = vsel %vm1379, %v1381, %v1377
      %v1383 = vmul.f32 1.0, %v1382
      %v1384 = vrcp.pop %v1292
      %v1385 = vmul.f32 %v1292, %v1384
      %v1386 = vsub.f32 1.0, %v1385
      %v1387 = vmul.f32 %v1384, %v1386
      %v1388 = vadd.f32 %v1384, %v1387
      %vm1389 = vweird.f32 %v1292
      %vm1390 = vweird.f32 %v1384
      %vm1391 = vmor %vm1389, %vm1390
      %v1392 = vsel %vm1391, %v1384, %v1388
      %v1393 = vand.u32 2147483647, %v1292
      %vm1394 = vcmp.eq.f32.partialorder %v1393, 8.507059e+37
      %v1395 = vand.u32 %v1292, 2147483648
      %v1396 = vor.u32 1.1754944e-38, %v1395
      %v1397 = vsel %vm1394, %v1396, %v1392
      %v1398 = vmul.f32 1.0, %v1397
      %v1399 = vrcp.pop %v1293
      %v1400 = vmul.f32 %v1293, %v1399
      %v1401 = vsub.f32 1.0, %v1400
      %v1402 = vmul.f32 %v1399, %v1401
      %v1403 = vadd.f32 %v1399, %v1402
      %vm1404 = vweird.f32 %v1293
      %vm1405 = vweird.f32 %v1399
      %vm1406 = vmor %vm1404, %vm1405
      %v1407 = vsel %vm1406, %v1399, %v1403
      %v1408 = vand.u32 2147483647, %v1293
      %vm1409 = vcmp.eq.f32.partialorder %v1408, 8.507059e+37
      %v1410 = vand.u32 %v1293, 2147483648
      %v1411 = vor.u32 1.1754944e-38, %v1410
      %v1412 = vsel %vm1409, %v1411, %v1407
      %v1413 = vmul.f32 1.0, %v1412
      %v1414 = vmul.f32 %v1254, %v1308
      %v1415 = vmul.f32 %v1255, %v1323
      %v1416 = vmul.f32 %v1256, %v1338
      %v1417 = vmul.f32 %v1257, %v1353
      %v1418 = vmul.f32 %v1258, %v1368
      %v1419 = vmul.f32 %v1259, %v1383
      %v1420 = vmul.f32 %v1260, %v1398
      %v1421 = vmul.f32 %v1261, %v1413
      %v1422 = vpack.c.bf16 %v1414, %v1414
      %v1423 = vpack.c.bf16 %v1415, %v1415
      %v1424 = vpack.c.bf16 %v1416, %v1416
      %v1425 = vpack.c.bf16 %v1417, %v1417
      %v1426 = vpack.c.bf16 %v1418, %v1418
      %v1427 = vpack.c.bf16 %v1419, %v1419
      %v1428 = vpack.c.bf16 %v1420, %v1420
      %v1429 = vpack.c.bf16 %v1421, %v1421
      %1430 = vst [vmem:[%s333] sm:$0xf] %v1422
      %1431 = vst [vmem:[%s333 + $0x4] sm:$0xf] %v1423
      %1432 = vst [vmem:[%s333 + $0x8] sm:$0xf] %v1424
      %1433 = vst [vmem:[%s333 + $0xc] sm:$0xf] %v1425
      %1434 = vst [vmem:[%s333 + $0x10] sm:$0xf] %v1426
      %1435 = vst [vmem:[%s333 + $0x14] sm:$0xf] %v1427
      %1436 = vst [vmem:[%s333 + $0x18] sm:$0xf] %v1428
      %1437 = vst [vmem:[%s333 + $0x1c] sm:$0xf] %v1429
      %v1438 = vld [vmem:[%s337] sm:$0x1]
      %v1439 = vadd.f32 %v1414, %v1415
      %v1440 = vadd.f32 %v1439, %v1416
      %v1441 = vadd.f32 %v1440, %v1417
      %v1442 = vadd.f32 %v1441, %v1418
      %v1443 = vadd.f32 %v1442, %v1419
      %v1444 = vadd.f32 %v1443, %v1420
      %v1445 = vadd.f32 %v1444, %v1421
      %v1446 = vrot.slane %v1445, 4
      %v1447 = vadd.f32 %v1445, %v1446
      %v1448 = vrot.slane %v1447, 2
      %v1449 = vadd.f32 %v1447, %v1448
      %v1450 = vrot.slane %v1449, 1
      %v1451 = vadd.f32 %v1449, %v1450
      %v1452 = vmul.f32 %v1451, 0.015625
      %v1453 = vadd.f32 %v1438, %v1452
      %1454 = vst [vmem:[%s337] sm:$0x1] %v1453
      %s1455 = smul.u32 8, %s25
      %p1456 = scmp.lt.s32.totalorder %s24, 1
      %s1457 = scalar_select %p1456, %s24, 1
      %p1458 = scmp.lt.s32.totalorder %s1455, 7
      %s1459 = scalar_select %p1458, %s1455, 7
      %s1460 = smul.addr %s1457, 8
      %s1461 = sadd.s32 %s1459, %s1460
      %s1462 = smul.addr %s1461, 4
      %s1463 = scalar_lea.vmem %s7, %s1462
      %p1464 = scmp.lt.s32.totalorder %s24, 1
      %s1465 = scalar_select %p1464, %s24, 1
      %s1466 = scalar_lea.vmem %s8, %s1465
      // Predicated region
      $region53: #{_lambda_.9} parent=47 // pred_check
        %p1467 = pneg %p204
      $region54: #{_lambda_.9} parent=47 // pred_check_branch
        %1469 = sbr.rel (%p1467) target = $region56
      $region55: #{_lambda_.9} parent=47 // pred_region
        %s1470 = smul.u32 8, %s25
      $region56: #{_lambda_.9} parent=47 // pred_fallthru
        _
      // Predicated region
      $region57: #{_lambda_.9} parent=47 // pred_check
        %p1471 = pneg %p230
      $region58: #{_lambda_.9} parent=47 // pred_check_branch
        %1473 = sbr.rel (%p1471) target = $region60
      $region59: #{_lambda_.9} parent=47 // pred_region
        _
      $region60: #{_lambda_.9} parent=47 // pred_fallthru
        _
    $region48: #{_lambda_.9} parent=5 // pred_fallthru
      _
    %p1474 = scmp.le.s32.totalorder 2, %s15
    // Predicated region
    $region61: #{_lambda_.9} parent=5 // pred_check
      %p1475 = pneg %p1474
    $region62: #{_lambda_.9} parent=5 // pred_check_branch
      %1477 = sbr.rel (%p1475) target = $region64
    $region63: #{_lambda_.9} parent=5 // pred_region
      %s1478 = ssub.s32 %s15, 2
      // Predicated region
      $region65: #{_lambda_.9} parent=63 // pred_check
        %p1479 = pneg %p210
      $region66: #{_lambda_.9} parent=63 // pred_check_branch
        %1481 = sbr.rel (%p1479) target = $region68
      $region67: #{_lambda_.9} parent=63 // pred_region
        %s1482 = smul.u32 8, %s27
        %p1483 = scmp.lt.s32.totalorder %s26, 1
        %s1484 = scalar_select %p1483, %s26, 1
        %p1485 = scmp.lt.s32.totalorder %s1482, 7
        %s1486 = scalar_select %p1485, %s1482, 7
        %s1487 = smul.addr %s1484, 8
        %s1488 = sadd.s32 %s1486, %s1487
        %s1489 = smul.addr %s1488, 4
        %s1490 = scalar_lea.vmem %s7, %s1489
      $region68: #{_lambda_.9} parent=63 // pred_fallthru
        _
      // Predicated region
      $region69: #{_lambda_.9} parent=63 // pred_check
        %p1491 = pneg %p236
      $region70: #{_lambda_.9} parent=63 // pred_check_branch
        %1493 = sbr.rel (%p1491) target = $region72
      $region71: #{_lambda_.9} parent=63 // pred_region
        %p1494 = scmp.lt.s32.totalorder %s26, 1
        %s1495 = scalar_select %p1494, %s26, 1
        %s1496 = scalar_lea.vmem %s8, %s1495
      $region72: #{_lambda_.9} parent=63 // pred_fallthru
        _
    $region64: #{_lambda_.9} parent=5 // pred_fallthru
      _
  $region6: #{_lambda_.9} parent=0 // loop_footer
    %s19 = sadd.s32 1, %s15
  $region7: #{_lambda_.9} parent=0 // loop_footer_branch
    %14 = sbr.rel target = $region3
  $region8: #{_lambda_.9} parent=0 // loop_exit
    _

// kernel: _lambda_.10
$region0: #{_lambda_.10}
  #allocation0 [shape = 'u32[]', space=smem, size = 0x4, offset = 0x4, fixed_abs, tag = 'smem constant byte address 0x4 - core index']
  #allocation1 [shape = 'u32[72,128]{1,0:T(1,128)}', space=vmem, size = 0x9000, scoped, tag = 'internal scratch']
  #allocation2 [shape = 'f32[1,128]{1,0:T(1,128)}', space=vmem, size = 0x200, scoped, tag = 'scratch operand']
  %s0 = inlined_call_operand.vmem [shape: bf16[2,64,128], index: 0, kind: input, shape index: {}]
  %s1 = inlined_call_operand.vmem [shape: f32[2,1,128], index: 1, kind: input, shape index: {}]
  %s2 = inlined_call_operand.vmem [shape: bf16[128,128], index: 2, kind: input, shape index: {}]
  %s3 = inlined_call_operand.vmem [shape: f32[1,128], index: 3, kind: input, shape index: {}]
  %s4 = inlined_call_operand.vmem [shape: bf16[128,128], index: 4, kind: input, shape index: {}]
  %s5 = inlined_call_operand.vmem [shape: f32[1,128], index: 5, kind: input, shape index: {}]
  %s6 = inlined_call_operand.vmem [shape: bf16[128,128], index: 6, kind: input, shape index: {}]
  %s7 = inlined_call_operand.vmem [shape: f32[1,128], index: 7, kind: input, shape index: {}]
  %s8 = inlined_call_operand.vmem [shape: f32[1,128], index: 8, kind: input, shape index: {}]
  %s9 = inlined_call_operand.vmem [shape: bf16[2,64,128], index: 9, kind: input, shape index: {}]
  %s10 = inlined_call_operand.vmem [shape: bf16[2,64,128], index: 10, kind: output, shape index: {}]
  %s11 = sld [smem:[#allocation0]]
  $region77: #{_lambda_.10} parent=0
    _
  %s13 = ssub.s32 1, %s11
  %s14 = scalar_select 0, %s13, %s11
  loop: start=0, step=1, limit=4
  $region2: #{_lambda_.10} parent=0 // loop_pre_header
    _
  $region3: #{_lambda_.10} parent=0 // loop_header
    %s16 = sphi 0, %s20
    %p17 = scmp.ge.s32.totalorder %s16, 4
    %s23 = sphi 0, %s35
    %s24 = sphi 0, %s31
    %s25 = sphi 0, %s23
    %s26 = sphi 0, %s24
    %s27 = sphi 0, %s25
    %s28 = sphi 0, %s26
    %s40 = sphi 0, %s42
    %s43 = sphi 0, %s40
    %s44 = sphi 0, %s43
    %s60 = sphi 0, %s44
    %s66 = sphi 0, %s68
    %s69 = sphi 0, %s66
    %s70 = sphi 0, %s69
    %s86 = sphi 0, %s70
    %s90 = sphi 0, %s90
    %s92 = sphi 0, %s90
    %s93 = sphi 0, %s92
    %s107 = sphi 0, %s93
    %s111 = sphi 0, %s111
    %s113 = sphi 0, %s111
    %s114 = sphi 0, %s113
    %s128 = sphi 0, %s114
    %s132 = sphi 0, %s132
    %s134 = sphi 0, %s132
    %s135 = sphi 0, %s134
    %s149 = sphi 0, %s135
    %s153 = sphi 0, %s153
    %s155 = sphi 0, %s153
    %s156 = sphi 0, %s155
    %s170 = sphi 0, %s156
    %s174 = sphi 0, %s174
    %s176 = sphi 0, %s174
    %s177 = sphi 0, %s176
    %s191 = sphi 0, %s177
    %s195 = sphi 0, %s195
    %s197 = sphi 0, %s195
    %s198 = sphi 0, %s197
    %s212 = sphi 0, %s198
    %s216 = sphi 0, %s216
    %s218 = sphi 0, %s216
    %s219 = sphi 0, %s218
    %s233 = sphi 0, %s219
    %s241 = sphi 0, %s243
    %s244 = sphi 0, %s241
    %s245 = sphi 0, %s244
    %s261 = sphi 0, %s245
    %s269 = sphi 0, %s271
    %s272 = sphi 0, %s269
    %s273 = sphi 0, %s272
    %s289 = sphi 0, %s273
  $region4: #{_lambda_.10} parent=0 // loop_header_branch
    %19 = sbr.rel (%p17) target = $region8
  $region5: #{_lambda_.10} parent=0 // loop_body
    %s21 = ssub.s32 %s16, 1
    %s22 = ssub.s32 %s16, 2
    %s29 = sadd.s32 1, %s24
    %p30 = scmp.ge.s32.totalorder %s29, 1
    %s31 = scalar_select %p30, 0, %s29
    %s32 = sadd.s32 1, %s23
    %s33 = scalar_select %p30, %s32, %s23
    %p34 = scmp.ge.s32.totalorder %s33, 2
    %s35 = scalar_select %p34, 0, %s33
    %s36 = ssub.s32 %s23, %s35
    %s37 = ssub.s32 %s24, %s31
    %s38 = sor.u32 %s36, %s37
    %p39 = scmp.eq.s32.totalorder %s38, 0
    %s41 = sadd.s32 %s40, 1
    %s42 = scalar_select %p39, %s40, %s41
    %p45 = pneg %p39
    %p46 = scmp.eq.s32.totalorder %s16, 1
    %p47 = por %p45, %p46
    %p48 = scmp.ne.s32.totalorder %s40, %s43
    %p49 = scmp.eq.s32.totalorder %s16, 0
    %p50 = por %p48, %p49
    %p51 = scmp.ne.s32.totalorder %s40, %s43
    %p52 = scmp.eq.s32.totalorder %s21, 1
    %p53 = por %p51, %p52
    %p54 = scmp.ne.s32.totalorder %s43, %s44
    %p55 = scmp.eq.s32.totalorder %s21, 0
    %p56 = por %p54, %p55
    %p57 = scmp.ne.s32.totalorder %s43, %s44
    %p58 = scmp.eq.s32.totalorder %s22, 1
    %p59 = por %p57, %p58
    %p61 = scmp.ne.s32.totalorder %s44, %s60
    %p62 = scmp.eq.s32.totalorder %s22, 0
    %p63 = por %p61, %p62
    %s64 = ssub.s32 %s23, %s35
    %p65 = scmp.eq.s32.totalorder %s64, 0
    %s67 = sadd.s32 %s66, 1
    %s68 = scalar_select %p65, %s66, %s67
    %p71 = pneg %p65
    %p72 = scmp.eq.s32.totalorder %s16, 1
    %p73 = por %p71, %p72
    %p74 = scmp.ne.s32.totalorder %s66, %s69
    %p75 = scmp.eq.s32.totalorder %s16, 0
    %p76 = por %p74, %p75
    %p77 = scmp.ne.s32.totalorder %s66, %s69
    %p78 = scmp.eq.s32.totalorder %s21, 1
    %p79 = por %p77, %p78
    %p80 = scmp.ne.s32.totalorder %s69, %s70
    %p81 = scmp.eq.s32.totalorder %s21, 0
    %p82 = por %p80, %p81
    %p83 = scmp.ne.s32.totalorder %s69, %s70
    %p84 = scmp.eq.s32.totalorder %s22, 1
    %p85 = por %p83, %p84
    %p87 = scmp.ne.s32.totalorder %s70, %s86
    %p88 = scmp.eq.s32.totalorder %s22, 0
    %p89 = por %p87, %p88
    %s91 = sadd.s32 %s90, 1
    %p94 = scmp.eq.s32.totalorder %s16, 1
    %p95 = scmp.ne.s32.totalorder %s90, %s92
    %p96 = scmp.eq.s32.totalorder %s16, 0
    %p97 = por %p95, %p96
    %p98 = scmp.ne.s32.totalorder %s90, %s92
    %p99 = scmp.eq.s32.totalorder %s21, 1
    %p100 = por %p98, %p99
    %p101 = scmp.ne.s32.totalorder %s92, %s93
    %p102 = scmp.eq.s32.totalorder %s21, 0
    %p103 = por %p101, %p102
    %p104 = scmp.ne.s32.totalorder %s92, %s93
    %p105 = scmp.eq.s32.totalorder %s22, 1
    %p106 = por %p104, %p105
    %p108 = scmp.ne.s32.totalorder %s93, %s107
    %p109 = scmp.eq.s32.totalorder %s22, 0
    %p110 = por %p108, %p109
    %s112 = sadd.s32 %s111, 1
    %p115 = scmp.eq.s32.totalorder %s16, 1
    %p116 = scmp.ne.s32.totalorder %s111, %s113
    %p117 = scmp.eq.s32.totalorder %s16, 0
    %p118 = por %p116, %p117
    %p119 = scmp.ne.s32.totalorder %s111, %s113
    %p120 = scmp.eq.s32.totalorder %s21, 1
    %p121 = por %p119, %p120
    %p122 = scmp.ne.s32.totalorder %s113, %s114
    %p123 = scmp.eq.s32.totalorder %s21, 0
    %p124 = por %p122, %p123
    %p125 = scmp.ne.s32.totalorder %s113, %s114
    %p126 = scmp.eq.s32.totalorder %s22, 1
    %p127 = por %p125, %p126
    %p129 = scmp.ne.s32.totalorder %s114, %s128
    %p130 = scmp.eq.s32.totalorder %s22, 0
    %p131 = por %p129, %p130
    %s133 = sadd.s32 %s132, 1
    %p136 = scmp.eq.s32.totalorder %s16, 1
    %p137 = scmp.ne.s32.totalorder %s132, %s134
    %p138 = scmp.eq.s32.totalorder %s16, 0
    %p139 = por %p137, %p138
    %p140 = scmp.ne.s32.totalorder %s132, %s134
    %p141 = scmp.eq.s32.totalorder %s21, 1
    %p142 = por %p140, %p141
    %p143 = scmp.ne.s32.totalorder %s134, %s135
    %p144 = scmp.eq.s32.totalorder %s21, 0
    %p145 = por %p143, %p144
    %p146 = scmp.ne.s32.totalorder %s134, %s135
    %p147 = scmp.eq.s32.totalorder %s22, 1
    %p148 = por %p146, %p147
    %p150 = scmp.ne.s32.totalorder %s135, %s149
    %p151 = scmp.eq.s32.totalorder %s22, 0
    %p152 = por %p150, %p151
    %s154 = sadd.s32 %s153, 1
    %p157 = scmp.eq.s32.totalorder %s16, 1
    %p158 = scmp.ne.s32.totalorder %s153, %s155
    %p159 = scmp.eq.s32.totalorder %s16, 0
    %p160 = por %p158, %p159
    %p161 = scmp.ne.s32.totalorder %s153, %s155
    %p162 = scmp.eq.s32.totalorder %s21, 1
    %p163 = por %p161, %p162
    %p164 = scmp.ne.s32.totalorder %s155, %s156
    %p165 = scmp.eq.s32.totalorder %s21, 0
    %p166 = por %p164, %p165
    %p167 = scmp.ne.s32.totalorder %s155, %s156
    %p168 = scmp.eq.s32.totalorder %s22, 1
    %p169 = por %p167, %p168
    %p171 = scmp.ne.s32.totalorder %s156, %s170
    %p172 = scmp.eq.s32.totalorder %s22, 0
    %p173 = por %p171, %p172
    %s175 = sadd.s32 %s174, 1
    %p178 = scmp.eq.s32.totalorder %s16, 1
    %p179 = scmp.ne.s32.totalorder %s174, %s176
    %p180 = scmp.eq.s32.totalorder %s16, 0
    %p181 = por %p179, %p180
    %p182 = scmp.ne.s32.totalorder %s174, %s176
    %p183 = scmp.eq.s32.totalorder %s21, 1
    %p184 = por %p182, %p183
    %p185 = scmp.ne.s32.totalorder %s176, %s177
    %p186 = scmp.eq.s32.totalorder %s21, 0
    %p187 = por %p185, %p186
    %p188 = scmp.ne.s32.totalorder %s176, %s177
    %p189 = scmp.eq.s32.totalorder %s22, 1
    %p190 = por %p188, %p189
    %p192 = scmp.ne.s32.totalorder %s177, %s191
    %p193 = scmp.eq.s32.totalorder %s22, 0
    %p194 = por %p192, %p193
    %s196 = sadd.s32 %s195, 1
    %p199 = scmp.eq.s32.totalorder %s16, 1
    %p200 = scmp.ne.s32.totalorder %s195, %s197
    %p201 = scmp.eq.s32.totalorder %s16, 0
    %p202 = por %p200, %p201
    %p203 = scmp.ne.s32.totalorder %s195, %s197
    %p204 = scmp.eq.s32.totalorder %s21, 1
    %p205 = por %p203, %p204
    %p206 = scmp.ne.s32.totalorder %s197, %s198
    %p207 = scmp.eq.s32.totalorder %s21, 0
    %p208 = por %p206, %p207
    %p209 = scmp.ne.s32.totalorder %s197, %s198
    %p210 = scmp.eq.s32.totalorder %s22, 1
    %p211 = por %p209, %p210
    %p213 = scmp.ne.s32.totalorder %s198, %s212
    %p214 = scmp.eq.s32.totalorder %s22, 0
    %p215 = por %p213, %p214
    %s217 = sadd.s32 %s216, 1
    %p220 = scmp.eq.s32.totalorder %s16, 1
    %p221 = scmp.ne.s32.totalorder %s216, %s218
    %p222 = scmp.eq.s32.totalorder %s16, 0
    %p223 = por %p221, %p222
    %p224 = scmp.ne.s32.totalorder %s216, %s218
    %p225 = scmp.eq.s32.totalorder %s21, 1
    %p226 = por %p224, %p225
    %p227 = scmp.ne.s32.totalorder %s218, %s219
    %p228 = scmp.eq.s32.totalorder %s21, 0
    %p229 = por %p227, %p228
    %p230 = scmp.ne.s32.totalorder %s218, %s219
    %p231 = scmp.eq.s32.totalorder %s22, 1
    %p232 = por %p230, %p231
    %p234 = scmp.ne.s32.totalorder %s219, %s233
    %p235 = scmp.eq.s32.totalorder %s22, 0
    %p236 = por %p234, %p235
    %s237 = ssub.s32 %s23, %s35
    %s238 = ssub.s32 %s24, %s31
    %s239 = sor.u32 %s237, %s238
    %p240 = scmp.eq.s32.totalorder %s239, 0
    %s242 = sadd.s32 %s241, 1
    %s243 = scalar_select %p240, %s241, %s242
    %p246 = pneg %p240
    %p247 = scmp.eq.s32.totalorder %s16, 1
    %p248 = por %p246, %p247
    %p249 = scmp.ne.s32.totalorder %s241, %s244
    %p250 = scmp.eq.s32.totalorder %s16, 0
    %p251 = por %p249, %p250
    %p252 = scmp.ne.s32.totalorder %s241, %s244
    %p253 = scmp.eq.s32.totalorder %s21, 1
    %p254 = por %p252, %p253
    %p255 = scmp.ne.s32.totalorder %s244, %s245
    %p256 = scmp.eq.s32.totalorder %s21, 0
    %p257 = por %p255, %p256
    %p258 = scmp.ne.s32.totalorder %s244, %s245
    %p259 = scmp.eq.s32.totalorder %s22, 1
    %p260 = por %p258, %p259
    %p262 = scmp.ne.s32.totalorder %s245, %s261
    %p263 = scmp.eq.s32.totalorder %s22, 0
    %p264 = por %p262, %p263
    %s265 = ssub.s32 %s23, %s35
    %s266 = ssub.s32 %s24, %s31
    %s267 = sor.u32 %s265, %s266
    %p268 = scmp.eq.s32.totalorder %s267, 0
    %s270 = sadd.s32 %s269, 1
    %s271 = scalar_select %p268, %s269, %s270
    %p274 = pneg %p268
    %p275 = scmp.eq.s32.totalorder %s16, 1
    %p276 = por %p274, %p275
    %p277 = scmp.ne.s32.totalorder %s269, %s272
    %p278 = scmp.eq.s32.totalorder %s16, 0
    %p279 = por %p277, %p278
    %p280 = scmp.ne.s32.totalorder %s269, %s272
    %p281 = scmp.eq.s32.totalorder %s21, 1
    %p282 = por %p280, %p281
    %p283 = scmp.ne.s32.totalorder %s272, %s273
    %p284 = scmp.eq.s32.totalorder %s21, 0
    %p285 = por %p283, %p284
    %p286 = scmp.ne.s32.totalorder %s272, %s273
    %p287 = scmp.eq.s32.totalorder %s22, 1
    %p288 = por %p286, %p287
    %p290 = scmp.ne.s32.totalorder %s273, %s289
    %p291 = scmp.eq.s32.totalorder %s22, 0
    %p292 = por %p290, %p291
    %p293 = scmp.le.s32.totalorder 1, %s16
    %p294 = scmp.lt.s32.totalorder %s16, 3
    %p295 = pnand %p293, %p294
    %p296 = pneg %p295
    // Predicated region
    $region9: #{_lambda_.10} parent=5 // pred_check
      _
    $region10: #{_lambda_.10} parent=5 // pred_check_branch
      %298 = sbr.rel (%p295) target = $region12
    $region11: #{_lambda_.10} parent=5 // pred_region
      %s299 = ssub.s32 %s16, 1
      // Predicated region
      $region13: #{_lambda_.10} parent=11 // pred_check
        %p300 = pneg %p103
      $region14: #{_lambda_.10} parent=11 // pred_check_branch
        %302 = sbr.rel (%p300) target = $region16
      $region15: #{_lambda_.10} parent=11 // pred_region
        _
      $region16: #{_lambda_.10} parent=11 // pred_fallthru
        _
      // Predicated region
      $region17: #{_lambda_.10} parent=11 // pred_check
        %p303 = pneg %p124
      $region18: #{_lambda_.10} parent=11 // pred_check_branch
        %305 = sbr.rel (%p303) target = $region20
      $region19: #{_lambda_.10} parent=11 // pred_region
        _
      $region20: #{_lambda_.10} parent=11 // pred_fallthru
        _
      // Predicated region
      $region21: #{_lambda_.10} parent=11 // pred_check
        %p306 = pneg %p145
      $region22: #{_lambda_.10} parent=11 // pred_check_branch
        %308 = sbr.rel (%p306) target = $region24
      $region23: #{_lambda_.10} parent=11 // pred_region
        _
      $region24: #{_lambda_.10} parent=11 // pred_fallthru
        _
      // Predicated region
      $region25: #{_lambda_.10} parent=11 // pred_check
        %p309 = pneg %p166
      $region26: #{_lambda_.10} parent=11 // pred_check_branch
        %311 = sbr.rel (%p309) target = $region28
      $region27: #{_lambda_.10} parent=11 // pred_region
        _
      $region28: #{_lambda_.10} parent=11 // pred_fallthru
        _
      // Predicated region
      $region29: #{_lambda_.10} parent=11 // pred_check
        %p312 = pneg %p187
      $region30: #{_lambda_.10} parent=11 // pred_check_branch
        %314 = sbr.rel (%p312) target = $region32
      $region31: #{_lambda_.10} parent=11 // pred_region
        _
      $region32: #{_lambda_.10} parent=11 // pred_fallthru
        _
      // Predicated region
      $region33: #{_lambda_.10} parent=11 // pred_check
        %p315 = pneg %p208
      $region34: #{_lambda_.10} parent=11 // pred_check_branch
        %317 = sbr.rel (%p315) target = $region36
      $region35: #{_lambda_.10} parent=11 // pred_region
        _
      $region36: #{_lambda_.10} parent=11 // pred_fallthru
        _
      // Predicated region
      $region37: #{_lambda_.10} parent=11 // pred_check
        %p318 = pneg %p229
      $region38: #{_lambda_.10} parent=11 // pred_check_branch
        %320 = sbr.rel (%p318) target = $region40
      $region39: #{_lambda_.10} parent=11 // pred_region
        _
      $region40: #{_lambda_.10} parent=11 // pred_fallthru
        _
    $region12: #{_lambda_.10} parent=5 // pred_fallthru
      _
    %p321 = scmp.lt.s32.totalorder %s16, 2
    // Predicated region
    $region41: #{_lambda_.10} parent=5 // pred_check
      %p322 = pneg %p321
    $region42: #{_lambda_.10} parent=5 // pred_check_branch
      %324 = sbr.rel (%p322) target = $region44
    $region43: #{_lambda_.10} parent=5 // pred_region
      // Predicated region
      $region45: #{_lambda_.10} parent=43 // pred_check
        %p325 = pneg %p50
      $region46: #{_lambda_.10} parent=43 // pred_check_branch
        %327 = sbr.rel (%p325) target = $region48
      $region47: #{_lambda_.10} parent=43 // pred_region
        %s328 = smul.u32 8, %s24
        %p329 = scmp.lt.s32.totalorder %s23, 1
        %s330 = scalar_select %p329, %s23, 1
        %p331 = scmp.lt.s32.totalorder %s328, 7
        %s332 = scalar_select %p331, %s328, 7
        %s333 = smul.addr %s330, 8
        %s334 = sadd.s32 %s332, %s333
        %s335 = smul.addr %s334, 4
        %s336 = scalar_lea.vmem %s0, %s335
        %s337 = smul.u32 8, %s24
      $region48: #{_lambda_.10} parent=43 // pred_fallthru
        _
      // Predicated region
      $region49: #{_lambda_.10} parent=43 // pred_check
        %p338 = pneg %p76
      $region50: #{_lambda_.10} parent=43 // pred_check_branch
        %340 = sbr.rel (%p338) target = $region52
      $region51: #{_lambda_.10} parent=43 // pred_region
        %p341 = scmp.lt.s32.totalorder %s23, 1
        %s342 = scalar_select %p341, %s23, 1
        %s343 = scalar_lea.vmem %s1, %s342
      $region52: #{_lambda_.10} parent=43 // pred_fallthru
        _
      // Predicated region
      $region53: #{_lambda_.10} parent=43 // pred_check
        %p344 = pneg %p251
      $region54: #{_lambda_.10} parent=43 // pred_check_branch
        %346 = sbr.rel (%p344) target = $region56
      $region55: #{_lambda_.10} parent=43 // pred_region
        %s347 = smul.u32 8, %s24
        %p348 = scmp.lt.s32.totalorder %s23, 1
        %s349 = scalar_select %p348, %s23, 1
        %p350 = scmp.lt.s32.totalorder %s347, 7
        %s351 = scalar_select %p350, %s347, 7
        %s352 = smul.addr %s349, 8
        %s353 = sadd.s32 %s351, %s352
        %s354 = smul.addr %s353, 4
        %s355 = scalar_lea.vmem %s9, %s354
        %s356 = smul.u32 8, %s24
      $region56: #{_lambda_.10} parent=43 // pred_fallthru
        _
    $region44: #{_lambda_.10} parent=5 // pred_fallthru
      _
    %p357 = scmp.le.s32.totalorder 1, %s16
    %p358 = scmp.lt.s32.totalorder %s16, 3
    %p359 = pnand %p357, %p358
    %p360 = pneg %p359
    // Predicated region
    $region57: #{_lambda_.10} parent=5 // pred_check
      _
    $region58: #{_lambda_.10} parent=5 // pred_check_branch
      %362 = sbr.rel (%p359) target = $region60
    $region59: #{_lambda_.10} parent=5 // pred_region
      %s363 = ssub.s32 %s16, 1
      %s364 = smul.u32 8, %s26
      %p365 = scmp.lt.s32.totalorder %s25, 1
      %s366 = scalar_select %p365, %s25, 1
      %p367 = scmp.lt.s32.totalorder %s364, 7
      %s368 = scalar_select %p367, %s364, 7
      %s369 = smul.addr %s366, 8
      %s370 = sadd.s32 %s368, %s369
      %s371 = smul.addr %s370, 4
      %s372 = scalar_lea.vmem %s0, %s371
      %p373 = pneg %p56
      %p374 = pneg %p53
      %p375 = scmp.lt.s32.totalorder %s25, 1
      %s376 = scalar_select %p375, %s25, 1
      %s377 = scalar_lea.vmem %s1, %s376
      %p378 = pneg %p82
      %p379 = pneg %p79
      %p380 = pneg %p103
      %p381 = pneg %p100
      %p382 = pneg %p124
      %p383 = pneg %p121
      %p384 = pneg %p145
      %p385 = pneg %p142
      %p386 = pneg %p166
      %p387 = pneg %p163
      %p388 = pneg %p187
      %p389 = pneg %p184
      %p390 = pneg %p208
      %p391 = pneg %p205
      %p392 = pneg %p229
      %p393 = pneg %p226
      %s394 = smul.u32 8, %s26
      %p395 = scmp.lt.s32.totalorder %s25, 1
      %s396 = scalar_select %p395, %s25, 1
      %p397 = scmp.lt.s32.totalorder %s394, 7
      %s398 = scalar_select %p397, %s394, 7
      %s399 = smul.addr %s396, 8
      %s400 = sadd.s32 %s398, %s399
      %s401 = smul.addr %s400, 4
      %s402 = scalar_lea.vmem %s9, %s401
      %p403 = pneg %p257
      %p404 = pneg %p254
      %p405 = pneg %p285
      %p406 = pneg %p282
      %s407 = smul.u32 8, %s26
      %p408 = scmp.lt.s32.totalorder %s25, 1
      %s409 = scalar_select %p408, %s25, 1
      %p410 = scmp.lt.s32.totalorder %s407, 7
      %s411 = scalar_select %p410, %s407, 7
      %s412 = smul.addr %s409, 8
      %s413 = sadd.s32 %s411, %s412
      %s414 = smul.addr %s413, 4
      %s415 = scalar_lea.vmem %s10, %s414
      %s416 = smul.u32 8, %s26
      %p417 = scmp.lt.s32.totalorder %s25, 1
      %s418 = scalar_select %p417, %s25, 1
      %p419 = scmp.lt.s32.totalorder %s416, 7
      %s420 = scalar_select %p419, %s416, 7
      %s421 = smul.addr %s418, 8
      %s422 = sadd.s32 %s420, %s421
      %s423 = smul.addr %s422, 4
      %s424 = scalar_lea.vmem %s0, %s423
      %s425 = smul.u32 8, %s26
      %p426 = scmp.lt.s32.totalorder %s25, 1
      %s427 = scalar_select %p426, %s25, 1
      %s428 = scalar_lea.vmem %s1, %s427
      %s429 = smul.u32 8, %s26
      %p430 = scmp.lt.s32.totalorder %s25, 1
      %s431 = scalar_select %p430, %s25, 1
      %p432 = scmp.lt.s32.totalorder %s429, 7
      %s433 = scalar_select %p432, %s429, 7
      %s434 = smul.addr %s431, 8
      %s435 = sadd.s32 %s433, %s434
      %s436 = smul.addr %s435, 4
      %s437 = scalar_lea.vmem %s9, %s436
      %s438 = smul.u32 8, %s26
      %s439 = smul.u32 8, %s26
      %p440 = scmp.lt.s32.totalorder %s25, 1
      %s441 = scalar_select %p440, %s25, 1
      %p442 = scmp.lt.s32.totalorder %s439, 7
      %s443 = scalar_select %p442, %s439, 7
      %s444 = smul.addr %s441, 8
      %s445 = sadd.s32 %s443, %s444
      %s446 = smul.addr %s445, 4
      %s447 = scalar_lea.vmem %s10, %s446
      %s448 = smul.u32 8, %s26
      %p449 = scmp.eq.s32.totalorder %s26, 0
      // Predicated region
      $region61: #{_lambda_.10} parent=59 // pred_check
        %p450 = pneg %p449
      $region62: #{_lambda_.10} parent=59 // pred_check_branch
        %452 = sbr.rel (%p450) target = $region64
      $region63: #{_lambda_.10} parent=59 // pred_region
        %v453 = vld [vmem:[%s428] sm:$0x1]
        %v454 = vpack.c.bf16 %v453, %v453
        %v455 = vld [vmem:[%s2] sm:$0xf]
        %v456 = vld [vmem:[%s2 + $0x4] sm:$0xf]
        %v457 = vld [vmem:[%s2 + $0x8] sm:$0xf]
        %v458 = vld [vmem:[%s2 + $0xc] sm:$0xf]
        %v459 = vld [vmem:[%s2 + $0x10] sm:$0xf]
        %v460 = vld [vmem:[%s2 + $0x14] sm:$0xf]
        %v461 = vld [vmem:[%s2 + $0x18] sm:$0xf]
        %v462 = vld [vmem:[%s2 + $0x1c] sm:$0xf]
        %v463 = vld [vmem:[%s2 + $0x20] sm:$0xf]
        %v464 = vld [vmem:[%s2 + $0x24] sm:$0xf]
        %v465 = vld [vmem:[%s2 + $0x28] sm:$0xf]
        %v466 = vld [vmem:[%s2 + $0x2c] sm:$0xf]
        %v467 = vld [vmem:[%s2 + $0x30] sm:$0xf]
        %v468 = vld [vmem:[%s2 + $0x34] sm:$0xf]
        %v469 = vld [vmem:[%s2 + $0x38] sm:$0xf]
        %v470 = vld [vmem:[%s2 + $0x3c] sm:$0xf]
        %v471 = vld [vmem:[%s3] sm:$0x1]
        %v488 = vunpack.c.l.b16 %v455
        %v489 = vunpack.c.l.b16 %v456
        %v490 = vunpack.c.l.b16 %v457
        %v491 = vunpack.c.l.b16 %v458
        %v492 = vunpack.c.l.b16 %v459
        %v493 = vunpack.c.l.b16 %v460
        %v494 = vunpack.c.l.b16 %v461
        %v495 = vunpack.c.l.b16 %v462
        %v496 = vunpack.c.l.b16 %v463
        %v497 = vunpack.c.l.b16 %v464
        %v498 = vunpack.c.l.b16 %v465
        %v499 = vunpack.c.l.b16 %v466
        %v500 = vunpack.c.l.b16 %v467
        %v501 = vunpack.c.l.b16 %v468
        %v502 = vunpack.c.l.b16 %v469
        %v503 = vunpack.c.l.b16 %v470
        %v504 = vpack.c.b16 %v489, %v488
        %v505 = vpack.c.b16 %v491, %v490
        %v506 = vpack.c.b16 %v493, %v492
        %v507 = vpack.c.b16 %v495, %v494
        %v508 = vpack.c.b16 %v497, %v496
        %v509 = vpack.c.b16 %v499, %v498
        %v510 = vpack.c.b16 %v501, %v500
        %v511 = vpack.c.b16 %v503, %v502
        %520 = vmatpush.bf16.msra.mxu0 %v511
        %521 = vmatpush.bf16.msra.mxu0 %v510
        %522 = vmatpush.bf16.msra.mxu0 %v509
        %523 = vmatpush.bf16.msra.mxu0 %v508
        %524 = vmatpush.bf16.msra.mxu0 %v507
        %525 = vmatpush.bf16.msra.mxu0 %v506
        %526 = vmatpush.bf16.msra.mxu0 %v505
        %527 = vmatpush.bf16.msra.mxu0 %v504
        %528 = vmatmul.bf16.gmra.mxu0 %v454
        %v529 = vpop.f32.mrf.mxu0
        %v530 = vadd.f32 %v471, %v529
        %v531 = vpop.f32.mrf.mxu0
        %532 = vdwg.mxu0
        %v533 = vxor.u32 %v530, 2147483648
        %v534 = vmul.f32 %v533, 1.442695
        %v535 = vpow.pop %v534
        %v536 = vadd.f32 %v535, 1.0
        %v537 = vrcp.pop %v536
        %v538 = vmul.f32 %v536, %v537
        %v539 = vsub.f32 1.0, %v538
        %v540 = vmul.f32 %v537, %v539
        %v541 = vadd.f32 %v537, %v540
        %vm542 = vweird.f32 %v536
        %vm543 = vweird.f32 %v537
        %vm544 = vmor %vm542, %vm543
        %v545 = vsel %vm544, %v537, %v541
        %v546 = vand.u32 2147483647, %v536
        %vm547 = vcmp.eq.f32.partialorder %v546, 8.507059e+37
        %v548 = vand.u32 %v536, 2147483648
        %v549 = vor.u32 1.1754944e-38, %v548
        %v550 = vsel %vm547, %v549, %v545
        %v551 = vmul.f32 1.0, %v550
        %v552 = vmul.f32 %v530, %v551
        %v553 = vpack.c.bf16 %v552, %v552
        %v554 = vld [vmem:[%s4] sm:$0xf]
        %v555 = vld [vmem:[%s4 + $0x4] sm:$0xf]
        %v556 = vld [vmem:[%s4 + $0x8] sm:$0xf]
        %v557 = vld [vmem:[%s4 + $0xc] sm:$0xf]
        %v558 = vld [vmem:[%s4 + $0x10] sm:$0xf]
        %v559 = vld [vmem:[%s4 + $0x14] sm:$0xf]
        %v560 = vld [vmem:[%s4 + $0x18] sm:$0xf]
        %v561 = vld [vmem:[%s4 + $0x1c] sm:$0xf]
        %v562 = vld [vmem:[%s4 + $0x20] sm:$0xf]
        %v563 = vld [vmem:[%s4 + $0x24] sm:$0xf]
        %v564 = vld [vmem:[%s4 + $0x28] sm:$0xf]
        %v565 = vld [vmem:[%s4 + $0x2c] sm:$0xf]
        %v566 = vld [vmem:[%s4 + $0x30] sm:$0xf]
        %v567 = vld [vmem:[%s4 + $0x34] sm:$0xf]
        %v568 = vld [vmem:[%s4 + $0x38] sm:$0xf]
        %v569 = vld [vmem:[%s4 + $0x3c] sm:$0xf]
        %v570 = vld [vmem:[%s5] sm:$0x1]
        %v587 = vunpack.c.l.b16 %v554
        %v588 = vunpack.c.l.b16 %v555
        %v589 = vunpack.c.l.b16 %v556
        %v590 = vunpack.c.l.b16 %v557
        %v591 = vunpack.c.l.b16 %v558
        %v592 = vunpack.c.l.b16 %v559
        %v593 = vunpack.c.l.b16 %v560
        %v594 = vunpack.c.l.b16 %v561
        %v595 = vunpack.c.l.b16 %v562
        %v596 = vunpack.c.l.b16 %v563
        %v597 = vunpack.c.l.b16 %v564
        %v598 = vunpack.c.l.b16 %v565
        %v599 = vunpack.c.l.b16 %v566
        %v600 = vunpack.c.l.b16 %v567
        %v601 = vunpack.c.l.b16 %v568
        %v602 = vunpack.c.l.b16 %v569
        %v603 = vpack.c.b16 %v588, %v587
        %v604 = vpack.c.b16 %v590, %v589
        %v605 = vpack.c.b16 %v592, %v591
        %v606 = vpack.c.b16 %v594, %v593
        %v607 = vpack.c.b16 %v596, %v595
        %v608 = vpack.c.b16 %v598, %v597
        %v609 = vpack.c.b16 %v600, %v599
        %v610 = vpack.c.b16 %v602, %v601
        %619 = vmatpush.bf16.msra.mxu0 %v610
        %620 = vmatpush.bf16.msra.mxu0 %v609
        %621 = vmatpush.bf16.msra.mxu0 %v608
        %622 = vmatpush.bf16.msra.mxu0 %v607
        %623 = vmatpush.bf16.msra.mxu0 %v606
        %624 = vmatpush.bf16.msra.mxu0 %v605
        %625 = vmatpush.bf16.msra.mxu0 %v604
        %626 = vmatpush.bf16.msra.mxu0 %v603
        %627 = vmatmul.bf16.gmra.mxu0 %v553
        %v628 = vpop.f32.mrf.mxu0
        %v629 = vadd.f32 %v570, %v628
        %v630 = vpop.f32.mrf.mxu0
        %631 = vdwg.mxu0
        %v632 = vxor.u32 %v629, 2147483648
        %v633 = vmul.f32 %v632, 1.442695
        %v634 = vpow.pop %v633
        %v635 = vadd.f32 %v634, 1.0
        %v636 = vrcp.pop %v635
        %v637 = vmul.f32 %v635, %v636
        %v638 = vsub.f32 1.0, %v637
        %v639 = vmul.f32 %v636, %v638
        %v640 = vadd.f32 %v636, %v639
        %vm641 = vweird.f32 %v635
        %vm642 = vweird.f32 %v636
        %vm643 = vmor %vm641, %vm642
        %v644 = vsel %vm643, %v636, %v640
        %v645 = vand.u32 2147483647, %v635
        %vm646 = vcmp.eq.f32.partialorder %v645, 8.507059e+37
        %v647 = vand.u32 %v635, 2147483648
        %v648 = vor.u32 1.1754944e-38, %v647
        %v649 = vsel %vm646, %v648, %v644
        %v650 = vmul.f32 1.0, %v649
        %651 = vst [vmem:[#allocation2] sm:$0x1] %v650
      $region64: #{_lambda_.10} parent=59 // pred_fallthru
        _
      %v652 = vld [vmem:[%s424] sm:$0xf]
      %v653 = vld [vmem:[%s424 + $0x4] sm:$0xf]
      %v654 = vld [vmem:[%s424 + $0x8] sm:$0xf]
      %v655 = vld [vmem:[%s424 + $0xc] sm:$0xf]
      %v656 = vld [vmem:[%s424 + $0x10] sm:$0xf]
      %v657 = vld [vmem:[%s424 + $0x14] sm:$0xf]
      %v658 = vld [vmem:[%s424 + $0x18] sm:$0xf]
      %v659 = vld [vmem:[%s424 + $0x1c] sm:$0xf]
      %v660 = vunpack.c.l.bf16 %v652
      %v661 = vunpack.c.l.bf16 %v653
      %v662 = vunpack.c.l.bf16 %v654
      %v663 = vunpack.c.l.bf16 %v655
      %v664 = vunpack.c.l.bf16 %v656
      %v665 = vunpack.c.l.bf16 %v657
      %v666 = vunpack.c.l.bf16 %v658
      %v667 = vunpack.c.l.bf16 %v659
      %v668 = vld [vmem:[#allocation2] sm:$0x1]
      %v670 = vperm.slane %v668, 0
      %v672 = vmul.f32 %v660, %v670
      %v673 = vmul.f32 %v661, %v670
      %v674 = vmul.f32 %v662, %v670
      %v675 = vmul.f32 %v663, %v670
      %v676 = vmul.f32 %v664, %v670
      %v677 = vmul.f32 %v665, %v670
      %v678 = vmul.f32 %v666, %v670
      %v679 = vmul.f32 %v667, %v670
      %v680 = vpack.c.bf16 %v673, %v672
      %v681 = vpack.c.bf16 %v675, %v674
      %v682 = vpack.c.bf16 %v677, %v676
      %v683 = vpack.c.bf16 %v679, %v678
      %v684 = vld [vmem:[%s6] sm:$0xf]
      %v685 = vld [vmem:[%s6 + $0x4] sm:$0xf]
      %v686 = vld [vmem:[%s6 + $0x8] sm:$0xf]
      %v687 = vld [vmem:[%s6 + $0xc] sm:$0xf]
      %v688 = vld [vmem:[%s6 + $0x10] sm:$0xf]
      %v689 = vld [vmem:[%s6 + $0x14] sm:$0xf]
      %v690 = vld [vmem:[%s6 + $0x18] sm:$0xf]
      %v691 = vld [vmem:[%s6 + $0x1c] sm:$0xf]
      %v692 = vld [vmem:[%s6 + $0x20] sm:$0xf]
      %v693 = vld [vmem:[%s6 + $0x24] sm:$0xf]
      %v694 = vld [vmem:[%s6 + $0x28] sm:$0xf]
      %v695 = vld [vmem:[%s6 + $0x2c] sm:$0xf]
      %v696 = vld [vmem:[%s6 + $0x30] sm:$0xf]
      %v697 = vld [vmem:[%s6 + $0x34] sm:$0xf]
      %v698 = vld [vmem:[%s6 + $0x38] sm:$0xf]
      %v699 = vld [vmem:[%s6 + $0x3c] sm:$0xf]
      %v716 = vunpack.c.l.b16 %v684
      %v717 = vunpack.c.l.b16 %v685
      %v718 = vunpack.c.l.b16 %v686
      %v719 = vunpack.c.l.b16 %v687
      %v720 = vunpack.c.l.b16 %v688
      %v721 = vunpack.c.l.b16 %v689
      %v722 = vunpack.c.l.b16 %v690
      %v723 = vunpack.c.l.b16 %v691
      %v724 = vunpack.c.l.b16 %v692
      %v725 = vunpack.c.l.b16 %v693
      %v726 = vunpack.c.l.b16 %v694
      %v727 = vunpack.c.l.b16 %v695
      %v728 = vunpack.c.l.b16 %v696
      %v729 = vunpack.c.l.b16 %v697
      %v730 = vunpack.c.l.b16 %v698
      %v731 = vunpack.c.l.b16 %v699
      %v732 = vpack.c.b16 %v717, %v716
      %v733 = vpack.c.b16 %v719, %v718
      %v734 = vpack.c.b16 %v721, %v720
      %v735 = vpack.c.b16 %v723, %v722
      %v736 = vpack.c.b16 %v725, %v724
      %v737 = vpack.c.b16 %v727, %v726
      %v738 = vpack.c.b16 %v729, %v728
      %v739 = vpack.c.b16 %v731, %v730
      %748 = vmatpush.bf16.msra.mxu0 %v739
      %749 = vmatpush.bf16.msra.mxu0 %v738
      %750 = vmatpush.bf16.msra.mxu0 %v737
      %751 = vmatpush.bf16.msra.mxu0 %v736
      %752 = vmatpush.bf16.msra.mxu0 %v735
      %753 = vmatpush.bf16.msra.mxu0 %v734
      %754 = vmatpush.bf16.msra.mxu0 %v733
      %755 = vmatpush.bf16.msra.mxu0 %v732
      %756 = vmatmul.bf16.gmra.mxu0 %v680
      %v757 = vpop.f32.mrf.mxu0
      %v758 = vadd.f32 0.0, %v757
      %v759 = vpop.f32.mrf.mxu0
      %v760 = vadd.f32 0.0, %v759
      %761 = vmatmul.bf16.gmra.mxu0 %v681
      %v762 = vpop.f32.mrf.mxu0
      %v763 = vadd.f32 0.0, %v762
      %v764 = vpop.f32.mrf.mxu0
      %v765 = vadd.f32 0.0, %v764
      %766 = vmatmul.bf16.gmra.mxu0 %v682
      %v767 = vpop.f32.mrf.mxu0
      %v768 = vadd.f32 0.0, %v767
      %v769 = vpop.f32.mrf.mxu0
      %v770 = vadd.f32 0.0, %v769
      %771 = vmatmul.bf16.gmra.mxu0 %v683
      %v772 = vpop.f32.mrf.mxu0
      %v773 = vadd.f32 0.0, %v772
      %v774 = vpop.f32.mrf.mxu0
      %v775 = vadd.f32 0.0, %v774
      %776 = vdwg.mxu0
      %v777 = vld [vmem:[%s7] sm:$0x1]
      %v779 = vperm.slane %v777, 0
      %v781 = vmul.f32 %v758, %v779
      %v782 = vmul.f32 %v760, %v779
      %v783 = vmul.f32 %v763, %v779
      %v784 = vmul.f32 %v765, %v779
      %v785 = vmul.f32 %v768, %v779
      %v786 = vmul.f32 %v770, %v779
      %v787 = vmul.f32 %v773, %v779
      %v788 = vmul.f32 %v775, %v779
      %v789 = vld [vmem:[%s8] sm:$0x1]
      %v791 = vperm.slane %v789, 0
      %v793 = vadd.f32 %v781, %v791
      %v794 = vadd.f32 %v782, %v791
      %v795 = vadd.f32 %v783, %v791
      %v796 = vadd.f32 %v784, %v791
      %v797 = vadd.f32 %v785, %v791
      %v798 = vadd.f32 %v786, %v791
      %v799 = vadd.f32 %v787, %v791
      %v800 = vadd.f32 %v788, %v791
      %v801 = vld [vmem:[%s437] sm:$0xf]
      %v802 = vld [vmem:[%s437 + $0x4] sm:$0xf]
      %v803 = vld [vmem:[%s437 + $0x8] sm:$0xf]
      %v804 = vld [vmem:[%s437 + $0xc] sm:$0xf]
      %v805 = vld [vmem:[%s437 + $0x10] sm:$0xf]
      %v806 = vld [vmem:[%s437 + $0x14] sm:$0xf]
      %v807 = vld [vmem:[%s437 + $0x18] sm:$0xf]
      %v808 = vld [vmem:[%s437 + $0x1c] sm:$0xf]
      %v809 = vunpack.c.l.bf16 %v801
      %v810 = vunpack.c.l.bf16 %v802
      %v811 = vunpack.c.l.bf16 %v803
      %v812 = vunpack.c.l.bf16 %v804
      %v813 = vunpack.c.l.bf16 %v805
      %v814 = vunpack.c.l.bf16 %v806
      %v815 = vunpack.c.l.bf16 %v807
      %v816 = vunpack.c.l.bf16 %v808
      %v817 = vadd.f32 %v793, %v809
      %v818 = vadd.f32 %v794, %v810
      %v819 = vadd.f32 %v795, %v811
      %v820 = vadd.f32 %v796, %v812
      %v821 = vadd.f32 %v797, %v813
      %v822 = vadd.f32 %v798, %v814
      %v823 = vadd.f32 %v799, %v815
      %v824 = vadd.f32 %v800, %v816
      %v825 = vpack.c.bf16 %v817, %v817
      %v826 = vpack.c.bf16 %v818, %v818
      %v827 = vpack.c.bf16 %v819, %v819
      %v828 = vpack.c.bf16 %v820, %v820
      %v829 = vpack.c.bf16 %v821, %v821
      %v830 = vpack.c.bf16 %v822, %v822
      %v831 = vpack.c.bf16 %v823, %v823
      %v832 = vpack.c.bf16 %v824, %v824
      %833 = vst [vmem:[%s447] sm:$0xf] %v825
      %834 = vst [vmem:[%s447 + $0x4] sm:$0xf] %v826
      %835 = vst [vmem:[%s447 + $0x8] sm:$0xf] %v827
      %836 = vst [vmem:[%s447 + $0xc] sm:$0xf] %v828
      %837 = vst [vmem:[%s447 + $0x10] sm:$0xf] %v829
      %838 = vst [vmem:[%s447 + $0x14] sm:$0xf] %v830
      %839 = vst [vmem:[%s447 + $0x18] sm:$0xf] %v831
      %840 = vst [vmem:[%s447 + $0x1c] sm:$0xf] %v832
      %s841 = smul.u32 8, %s26
      %p842 = scmp.lt.s32.totalorder %s25, 1
      %s843 = scalar_select %p842, %s25, 1
      %p844 = scmp.lt.s32.totalorder %s841, 7
      %s845 = scalar_select %p844, %s841, 7
      %s846 = smul.addr %s843, 8
      %s847 = sadd.s32 %s845, %s846
      %s848 = smul.addr %s847, 4
      %s849 = scalar_lea.vmem %s10, %s848
      // Predicated region
      $region65: #{_lambda_.10} parent=59 // pred_check
        %p850 = pneg %p282
      $region66: #{_lambda_.10} parent=59 // pred_check_branch
        %852 = sbr.rel (%p850) target = $region68
      $region67: #{_lambda_.10} parent=59 // pred_region
        %s853 = smul.u32 8, %s26
      $region68: #{_lambda_.10} parent=59 // pred_fallthru
        _
    $region60: #{_lambda_.10} parent=5 // pred_fallthru
      _
    %p854 = scmp.le.s32.totalorder 2, %s16
    // Predicated region
    $region69: #{_lambda_.10} parent=5 // pred_check
      %p855 = pneg %p854
    $region70: #{_lambda_.10} parent=5 // pred_check_branch
      %857 = sbr.rel (%p855) target = $region72
    $region71: #{_lambda_.10} parent=5 // pred_region
      %s858 = ssub.s32 %s16, 2
      // Predicated region
      $region73: #{_lambda_.10} parent=71 // pred_check
        %p859 = pneg %p288
      $region74: #{_lambda_.10} parent=71 // pred_check_branch
        %861 = sbr.rel (%p859) target = $region76
      $region75: #{_lambda_.10} parent=71 // pred_region
        %s862 = smul.u32 8, %s28
        %p863 = scmp.lt.s32.totalorder %s27, 1
        %s864 = scalar_select %p863, %s27, 1
        %p865 = scmp.lt.s32.totalorder %s862, 7
        %s866 = scalar_select %p865, %s862, 7
        %s867 = smul.addr %s864, 8
        %s868 = sadd.s32 %s866, %s867
        %s869 = smul.addr %s868, 4
        %s870 = scalar_lea.vmem %s10, %s869
      $region76: #{_lambda_.10} parent=71 // pred_fallthru
        _
    $region72: #{_lambda_.10} parent=5 // pred_fallthru
      _
  $region6: #{_lambda_.10} parent=0 // loop_footer
    %s20 = sadd.s32 1, %s16
  $region7: #{_lambda_.10} parent=0 // loop_footer_branch
    %15 = sbr.rel target = $region3
  $region8: #{_lambda_.10} parent=0 // loop_exit
    _

// kernel: _lambda_.11
$region0: #{_lambda_.11}
  #allocation0 [shape = 'u32[]', space=smem, size = 0x4, offset = 0x4, fixed_abs, tag = 'smem constant byte address 0x4 - core index']
  #allocation1 [shape = 'u32[72,128]{1,0:T(1,128)}', space=vmem, size = 0x9000, scoped, tag = 'internal scratch']
  %s0 = inlined_call_operand.vmem [shape: bf16[2,64,128], index: 0, kind: input, shape index: {}]
  %s1 = inlined_call_operand.vmem [shape: bf16[128,128], index: 1, kind: input, shape index: {}]
  %s2 = inlined_call_operand.vmem [shape: f32[1,128], index: 2, kind: input, shape index: {}]
  %s3 = inlined_call_operand.vmem [shape: f32[1,128], index: 3, kind: input, shape index: {}]
  %s4 = inlined_call_operand.vmem [shape: bf16[128,128], index: 4, kind: input, shape index: {}]
  %s5 = inlined_call_operand.vmem [shape: f32[1,128], index: 5, kind: input, shape index: {}]
  %s6 = inlined_call_operand.hbm [shape: f32[2,1,128], index: 6, kind: output, shape index: {}]
  %s7 = sld [smem:[#allocation0]]
  $region57: #{_lambda_.11} parent=0
    _
  %s9 = ssub.s32 1, %s7
  %s10 = scalar_select 0, %s9, %s7
  $region1: #{_lambda_.11} parent=0
    #allocation2 [shape = 'u8[1024]{0}', space=vmem, size = 0x400, scoped, tag = 'output window, operand 0']
    #allocation3 [shape = 's32[2]{0}', space=sflag, size = 0x8, scoped, tag = 'scoped memory for _lambda_.11']
    %11 = vsyncpa [#allocation3], 0
    %s12 = scalar_lea.sflag [#allocation3], 1
    %13 = vsyncpa %s12, 0
    loop: start=0, step=1, limit=4
    $region2: #{_lambda_.11} parent=1 // loop_pre_header
      _
    $region3: #{_lambda_.11} parent=1 // loop_header
      %s15 = sphi 0, %s19
      %p16 = scmp.ge.s32.totalorder %s15, 4
      %s25 = sphi 0, %s27
      %s28 = sphi 0, %s25
      %s29 = sphi 0, %s28
      %s45 = sphi 0, %s29
      %s49 = sphi 0, %s49
      %s51 = sphi 0, %s49
      %s52 = sphi 0, %s51
      %s66 = sphi 0, %s52
      %s70 = sphi 0, %s70
      %s72 = sphi 0, %s70
      %s73 = sphi 0, %s72
      %s87 = sphi 0, %s73
      %s91 = sphi 0, %s91
      %s93 = sphi 0, %s91
      %s94 = sphi 0, %s93
      %s108 = sphi 0, %s94
      %s112 = sphi 0, %s112
      %s114 = sphi 0, %s112
      %s115 = sphi 0, %s114
      %s129 = sphi 0, %s115
      %s133 = sphi 0, %s133
      %s135 = sphi 0, %s133
      %s136 = sphi 0, %s135
      %s150 = sphi 0, %s136
      %s156 = sphi 0, %s158
      %s159 = sphi 0, %s156
      %s160 = sphi 0, %s159
      %s176 = sphi 0, %s160
    $region4: #{_lambda_.11} parent=1 // loop_header_branch
      %18 = sbr.rel (%p16) target = $region8
    $region5: #{_lambda_.11} parent=1 // loop_body
      %s20 = ssub.s32 %s15, 1
      %s21 = ssub.s32 %s15, 2
      %s22 = sadd.s32 %s15, 1
      %s23 = ssub.s32 %s15, %s22
      %p24 = scmp.eq.s32.totalorder %s23, 0
      %s26 = sadd.s32 %s25, 1
      %s27 = scalar_select %p24, %s25, %s26
      %p30 = pneg %p24
      %p31 = scmp.eq.s32.totalorder %s15, 1
      %p32 = por %p30, %p31
      %p33 = scmp.ne.s32.totalorder %s25, %s28
      %p34 = scmp.eq.s32.totalorder %s15, 0
      %p35 = por %p33, %p34
      %p36 = scmp.ne.s32.totalorder %s25, %s28
      %p37 = scmp.eq.s32.totalorder %s20, 1
      %p38 = por %p36, %p37
      %p39 = scmp.ne.s32.totalorder %s28, %s29
      %p40 = scmp.eq.s32.totalorder %s20, 0
      %p41 = por %p39, %p40
      %p42 = scmp.ne.s32.totalorder %s28, %s29
      %p43 = scmp.eq.s32.totalorder %s21, 1
      %p44 = por %p42, %p43
      %p46 = scmp.ne.s32.totalorder %s29, %s45
      %p47 = scmp.eq.s32.totalorder %s21, 0
      %p48 = por %p46, %p47
      %s50 = sadd.s32 %s49, 1
      %p53 = scmp.eq.s32.totalorder %s15, 1
      %p54 = scmp.ne.s32.totalorder %s49, %s51
      %p55 = scmp.eq.s32.totalorder %s15, 0
      %p56 = por %p54, %p55
      %p57 = scmp.ne.s32.totalorder %s49, %s51
      %p58 = scmp.eq.s32.totalorder %s20, 1
      %p59 = por %p57, %p58
      %p60 = scmp.ne.s32.totalorder %s51, %s52
      %p61 = scmp.eq.s32.totalorder %s20, 0
      %p62 = por %p60, %p61
      %p63 = scmp.ne.s32.totalorder %s51, %s52
      %p64 = scmp.eq.s32.totalorder %s21, 1
      %p65 = por %p63, %p64
      %p67 = scmp.ne.s32.totalorder %s52, %s66
      %p68 = scmp.eq.s32.totalorder %s21, 0
      %p69 = por %p67, %p68
      %s71 = sadd.s32 %s70, 1
      %p74 = scmp.eq.s32.totalorder %s15, 1
      %p75 = scmp.ne.s32.totalorder %s70, %s72
      %p76 = scmp.eq.s32.totalorder %s15, 0
      %p77 = por %p75, %p76
      %p78 = scmp.ne.s32.totalorder %s70, %s72
      %p79 = scmp.eq.s32.totalorder %s20, 1
      %p80 = por %p78, %p79
      %p81 = scmp.ne.s32.totalorder %s72, %s73
      %p82 = scmp.eq.s32.totalorder %s20, 0
      %p83 = por %p81, %p82
      %p84 = scmp.ne.s32.totalorder %s72, %s73
      %p85 = scmp.eq.s32.totalorder %s21, 1
      %p86 = por %p84, %p85
      %p88 = scmp.ne.s32.totalorder %s73, %s87
      %p89 = scmp.eq.s32.totalorder %s21, 0
      %p90 = por %p88, %p89
      %s92 = sadd.s32 %s91, 1
      %p95 = scmp.eq.s32.totalorder %s15, 1
      %p96 = scmp.ne.s32.totalorder %s91, %s93
      %p97 = scmp.eq.s32.totalorder %s15, 0
      %p98 = por %p96, %p97
      %p99 = scmp.ne.s32.totalorder %s91, %s93
      %p100 = scmp.eq.s32.totalorder %s20, 1
      %p101 = por %p99, %p100
      %p102 = scmp.ne.s32.totalorder %s93, %s94
      %p103 = scmp.eq.s32.totalorder %s20, 0
      %p104 = por %p102, %p103
      %p105 = scmp.ne.s32.totalorder %s93, %s94
      %p106 = scmp.eq.s32.totalorder %s21, 1
      %p107 = por %p105, %p106
      %p109 = scmp.ne.s32.totalorder %s94, %s108
      %p110 = scmp.eq.s32.totalorder %s21, 0
      %p111 = por %p109, %p110
      %s113 = sadd.s32 %s112, 1
      %p116 = scmp.eq.s32.totalorder %s15, 1
      %p117 = scmp.ne.s32.totalorder %s112, %s114
      %p118 = scmp.eq.s32.totalorder %s15, 0
      %p119 = por %p117, %p118
      %p120 = scmp.ne.s32.totalorder %s112, %s114
      %p121 = scmp.eq.s32.totalorder %s20, 1
      %p122 = por %p120, %p121
      %p123 = scmp.ne.s32.totalorder %s114, %s115
      %p124 = scmp.eq.s32.totalorder %s20, 0
      %p125 = por %p123, %p124
      %p126 = scmp.ne.s32.totalorder %s114, %s115
      %p127 = scmp.eq.s32.totalorder %s21, 1
      %p128 = por %p126, %p127
      %p130 = scmp.ne.s32.totalorder %s115, %s129
      %p131 = scmp.eq.s32.totalorder %s21, 0
      %p132 = por %p130, %p131
      %s134 = sadd.s32 %s133, 1
      %p137 = scmp.eq.s32.totalorder %s15, 1
      %p138 = scmp.ne.s32.totalorder %s133, %s135
      %p139 = scmp.eq.s32.totalorder %s15, 0
      %p140 = por %p138, %p139
      %p141 = scmp.ne.s32.totalorder %s133, %s135
      %p142 = scmp.eq.s32.totalorder %s20, 1
      %p143 = por %p141, %p142
      %p144 = scmp.ne.s32.totalorder %s135, %s136
      %p145 = scmp.eq.s32.totalorder %s20, 0
      %p146 = por %p144, %p145
      %p147 = scmp.ne.s32.totalorder %s135, %s136
      %p148 = scmp.eq.s32.totalorder %s21, 1
      %p149 = por %p147, %p148
      %p151 = scmp.ne.s32.totalorder %s136, %s150
      %p152 = scmp.eq.s32.totalorder %s21, 0
      %p153 = por %p151, %p152
      %s154 = ssub.s32 %s15, %s22
      %p155 = scmp.eq.s32.totalorder %s154, 0
      %s157 = sadd.s32 %s156, 1
      %s158 = scalar_select %p155, %s156, %s157
      %p161 = pneg %p155
      %p162 = scmp.eq.s32.totalorder %s15, 1
      %p163 = por %p161, %p162
      %p164 = scmp.ne.s32.totalorder %s156, %s159
      %p165 = scmp.eq.s32.totalorder %s15, 0
      %p166 = por %p164, %p165
      %p167 = scmp.ne.s32.totalorder %s156, %s159
      %p168 = scmp.eq.s32.totalorder %s20, 1
      %p169 = por %p167, %p168
      %p170 = scmp.ne.s32.totalorder %s159, %s160
      %p171 = scmp.eq.s32.totalorder %s20, 0
      %p172 = por %p170, %p171
      %p173 = scmp.ne.s32.totalorder %s159, %s160
      %p174 = scmp.eq.s32.totalorder %s21, 1
      %p175 = por %p173, %p174
      %p177 = scmp.ne.s32.totalorder %s160, %s176
      %p178 = scmp.eq.s32.totalorder %s21, 0
      %p179 = por %p177, %p178
      %p180 = scmp.le.s32.totalorder 1, %s15
      %p181 = scmp.lt.s32.totalorder %s15, 3
      %p182 = pnand %p180, %p181
      %p183 = pneg %p182
      // Predicated region
      $region9: #{_lambda_.11} parent=5 // pred_check
        _
      $region10: #{_lambda_.11} parent=5 // pred_check_branch
        %185 = sbr.rel (%p182) target = $region12
      $region11: #{_lambda_.11} parent=5 // pred_region
        %s186 = ssub.s32 %s15, 1
        // Predicated region
        $region13: #{_lambda_.11} parent=11 // pred_check
          %p187 = pneg %p62
        $region14: #{_lambda_.11} parent=11 // pred_check_branch
          %189 = sbr.rel (%p187) target = $region16
        $region15: #{_lambda_.11} parent=11 // pred_region
          _
        $region16: #{_lambda_.11} parent=11 // pred_fallthru
          _
        // Predicated region
        $region17: #{_lambda_.11} parent=11 // pred_check
          %p190 = pneg %p83
        $region18: #{_lambda_.11} parent=11 // pred_check_branch
          %192 = sbr.rel (%p190) target = $region20
        $region19: #{_lambda_.11} parent=11 // pred_region
          _
        $region20: #{_lambda_.11} parent=11 // pred_fallthru
          _
        // Predicated region
        $region21: #{_lambda_.11} parent=11 // pred_check
          %p193 = pneg %p104
        $region22: #{_lambda_.11} parent=11 // pred_check_branch
          %195 = sbr.rel (%p193) target = $region24
        $region23: #{_lambda_.11} parent=11 // pred_region
          _
        $region24: #{_lambda_.11} parent=11 // pred_fallthru
          _
        // Predicated region
        $region25: #{_lambda_.11} parent=11 // pred_check
          %p196 = pneg %p125
        $region26: #{_lambda_.11} parent=11 // pred_check_branch
          %198 = sbr.rel (%p196) target = $region28
        $region27: #{_lambda_.11} parent=11 // pred_region
          _
        $region28: #{_lambda_.11} parent=11 // pred_fallthru
          _
        // Predicated region
        $region29: #{_lambda_.11} parent=11 // pred_check
          %p199 = pneg %p146
        $region30: #{_lambda_.11} parent=11 // pred_check_branch
          %201 = sbr.rel (%p199) target = $region32
        $region31: #{_lambda_.11} parent=11 // pred_region
          _
        $region32: #{_lambda_.11} parent=11 // pred_fallthru
          _
      $region12: #{_lambda_.11} parent=5 // pred_fallthru
        _
      %p202 = scmp.lt.s32.totalorder %s15, 2
      // Predicated region
      $region33: #{_lambda_.11} parent=5 // pred_check
        %p203 = pneg %p202
      $region34: #{_lambda_.11} parent=5 // pred_check_branch
        %205 = sbr.rel (%p203) target = $region36
      $region35: #{_lambda_.11} parent=5 // pred_region
        // Predicated region
        $region37: #{_lambda_.11} parent=35 // pred_check
          %p206 = pneg %p35
        $region38: #{_lambda_.11} parent=35 // pred_check_branch
          %208 = sbr.rel (%p206) target = $region40
        $region39: #{_lambda_.11} parent=35 // pred_region
          %p209 = scmp.lt.s32.totalorder %s15, 1
          %s210 = scalar_select %p209, %s15, 1
          %s211 = smul.addr %s210, 8
          %s212 = smul.addr %s211, 4
          %s213 = scalar_lea.vmem %s0, %s212
        $region40: #{_lambda_.11} parent=35 // pred_fallthru
          _
      $region36: #{_lambda_.11} parent=5 // pred_fallthru
        _
      %p214 = scmp.le.s32.totalorder 1, %s15
      %p215 = scmp.lt.s32.totalorder %s15, 3
      %p216 = pnand %p214, %p215
      %p217 = pneg %p216
      // Predicated region
      $region41: #{_lambda_.11} parent=5 // pred_check
        _
      $region42: #{_lambda_.11} parent=5 // pred_check_branch
        %219 = sbr.rel (%p216) target = $region44
      $region43: #{_lambda_.11} parent=5 // pred_region
        %s220 = ssub.s32 %s15, 1
        %p221 = scmp.lt.s32.totalorder %s20, 1
        %s222 = scalar_select %p221, %s20, 1
        %s223 = smul.addr %s222, 8
        %s224 = smul.addr %s223, 4
        %s225 = scalar_lea.vmem %s0, %s224
        %p226 = pneg %p41
        %p227 = pneg %p38
        %p228 = pneg %p62
        %p229 = pneg %p59
        %p230 = pneg %p83
        %p231 = pneg %p80
        %p232 = pneg %p104
        %p233 = pneg %p101
        %p234 = pneg %p125
        %p235 = pneg %p122
        %p236 = pneg %p146
        %p237 = pneg %p143
        %p238 = pneg %p172
        %p239 = pneg %p169
        %s240 = sand.u32 %s159, 1
        %s241 = scalar_lea.sflag [#allocation3], %s240
        %s242 = sand.u32 %s159, 1
        %s243 = scalar_lea.vmem [#allocation2], %s242
        %p244 = scmp.lt.s32.totalorder %s20, 1
        %s245 = scalar_select %p244, %s20, 1
        %s246 = smul.addr %s245, 8
        %s247 = smul.addr %s246, 4
        %s248 = scalar_lea.vmem %s0, %s247
        %v249 = vld [vmem:[%s248] sm:$0xf]
        %v250 = vld [vmem:[%s248 + $0x4] sm:$0xf]
        %v251 = vld [vmem:[%s248 + $0x8] sm:$0xf]
        %v252 = vld [vmem:[%s248 + $0xc] sm:$0xf]
        %v253 = vld [vmem:[%s248 + $0x10] sm:$0xf]
        %v254 = vld [vmem:[%s248 + $0x14] sm:$0xf]
        %v255 = vld [vmem:[%s248 + $0x18] sm:$0xf]
        %v256 = vld [vmem:[%s248 + $0x1c] sm:$0xf]
        %v257 = vld [vmem:[%s1] sm:$0xf]
        %v258 = vld [vmem:[%s1 + $0x4] sm:$0xf]
        %v259 = vld [vmem:[%s1 + $0x8] sm:$0xf]
        %v260 = vld [vmem:[%s1 + $0xc] sm:$0xf]
        %v261 = vld [vmem:[%s1 + $0x10] sm:$0xf]
        %v262 = vld [vmem:[%s1 + $0x14] sm:$0xf]
        %v263 = vld [vmem:[%s1 + $0x18] sm:$0xf]
        %v264 = vld [vmem:[%s1 + $0x1c] sm:$0xf]
        %v265 = vld [vmem:[%s1 + $0x20] sm:$0xf]
        %v266 = vld [vmem:[%s1 + $0x24] sm:$0xf]
        %v267 = vld [vmem:[%s1 + $0x28] sm:$0xf]
        %v268 = vld [vmem:[%s1 + $0x2c] sm:$0xf]
        %v269 = vld [vmem:[%s1 + $0x30] sm:$0xf]
        %v270 = vld [vmem:[%s1 + $0x34] sm:$0xf]
        %v271 = vld [vmem:[%s1 + $0x38] sm:$0xf]
        %v272 = vld [vmem:[%s1 + $0x3c] sm:$0xf]
        %v281 = vunpack.c.l.b16 %v249
        %v282 = vunpack.c.l.b16 %v250
        %v283 = vunpack.c.l.b16 %v251
        %v284 = vunpack.c.l.b16 %v252
        %v285 = vunpack.c.l.b16 %v253
        %v286 = vunpack.c.l.b16 %v254
        %v287 = vunpack.c.l.b16 %v255
        %v288 = vunpack.c.l.b16 %v256
        %v289 = vpack.c.b16 %v282, %v281
        %v290 = vpack.c.b16 %v284, %v283
        %v291 = vpack.c.b16 %v286, %v285
        %v292 = vpack.c.b16 %v288, %v287
        %v313 = vunpack.c.l.b16 %v257
        %v314 = vunpack.c.l.b16 %v258
        %v315 = vunpack.c.l.b16 %v259
        %v316 = vunpack.c.l.b16 %v260
        %v317 = vunpack.c.l.b16 %v261
        %v318 = vunpack.c.l.b16 %v262
        %v319 = vunpack.c.l.b16 %v263
        %v320 = vunpack.c.l.b16 %v264
        %v321 = vunpack.c.l.b16 %v265
        %v322 = vunpack.c.l.b16 %v266
        %v323 = vunpack.c.l.b16 %v267
        %v324 = vunpack.c.l.b16 %v268
        %v325 = vunpack.c.l.b16 %v269
        %v326 = vunpack.c.l.b16 %v270
        %v327 = vunpack.c.l.b16 %v271
        %v328 = vunpack.c.l.b16 %v272
        %v329 = vpack.c.b16 %v314, %v313
        %v330 = vpack.c.b16 %v316, %v315
        %v331 = vpack.c.b16 %v318, %v317
        %v332 = vpack.c.b16 %v320, %v319
        %v333 = vpack.c.b16 %v322, %v321
        %v334 = vpack.c.b16 %v324, %v323
        %v335 = vpack.c.b16 %v326, %v325
        %v336 = vpack.c.b16 %v328, %v327
        %345 = vmatpush.bf16.msra.mxu0 %v336
        %346 = vmatpush.bf16.msra.mxu0 %v335
        %347 = vmatpush.bf16.msra.mxu0 %v334
        %348 = vmatpush.bf16.msra.mxu0 %v333
        %349 = vmatpush.bf16.msra.mxu0 %v332
        %350 = vmatpush.bf16.msra.mxu0 %v331
        %351 = vmatpush.bf16.msra.mxu0 %v330
        %352 = vmatpush.bf16.msra.mxu0 %v329
        %353 = vmatmul.bf16.gmra.mxu0 %v289
        %v354 = vpop.f32.mrf.mxu0
        %v355 = vadd.f32 0.0, %v354
        %v356 = vpop.f32.mrf.mxu0
        %v357 = vadd.f32 0.0, %v356
        %358 = vmatmul.bf16.gmra.mxu0 %v290
        %v359 = vpop.f32.mrf.mxu0
        %v360 = vadd.f32 0.0, %v359
        %v361 = vpop.f32.mrf.mxu0
        %v362 = vadd.f32 0.0, %v361
        %363 = vmatmul.bf16.gmra.mxu0 %v291
        %v364 = vpop.f32.mrf.mxu0
        %v365 = vadd.f32 0.0, %v364
        %v366 = vpop.f32.mrf.mxu0
        %v367 = vadd.f32 0.0, %v366
        %368 = vmatmul.bf16.gmra.mxu0 %v292
        %v369 = vpop.f32.mrf.mxu0
        %v370 = vadd.f32 0.0, %v369
        %v371 = vpop.f32.mrf.mxu0
        %v372 = vadd.f32 0.0, %v371
        %373 = vdwg.mxu0
        %v374 = vld [vmem:[%s2] sm:$0x1]
        %v376 = vperm.slane %v374, 0
        %v378 = vmul.f32 %v355, %v376
        %v379 = vmul.f32 %v357, %v376
        %v380 = vmul.f32 %v360, %v376
        %v381 = vmul.f32 %v362, %v376
        %v382 = vmul.f32 %v365, %v376
        %v383 = vmul.f32 %v367, %v376
        %v384 = vmul.f32 %v370, %v376
        %v385 = vmul.f32 %v372, %v376
        %v386 = vld [vmem:[%s3] sm:$0x1]
        %v388 = vperm.slane %v386, 0
        %v390 = vadd.f32 %v378, %v388
        %v391 = vadd.f32 %v379, %v388
        %v392 = vadd.f32 %v380, %v388
        %v393 = vadd.f32 %v381, %v388
        %v394 = vadd.f32 %v382, %v388
        %v395 = vadd.f32 %v383, %v388
        %v396 = vadd.f32 %v384, %v388
        %v397 = vadd.f32 %v385, %v388
        %v398 = vxor.u32 %v390, 2147483648
        %v399 = vxor.u32 %v391, 2147483648
        %v400 = vxor.u32 %v392, 2147483648
        %v401 = vxor.u32 %v393, 2147483648
        %v402 = vxor.u32 %v394, 2147483648
        %v403 = vxor.u32 %v395, 2147483648
        %v404 = vxor.u32 %v396, 2147483648
        %v405 = vxor.u32 %v397, 2147483648
        %v406 = vmul.f32 %v398, 1.442695
        %v407 = vpow.pop %v406
        %v408 = vmul.f32 %v399, 1.442695
        %v409 = vpow.pop %v408
        %v410 = vmul.f32 %v400, 1.442695
        %v411 = vpow.pop %v410
        %v412 = vmul.f32 %v401, 1.442695
        %v413 = vpow.pop %v412
        %v414 = vmul.f32 %v402, 1.442695
        %v415 = vpow.pop %v414
        %v416 = vmul.f32 %v403, 1.442695
        %v417 = vpow.pop %v416
        %v418 = vmul.f32 %v404, 1.442695
        %v419 = vpow.pop %v418
        %v420 = vmul.f32 %v405, 1.442695
        %v421 = vpow.pop %v420
        %v422 = vadd.f32 %v407, 1.0
        %v423 = vadd.f32 %v409, 1.0
        %v424 = vadd.f32 %v411, 1.0
        %v425 = vadd.f32 %v413, 1.0
        %v426 = vadd.f32 %v415, 1.0
        %v427 = vadd.f32 %v417, 1.0
        %v428 = vadd.f32 %v419, 1.0
        %v429 = vadd.f32 %v421, 1.0
        %v430 = vrcp.pop %v422
        %v431 = vmul.f32 %v422, %v430
        %v432 = vsub.f32 1.0, %v431
        %v433 = vmul.f32 %v430, %v432
        %v434 = vadd.f32 %v430, %v433
        %vm435 = vweird.f32 %v422
        %vm436 = vweird.f32 %v430
        %vm437 = vmor %vm435, %vm436
        %v438 = vsel %vm437, %v430, %v434
        %v439 = vand.u32 2147483647, %v422
        %vm440 = vcmp.eq.f32.partialorder %v439, 8.507059e+37
        %v441 = vand.u32 %v422, 2147483648
        %v442 = vor.u32 1.1754944e-38, %v441
        %v443 = vsel %vm440, %v442, %v438
        %v444 = vmul.f32 1.0, %v443
        %v445 = vrcp.pop %v423
        %v446 = vmul.f32 %v423, %v445
        %v447 = vsub.f32 1.0, %v446
        %v448 = vmul.f32 %v445, %v447
        %v449 = vadd.f32 %v445, %v448
        %vm450 = vweird.f32 %v423
        %vm451 = vweird.f32 %v445
        %vm452 = vmor %vm450, %vm451
        %v453 = vsel %vm452, %v445, %v449
        %v454 = vand.u32 2147483647, %v423
        %vm455 = vcmp.eq.f32.partialorder %v454, 8.507059e+37
        %v456 = vand.u32 %v423, 2147483648
        %v457 = vor.u32 1.1754944e-38, %v456
        %v458 = vsel %vm455, %v457, %v453
        %v459 = vmul.f32 1.0, %v458
        %v460 = vrcp.pop %v424
        %v461 = vmul.f32 %v424, %v460
        %v462 = vsub.f32 1.0, %v461
        %v463 = vmul.f32 %v460, %v462
        %v464 = vadd.f32 %v460, %v463
        %vm465 = vweird.f32 %v424
        %vm466 = vweird.f32 %v460
        %vm467 = vmor %vm465, %vm466
        %v468 = vsel %vm467, %v460, %v464
        %v469 = vand.u32 2147483647, %v424
        %vm470 = vcmp.eq.f32.partialorder %v469, 8.507059e+37
        %v471 = vand.u32 %v424, 2147483648
        %v472 = vor.u32 1.1754944e-38, %v471
        %v473 = vsel %vm470, %v472, %v468
        %v474 = vmul.f32 1.0, %v473
        %v475 = vrcp.pop %v425
        %v476 = vmul.f32 %v425, %v475
        %v477 = vsub.f32 1.0, %v476
        %v478 = vmul.f32 %v475, %v477
        %v479 = vadd.f32 %v475, %v478
        %vm480 = vweird.f32 %v425
        %vm481 = vweird.f32 %v475
        %vm482 = vmor %vm480, %vm481
        %v483 = vsel %vm482, %v475, %v479
        %v484 = vand.u32 2147483647, %v425
        %vm485 = vcmp.eq.f32.partialorder %v484, 8.507059e+37
        %v486 = vand.u32 %v425, 2147483648
        %v487 = vor.u32 1.1754944e-38, %v486
        %v488 = vsel %vm485, %v487, %v483
        %v489 = vmul.f32 1.0, %v488
        %v490 = vrcp.pop %v426
        %v491 = vmul.f32 %v426, %v490
        %v492 = vsub.f32 1.0, %v491
        %v493 = vmul.f32 %v490, %v492
        %v494 = vadd.f32 %v490, %v493
        %vm495 = vweird.f32 %v426
        %vm496 = vweird.f32 %v490
        %vm497 = vmor %vm495, %vm496
        %v498 = vsel %vm497, %v490, %v494
        %v499 = vand.u32 2147483647, %v426
        %vm500 = vcmp.eq.f32.partialorder %v499, 8.507059e+37
        %v501 = vand.u32 %v426, 2147483648
        %v502 = vor.u32 1.1754944e-38, %v501
        %v503 = vsel %vm500, %v502, %v498
        %v504 = vmul.f32 1.0, %v503
        %v505 = vrcp.pop %v427
        %v506 = vmul.f32 %v427, %v505
        %v507 = vsub.f32 1.0, %v506
        %v508 = vmul.f32 %v505, %v507
        %v509 = vadd.f32 %v505, %v508
        %vm510 = vweird.f32 %v427
        %vm511 = vweird.f32 %v505
        %vm512 = vmor %vm510, %vm511
        %v513 = vsel %vm512, %v505, %v509
        %v514 = vand.u32 2147483647, %v427
        %vm515 = vcmp.eq.f32.partialorder %v514, 8.507059e+37
        %v516 = vand.u32 %v427, 2147483648
        %v517 = vor.u32 1.1754944e-38, %v516
        %v518 = vsel %vm515, %v517, %v513
        %v519 = vmul.f32 1.0, %v518
        %v520 = vrcp.pop %v428
        %v521 = vmul.f32 %v428, %v520
        %v522 = vsub.f32 1.0, %v521
        %v523 = vmul.f32 %v520, %v522
        %v524 = vadd.f32 %v520, %v523
        %vm525 = vweird.f32 %v428
        %vm526 = vweird.f32 %v520
        %vm527 = vmor %vm525, %vm526
        %v528 = vsel %vm527, %v520, %v524
        %v529 = vand.u32 2147483647, %v428
        %vm530 = vcmp.eq.f32.partialorder %v529, 8.507059e+37
        %v531 = vand.u32 %v428, 2147483648
        %v532 = vor.u32 1.1754944e-38, %v531
        %v533 = vsel %vm530, %v532, %v528
        %v534 = vmul.f32 1.0, %v533
        %v535 = vrcp.pop %v429
        %v536 = vmul.f32 %v429, %v535
        %v537 = vsub.f32 1.0, %v536
        %v538 = vmul.f32 %v535, %v537
        %v539 = vadd.f32 %v535, %v538
        %vm540 = vweird.f32 %v429
        %vm541 = vweird.f32 %v535
        %vm542 = vmor %vm540, %vm541
        %v543 = vsel %vm542, %v535, %v539
        %v544 = vand.u32 2147483647, %v429
        %vm545 = vcmp.eq.f32.partialorder %v544, 8.507059e+37
        %v546 = vand.u32 %v429, 2147483648
        %v547 = vor.u32 1.1754944e-38, %v546
        %v548 = vsel %vm545, %v547, %v543
        %v549 = vmul.f32 1.0, %v548
        %v550 = vmul.f32 %v390, %v444
        %v551 = vmul.f32 %v391, %v459
        %v552 = vmul.f32 %v392, %v474
        %v553 = vmul.f32 %v393, %v489
        %v554 = vmul.f32 %v394, %v504
        %v555 = vmul.f32 %v395, %v519
        %v556 = vmul.f32 %v396, %v534
        %v557 = vmul.f32 %v397, %v549
        %v558 = vadd.f32 %v550, %v551
        %v559 = vadd.f32 %v558, %v552
        %v560 = vadd.f32 %v559, %v553
        %v561 = vadd.f32 %v560, %v554
        %v562 = vadd.f32 %v561, %v555
        %v563 = vadd.f32 %v562, %v556
        %v564 = vadd.f32 %v563, %v557
        %v565 = vrot.slane %v564, 4
        %v566 = vadd.f32 %v564, %v565
        %v567 = vrot.slane %v566, 2
        %v568 = vadd.f32 %v566, %v567
        %v569 = vrot.slane %v568, 1
        %v570 = vadd.f32 %v568, %v569
        %v571 = vmul.f32 %v570, 0.015625
        %v572 = vpack.c.bf16 %v571, %v571
        %v573 = vld [vmem:[%s4] sm:$0xf]
        %v574 = vld [vmem:[%s4 + $0x4] sm:$0xf]
        %v575 = vld [vmem:[%s4 + $0x8] sm:$0xf]
        %v576 = vld [vmem:[%s4 + $0xc] sm:$0xf]
        %v577 = vld [vmem:[%s4 + $0x10] sm:$0xf]
        %v578 = vld [vmem:[%s4 + $0x14] sm:$0xf]
        %v579 = vld [vmem:[%s4 + $0x18] sm:$0xf]
        %v580 = vld [vmem:[%s4 + $0x1c] sm:$0xf]
        %v581 = vld [vmem:[%s4 + $0x20] sm:$0xf]
        %v582 = vld [vmem:[%s4 + $0x24] sm:$0xf]
        %v583 = vld [vmem:[%s4 + $0x28] sm:$0xf]
        %v584 = vld [vmem:[%s4 + $0x2c] sm:$0xf]
        %v585 = vld [vmem:[%s4 + $0x30] sm:$0xf]
        %v586 = vld [vmem:[%s4 + $0x34] sm:$0xf]
        %v587 = vld [vmem:[%s4 + $0x38] sm:$0xf]
        %v588 = vld [vmem:[%s4 + $0x3c] sm:$0xf]
        %v589 = vld [vmem:[%s5] sm:$0x1]
        %v606 = vunpack.c.l.b16 %v573
        %v607 = vunpack.c.l.b16 %v574
        %v608 = vunpack.c.l.b16 %v575
        %v609 = vunpack.c.l.b16 %v576
        %v610 = vunpack.c.l.b16 %v577
        %v611 = vunpack.c.l.b16 %v578
        %v612 = vunpack.c.l.b16 %v579
        %v613 = vunpack.c.l.b16 %v580
        %v614 = vunpack.c.l.b16 %v581
        %v615 = vunpack.c.l.b16 %v582
        %v616 = vunpack.c.l.b16 %v583
        %v617 = vunpack.c.l.b16 %v584
        %v618 = vunpack.c.l.b16 %v585
        %v619 = vunpack.c.l.b16 %v586
        %v620 = vunpack.c.l.b16 %v587
        %v621 = vunpack.c.l.b16 %v588
        %v622 = vpack.c.b16 %v607, %v606
        %v623 = vpack.c.b16 %v609, %v608
        %v624 = vpack.c.b16 %v611, %v610
        %v625 = vpack.c.b16 %v613, %v612
        %v626 = vpack.c.b16 %v615, %v614
        %v627 = vpack.c.b16 %v617, %v616
        %v628 = vpack.c.b16 %v619, %v618
        %v629 = vpack.c.b16 %v621, %v620
        %638 = vmatpush.bf16.msra.mxu0 %v629
        %639 = vmatpush.bf16.msra.mxu0 %v628
        %640 = vmatpush.bf16.msra.mxu0 %v627
        %641 = vmatpush.bf16.msra.mxu0 %v626
        %642 = vmatpush.bf16.msra.mxu0 %v625
        %643 = vmatpush.bf16.msra.mxu0 %v624
        %644 = vmatpush.bf16.msra.mxu0 %v623
        %645 = vmatpush.bf16.msra.mxu0 %v622
        %646 = vmatmul.bf16.gmra.mxu0 %v572
        %v647 = vpop.f32.mrf.mxu0
        %v648 = vadd.f32 %v589, %v647
        %v649 = vpop.f32.mrf.mxu0
        %650 = vdwg.mxu0
        %651 = vst [vmem:[%s243] sm:$0x1] %v648
        %s652 = sand.u32 %s159, 1
        %s653 = scalar_lea.sflag [#allocation3], %s652
        %s654 = sand.u32 %s159, 1
        %s655 = scalar_lea.vmem [#allocation2], %s654
        // Predicated region
        $region45: #{_lambda_.11} parent=43 // pred_check
          %p656 = pneg %p169
        $region46: #{_lambda_.11} parent=43 // pred_check_branch
          %658 = sbr.rel (%p656) target = $region48
        $region47: #{_lambda_.11} parent=43 // pred_region
          %660 = vsyncadd %s653, 0
          %s661 = scalar_lea.hbm %s6, %s20
          %s663 = sshll.u32 %s655, 4
          %s664 = int_to_ptr.vmem [resolvable:$true] %s663
          %s665 = sshll.u32 %s661, 4
          %s666 = int_to_ptr.hbm [resolvable:$true] %s665
          %668 = dma.vmem_to_hbm [thread:$0]  %s664, 16, %s666, %s653
        $region48: #{_lambda_.11} parent=43 // pred_fallthru
          _
      $region44: #{_lambda_.11} parent=5 // pred_fallthru
        _
      %p669 = scmp.le.s32.totalorder 2, %s15
      // Predicated region
      $region49: #{_lambda_.11} parent=5 // pred_check
        %p670 = pneg %p669
      $region50: #{_lambda_.11} parent=5 // pred_check_branch
        %672 = sbr.rel (%p670) target = $region52
      $region51: #{_lambda_.11} parent=5 // pred_region
        %s673 = ssub.s32 %s15, 2
        // Predicated region
        $region53: #{_lambda_.11} parent=51 // pred_check
          %p674 = pneg %p175
        $region54: #{_lambda_.11} parent=51 // pred_check_branch
          %676 = sbr.rel (%p674) target = $region56
        $region55: #{_lambda_.11} parent=51 // pred_region
          %s677 = sand.u32 %s160, 1
          %s678 = scalar_lea.sflag [#allocation3], %s677
          %s679 = sand.u32 %s160, 1
          %s680 = scalar_lea.vmem [#allocation2], %s679
          %682 = dma.done %s678, 16
        $region56: #{_lambda_.11} parent=51 // pred_fallthru
          _
      $region52: #{_lambda_.11} parent=5 // pred_fallthru
        _
    $region6: #{_lambda_.11} parent=1 // loop_footer
      %s19 = sadd.s32 1, %s15
    $region7: #{_lambda_.11} parent=1 // loop_footer_branch
      %14 = sbr.rel target = $region3
    $region8: #{_lambda_.11} parent=1 // loop_exit
      _
    %683 = vsyncpa [#allocation3], 1
    %s684 = scalar_lea.sflag [#allocation3], 1
    %685 = vsyncpa %s684, 1

</llo_original>
